<compile_context>
chip_gen: v7x
topology: tpu7x:2x2x1
jax: 0.10.0
libtpu: 0.0.40
codegen_flags: <defaults>
</compile_context>

<pallas_src>
import functools

import numpy as np

import jax
import jax.numpy as jnp
from jax.experimental import pallas as pl
from jax.experimental.pallas import tpu as pltpu

# Deterministic stand-ins for the undefined Config() of the reference code.
RADIUS = 4.0
SIGMA_X = 4.0
SIGMA_I = 10.0


def _build_shift_table(X, Y):
    """Static shift table with +/- pair folding.

    Returns a tuple of (flat_shift, di, dj, wconst) where
      wconst = mult * (di^2 + dj^2) / (sigma_x * sigma_i),
      mult   = 2 for folded pairs (both (di,dj) and (-di,-dj) inside the
               window and past the radius), 1 for unpaired shifts (any -5
               component: the window [-5,4] has no +5 mirror).
    Only one canonical representative of each pair is emitted (~37 entries
    instead of ~55).
    """
    entries = []
    for di in range(-5, 5):          # torch.arange(i-5, i+5) -> di in [-5, 4]
        for dj in range(-5, 5):
            sd2 = float(di * di + dj * dj)
            if sd2 < RADIUS * RADIUS:
                continue             # w == 0 inside the radius
            if di == -5 or dj == -5:
                mult = 1.0           # mirror shift is outside the window
            else:
                # (-di,-dj) is also in the set (same sd2); keep one of the two.
                if (di, dj) < (-di, -dj):
                    continue
                mult = 2.0
            entries.append((di * Y + dj, di, dj,
                            mult * sd2 / (SIGMA_X * SIGMA_I)))
    return tuple(entries)


def _ncuts_kernel(coords_ref, xi_ref, seg_ref, out_ref, *,
                  shift_table, X, Y, P, k_const, n_acc=4):
    """One batch element per grid step; writes a per-batch partial loss."""
    xi = xi_ref[0]       # (C, P) float32
    seg = seg_ref[0]     # (K, P) float32

    # ---- assocV in closed form (no dense d2):
    #   sum_q ||x_p - x_q||^2 = P*||x_p||^2 + sum_q||x_q||^2 - 2 * x_p.(sum_q x_q)
    xn2 = jnp.sum(xi * xi, axis=0, keepdims=True)               # (1, P)
    sum_xn2 = jnp.sum(xn2)                                      # scalar
    sum_x = jnp.sum(xi, axis=1, keepdims=True)                  # (C, 1)
    cross = jnp.sum(xi * sum_x, axis=0, keepdims=True)          # (1, P)
    temp_sum = float(P) * xn2 + sum_xn2 - 2.0 * cross           # (1, P)
    assoc_v = jnp.sum(seg * temp_sum, axis=1, keepdims=True)    # (K, 1)

    # ---- in-kernel border-validity masks (replaces the old (S,P) wfac table).
    # Pure VPU work with slack under the XLU-bound stencil; one (1,P) mask per
    # distinct di / dj, reused across shifts.
    row = coords_ref[0:1, :]                                    # (1, P) int32
    col = coords_ref[1:2, :]                                    # (1, P) int32
    one = jnp.float32(1.0)
    zero = jnp.float32(0.0)
    unique_di = sorted({di for _, di, _, _ in shift_table})
    unique_dj = sorted({dj for _, _, dj, _ in shift_table})
    vrow = {di: jnp.where((row + di >= 0) & (row + di < X), one, zero)
            for di in unique_di}
    vcol = {dj: jnp.where((col + dj >= 0) & (col + dj < Y), one, zero)
            for dj in unique_dj}

    # ---- assocA via the folded banded stencil (unrolled, ~37 shifts).
    # inner[k, p] = sum_shifts mult_s * wfac_s[p] * ||x_p - x_{p+s}||_2 * seg[k, p+s]
    # Round-robin accumulators break the serial (K,P) add chain.
    accs = [jnp.zeros_like(seg) for _ in range(n_acc)]
    for s_idx, (s, di, dj, wconst) in enumerate(shift_table):
        amt = (-s) % P                                          # roll so that
        x_sh = pltpu.roll(xi, amt, 1)                           # x_sh[:, p] = xi[:, (p+s) % P]
        seg_sh = pltpu.roll(seg, amt, 1)
        diff = xi - x_sh                                        # exact, no Gram cancellation
        d2 = jnp.sum(diff * diff, axis=0, keepdims=True)        # (1, P)
        # (1,P) weight row: 0 where the 2D neighbour p+(di,dj) leaves the image
        # (also kills the circular-roll wraparound), wconst*fdist elsewhere.
        wrow = (vrow[di] * vcol[dj]) * (wconst * jnp.sqrt(d2))  # (1, P)
        a = s_idx % n_acc
        accs[a] = accs[a] + wrow * seg_sh                       # (K, P)
    inner = accs[0]
    for a in range(1, n_acc):
        inner = inner + accs[a]

    assoc_a = jnp.sum(seg * inner, axis=1, keepdims=True)       # (K, 1)

    ratio = assoc_a / assoc_v                                   # (K, 1)
    contrib = k_const - jnp.sum(ratio)                          # scalar
    out_ref[...] = jnp.broadcast_to(contrib, out_ref.shape)


def ncuts_loss(seg, x):
    """seg: (N, K, X, Y) float; x: (N, C, X, Y) float -> loss of shape (1,)."""
    N, K, X, Y = seg.shape
    C = x.shape[1]
    P = X * Y

    shift_table = _build_shift_table(X, Y)

    # Lane-dense layout: P on lanes (plain reshape, no transpose, no padding --
    # full-extent block dims are exempt from the (8,128) rule and Mosaic
    # tile-pads the sublane axis in VMEM for free).
    xi = x.reshape(N, C, P).astype(jnp.float32)
    segp = seg.reshape(N, K, P).astype(jnp.float32)

    # Tiny batch-invariant (2, P) pixel-coordinate table (row idx, col idx).
    rows = np.repeat(np.arange(X, dtype=np.int32), Y)
    cols = np.tile(np.arange(Y, dtype=np.int32), X)
    coords = jnp.asarray(np.stack([rows, cols], axis=0))        # (2, P) int32

    # TODO(synk): for very large images, tile the P axis with a +/-5-row halo
    # (working set is already only O((C+K)*P), with no P^2 terms anywhere).
    kernel = functools.partial(_ncuts_kernel, shift_table=shift_table,
                               X=X, Y=Y, P=P, k_const=float(K))
    out = pl.pallas_call(
        kernel,
        out_shape=jax.ShapeDtypeStruct((N, 1, 1), jnp.float32),
        grid_spec=pltpu.PrefetchScalarGridSpec(
            num_scalar_prefetch=0,
            grid=(N,),
            in_specs=[
                pl.BlockSpec((2, P), lambda bi: (0, 0)),        # batch-invariant coords
                pl.BlockSpec((1, C, P), lambda bi: (bi, 0, 0)),
                pl.BlockSpec((1, K, P), lambda bi: (bi, 0, 0)),
            ],
            out_specs=pl.BlockSpec((1, 1, 1), lambda bi: (bi, 0, 0)),
        ),
        compiler_params=pltpu.CompilerParams(
            dimension_semantics=("parallel",),      # per-batch partials -> megacore-friendly
            vmem_limit_bytes=32 * 1024 * 1024,      # actual footprint is far below this
        ),
    )(coords, xi, segp)
    return jnp.sum(out).reshape(1)


def ncuts_ref(seg, x):
    """Independent vectorized JAX reference (direct translation of the loops)."""
    N, K, X, Y = seg.shape
    ivec = jnp.arange(X)
    jvec = jnp.arange(Y)
    di = ivec[None, None, :, None] - ivec[:, None, None, None]   # m - i : (X,1,X,1)
    dj = jvec[None, None, None, :] - jvec[None, :, None, None]   # n - j : (1,Y,1,Y)
    sd2 = (di * di + dj * dj).astype(jnp.float32)
    in_win = (di >= -5) & (di <= 4) & (dj >= -5) & (dj <= 4)
    mask = in_win & (jnp.sqrt(sd2) >= RADIUS)                    # (X,Y,X,Y)

    total = jnp.zeros((1,), jnp.float32)
    for b in range(N):
        xi = jnp.transpose(x[b], (1, 2, 0)).astype(jnp.float32)  # (X,Y,C)
        diff = xi[:, :, None, None, :] - xi[None, None, :, :, :] # (X,Y,X,Y,C)
        d2 = jnp.sum(diff * diff, axis=-1)                       # (X,Y,X,Y)
        fdist = jnp.sqrt(d2)
        w = jnp.where(mask, (sd2 / SIGMA_X) * (fdist / SIGMA_I), 0.0)
        s = seg[b].astype(jnp.float32)                           # (K,X,Y)
        inner = jnp.einsum("ijmn,kmn->kij", w, s)
        assoc_a = jnp.sum(s * inner, axis=(1, 2))                # (K,)
        temp_sum = jnp.sum(d2, axis=(2, 3))                      # (X,Y)
        assoc_v = jnp.sum(s * temp_sum[None], axis=(1, 2))       # (K,)
        total = total + (float(K) - jnp.sum(assoc_a / assoc_v))
    return total


if __name__ == "__main__":
    # TODO(synk): print()/torch.cuda.memory_allocated() bookkeeping from the
    # reference has no device-side equivalent and is intentionally omitted.
    key = jax.random.PRNGKey(0)
    k1, k2 = jax.random.split(key)
    N, K, X, Y, C = 2, 4, 16, 16, 4
    x = jax.random.normal(k1, (N, C, X, Y), dtype=jnp.float32)
    seg = jax.nn.softmax(jax.random.normal(k2, (N, K, X, Y), dtype=jnp.float32), axis=1)

    loss = ncuts_loss(seg, x)
    jax.block_until_ready(loss)

    ref = ncuts_ref(seg, x)
    assert loss.shape == (1,)
    assert jnp.allclose(loss, ref, rtol=1e-2, atol=1e-3), (loss, ref)
    print("KERNEL_OK")
</pallas_src>

<mosaic_0001>
module attributes {stable_mosaic.version = 11 : i64} {
  func.func @_ncuts_kernel(%arg0: i32, %arg1: memref<2x256xi32, #tpu.memory_space<vmem>>, %arg2: memref<1x4x256xf32, #tpu.memory_space<vmem>>, %arg3: memref<1x4x256xf32, #tpu.memory_space<vmem>>, %arg4: memref<1x1x1xf32, #tpu.memory_space<vmem>>) attributes {dimension_semantics = [#tpu.dimension_semantics<parallel>], iteration_bounds = array<i64: 2>, scalar_prefetch = 0 : i64, scratch_operands = 0 : i64, tpu.core_type = #tpu.core_type<tc>, window_params = [{pipeline_mode = #tpu.pipeline_mode<synchronous>, transform_indices = @transform_0, window_bounds = array<i64: 2, 256>}, {transform_indices = @transform_1, window_bounds = array<i64: 1, 4, 256>}, {transform_indices = @transform_2, window_bounds = array<i64: 1, 4, 256>}, {transform_indices = @transform_3, window_bounds = array<i64: 1, 1, 1>}]} {
    %c0 = arith.constant 0 : index
    %c0_0 = arith.constant 0 : index
    %c0_1 = arith.constant 0 : index
    %0 = vector.load %arg2[%c0, %c0_0, %c0_1] : memref<1x4x256xf32, #tpu.memory_space<vmem>>, vector<1x4x256xf32>
    %1 = vector.shape_cast %0 : vector<1x4x256xf32> to vector<4x256xf32>
    %c0_2 = arith.constant 0 : index
    %c0_3 = arith.constant 0 : index
    %c0_4 = arith.constant 0 : index
    %2 = vector.load %arg3[%c0_2, %c0_3, %c0_4] : memref<1x4x256xf32, #tpu.memory_space<vmem>>, vector<1x4x256xf32>
    %3 = vector.shape_cast %2 : vector<1x4x256xf32> to vector<4x256xf32>
    %4 = arith.mulf %1, %1 : vector<4x256xf32>
    %cst = arith.constant dense<0.000000e+00> : vector<256xf32>
    %5 = vector.multi_reduction <add>, %4, %cst [0] : vector<4x256xf32> to vector<256xf32>
    %6 = vector.shape_cast %5 : vector<256xf32> to vector<1x256xf32>
    %7 = vector.shape_cast %6 : vector<1x256xf32> to vector<1x1x256xf32>
    %cst_5 = arith.constant dense<0.000000e+00> : vector<1xf32>
    %8 = vector.multi_reduction <add>, %7, %cst_5 [1, 2] : vector<1x1x256xf32> to vector<1xf32>
    %9 = vector.shape_cast %8 : vector<1xf32> to vector<1x1x1xf32>
    %10 = vector.extract %9[0, 0, 0] : f32 from vector<1x1x1xf32>
    %cst_6 = arith.constant dense<0.000000e+00> : vector<4xf32>
    %11 = vector.multi_reduction <add>, %1, %cst_6 [1] : vector<4x256xf32> to vector<4xf32>
    %12 = vector.shape_cast %11 : vector<4xf32> to vector<4x1xf32>
    %13 = vector.broadcast %12 : vector<4x1xf32> to vector<4x256xf32>
    %14 = arith.mulf %1, %13 : vector<4x256xf32>
    %cst_7 = arith.constant dense<0.000000e+00> : vector<256xf32>
    %15 = vector.multi_reduction <add>, %14, %cst_7 [0] : vector<4x256xf32> to vector<256xf32>
    %16 = vector.shape_cast %15 : vector<256xf32> to vector<1x256xf32>
    %cst_8 = arith.constant 2.560000e+02 : f32
    %17 = vector.broadcast %cst_8 : f32 to vector<1x256xf32>
    %18 = arith.mulf %17, %6 : vector<1x256xf32>
    %19 = vector.broadcast %10 : f32 to vector<1x256xf32>
    %20 = arith.addf %18, %19 : vector<1x256xf32>
    %cst_9 = arith.constant 2.000000e+00 : f32
    %21 = vector.broadcast %cst_9 : f32 to vector<1x256xf32>
    %22 = arith.mulf %21, %16 : vector<1x256xf32>
    %23 = arith.subf %20, %22 : vector<1x256xf32>
    %24 = vector.broadcast %23 : vector<1x256xf32> to vector<4x256xf32>
    %25 = arith.mulf %3, %24 : vector<4x256xf32>
    %cst_10 = arith.constant dense<0.000000e+00> : vector<4xf32>
    %26 = vector.multi_reduction <add>, %25, %cst_10 [1] : vector<4x256xf32> to vector<4xf32>
    %27 = vector.shape_cast %26 : vector<4xf32> to vector<4x1xf32>
    %c0_11 = arith.constant 0 : index
    %c0_12 = arith.constant 0 : index
    %28 = vector.load %arg1[%c0_11, %c0_12] : memref<2x256xi32, #tpu.memory_space<vmem>>, vector<1x256xi32>
    %c1 = arith.constant 1 : index
    %c0_13 = arith.constant 0 : index
    %29 = vector.load %arg1[%c1, %c0_13] : memref<2x256xi32, #tpu.memory_space<vmem>>, vector<1x256xi32>
    %c-5_i32 = arith.constant -5 : i32
    %30 = vector.broadcast %c-5_i32 : i32 to vector<1x256xi32>
    %31 = arith.addi %28, %30 : vector<1x256xi32>
    %c0_i32 = arith.constant 0 : i32
    %32 = vector.broadcast %c0_i32 : i32 to vector<1x256xi32>
    %33 = arith.cmpi sge, %31, %32 : vector<1x256xi32>
    %c-5_i32_14 = arith.constant -5 : i32
    %34 = vector.broadcast %c-5_i32_14 : i32 to vector<1x256xi32>
    %35 = arith.addi %28, %34 : vector<1x256xi32>
    %c16_i32 = arith.constant 16 : i32
    %36 = vector.broadcast %c16_i32 : i32 to vector<1x256xi32>
    %37 = arith.cmpi slt, %35, %36 : vector<1x256xi32>
    %38 = arith.andi %33, %37 : vector<1x256xi1>
    %cst_15 = arith.constant 1.000000e+00 : f32
    %cst_16 = arith.constant 0.000000e+00 : f32
    %39 = vector.broadcast %cst_15 : f32 to vector<1x256xf32>
    %40 = vector.broadcast %cst_16 : f32 to vector<1x256xf32>
    %41 = arith.select %38, %39, %40 : vector<1x256xi1>, vector<1x256xf32>
    %c-4_i32 = arith.constant -4 : i32
    %42 = vector.broadcast %c-4_i32 : i32 to vector<1x256xi32>
    %43 = arith.addi %28, %42 : vector<1x256xi32>
    %c0_i32_17 = arith.constant 0 : i32
    %44 = vector.broadcast %c0_i32_17 : i32 to vector<1x256xi32>
    %45 = arith.cmpi sge, %43, %44 : vector<1x256xi32>
    %c-4_i32_18 = arith.constant -4 : i32
    %46 = vector.broadcast %c-4_i32_18 : i32 to vector<1x256xi32>
    %47 = arith.addi %28, %46 : vector<1x256xi32>
    %c16_i32_19 = arith.constant 16 : i32
    %48 = vector.broadcast %c16_i32_19 : i32 to vector<1x256xi32>
    %49 = arith.cmpi slt, %47, %48 : vector<1x256xi32>
    %50 = arith.andi %45, %49 : vector<1x256xi1>
    %cst_20 = arith.constant 1.000000e+00 : f32
    %cst_21 = arith.constant 0.000000e+00 : f32
    %51 = vector.broadcast %cst_20 : f32 to vector<1x256xf32>
    %52 = vector.broadcast %cst_21 : f32 to vector<1x256xf32>
    %53 = arith.select %50, %51, %52 : vector<1x256xi1>, vector<1x256xf32>
    %c-3_i32 = arith.constant -3 : i32
    %54 = vector.broadcast %c-3_i32 : i32 to vector<1x256xi32>
    %55 = arith.addi %28, %54 : vector<1x256xi32>
    %c0_i32_22 = arith.constant 0 : i32
    %56 = vector.broadcast %c0_i32_22 : i32 to vector<1x256xi32>
    %57 = arith.cmpi sge, %55, %56 : vector<1x256xi32>
    %c-3_i32_23 = arith.constant -3 : i32
    %58 = vector.broadcast %c-3_i32_23 : i32 to vector<1x256xi32>
    %59 = arith.addi %28, %58 : vector<1x256xi32>
    %c16_i32_24 = arith.constant 16 : i32
    %60 = vector.broadcast %c16_i32_24 : i32 to vector<1x256xi32>
    %61 = arith.cmpi slt, %59, %60 : vector<1x256xi32>
    %62 = arith.andi %57, %61 : vector<1x256xi1>
    %cst_25 = arith.constant 1.000000e+00 : f32
    %cst_26 = arith.constant 0.000000e+00 : f32
    %63 = vector.broadcast %cst_25 : f32 to vector<1x256xf32>
    %64 = vector.broadcast %cst_26 : f32 to vector<1x256xf32>
    %65 = arith.select %62, %63, %64 : vector<1x256xi1>, vector<1x256xf32>
    %c-2_i32 = arith.constant -2 : i32
    %66 = vector.broadcast %c-2_i32 : i32 to vector<1x256xi32>
    %67 = arith.addi %28, %66 : vector<1x256xi32>
    %c0_i32_27 = arith.constant 0 : i32
    %68 = vector.broadcast %c0_i32_27 : i32 to vector<1x256xi32>
    %69 = arith.cmpi sge, %67, %68 : vector<1x256xi32>
    %c-2_i32_28 = arith.constant -2 : i32
    %70 = vector.broadcast %c-2_i32_28 : i32 to vector<1x256xi32>
    %71 = arith.addi %28, %70 : vector<1x256xi32>
    %c16_i32_29 = arith.constant 16 : i32
    %72 = vector.broadcast %c16_i32_29 : i32 to vector<1x256xi32>
    %73 = arith.cmpi slt, %71, %72 : vector<1x256xi32>
    %74 = arith.andi %69, %73 : vector<1x256xi1>
    %cst_30 = arith.constant 1.000000e+00 : f32
    %cst_31 = arith.constant 0.000000e+00 : f32
    %75 = vector.broadcast %cst_30 : f32 to vector<1x256xf32>
    %76 = vector.broadcast %cst_31 : f32 to vector<1x256xf32>
    %77 = arith.select %74, %75, %76 : vector<1x256xi1>, vector<1x256xf32>
    %c-1_i32 = arith.constant -1 : i32
    %78 = vector.broadcast %c-1_i32 : i32 to vector<1x256xi32>
    %79 = arith.addi %28, %78 : vector<1x256xi32>
    %c0_i32_32 = arith.constant 0 : i32
    %80 = vector.broadcast %c0_i32_32 : i32 to vector<1x256xi32>
    %81 = arith.cmpi sge, %79, %80 : vector<1x256xi32>
    %c-1_i32_33 = arith.constant -1 : i32
    %82 = vector.broadcast %c-1_i32_33 : i32 to vector<1x256xi32>
    %83 = arith.addi %28, %82 : vector<1x256xi32>
    %c16_i32_34 = arith.constant 16 : i32
    %84 = vector.broadcast %c16_i32_34 : i32 to vector<1x256xi32>
    %85 = arith.cmpi slt, %83, %84 : vector<1x256xi32>
    %86 = arith.andi %81, %85 : vector<1x256xi1>
    %cst_35 = arith.constant 1.000000e+00 : f32
    %cst_36 = arith.constant 0.000000e+00 : f32
    %87 = vector.broadcast %cst_35 : f32 to vector<1x256xf32>
    %88 = vector.broadcast %cst_36 : f32 to vector<1x256xf32>
    %89 = arith.select %86, %87, %88 : vector<1x256xi1>, vector<1x256xf32>
    %c0_i32_37 = arith.constant 0 : i32
    %90 = vector.broadcast %c0_i32_37 : i32 to vector<1x256xi32>
    %91 = arith.addi %28, %90 : vector<1x256xi32>
    %c0_i32_38 = arith.constant 0 : i32
    %92 = vector.broadcast %c0_i32_38 : i32 to vector<1x256xi32>
    %93 = arith.cmpi sge, %91, %92 : vector<1x256xi32>
    %c0_i32_39 = arith.constant 0 : i32
    %94 = vector.broadcast %c0_i32_39 : i32 to vector<1x256xi32>
    %95 = arith.addi %28, %94 : vector<1x256xi32>
    %c16_i32_40 = arith.constant 16 : i32
    %96 = vector.broadcast %c16_i32_40 : i32 to vector<1x256xi32>
    %97 = arith.cmpi slt, %95, %96 : vector<1x256xi32>
    %98 = arith.andi %93, %97 : vector<1x256xi1>
    %cst_41 = arith.constant 1.000000e+00 : f32
    %cst_42 = arith.constant 0.000000e+00 : f32
    %99 = vector.broadcast %cst_41 : f32 to vector<1x256xf32>
    %100 = vector.broadcast %cst_42 : f32 to vector<1x256xf32>
    %101 = arith.select %98, %99, %100 : vector<1x256xi1>, vector<1x256xf32>
    %c1_i32 = arith.constant 1 : i32
    %102 = vector.broadcast %c1_i32 : i32 to vector<1x256xi32>
    %103 = arith.addi %28, %102 : vector<1x256xi32>
    %c0_i32_43 = arith.constant 0 : i32
    %104 = vector.broadcast %c0_i32_43 : i32 to vector<1x256xi32>
    %105 = arith.cmpi sge, %103, %104 : vector<1x256xi32>
    %c1_i32_44 = arith.constant 1 : i32
    %106 = vector.broadcast %c1_i32_44 : i32 to vector<1x256xi32>
    %107 = arith.addi %28, %106 : vector<1x256xi32>
    %c16_i32_45 = arith.constant 16 : i32
    %108 = vector.broadcast %c16_i32_45 : i32 to vector<1x256xi32>
    %109 = arith.cmpi slt, %107, %108 : vector<1x256xi32>
    %110 = arith.andi %105, %109 : vector<1x256xi1>
    %cst_46 = arith.constant 1.000000e+00 : f32
    %cst_47 = arith.constant 0.000000e+00 : f32
    %111 = vector.broadcast %cst_46 : f32 to vector<1x256xf32>
    %112 = vector.broadcast %cst_47 : f32 to vector<1x256xf32>
    %113 = arith.select %110, %111, %112 : vector<1x256xi1>, vector<1x256xf32>
    %c2_i32 = arith.constant 2 : i32
    %114 = vector.broadcast %c2_i32 : i32 to vector<1x256xi32>
    %115 = arith.addi %28, %114 : vector<1x256xi32>
    %c0_i32_48 = arith.constant 0 : i32
    %116 = vector.broadcast %c0_i32_48 : i32 to vector<1x256xi32>
    %117 = arith.cmpi sge, %115, %116 : vector<1x256xi32>
    %c2_i32_49 = arith.constant 2 : i32
    %118 = vector.broadcast %c2_i32_49 : i32 to vector<1x256xi32>
    %119 = arith.addi %28, %118 : vector<1x256xi32>
    %c16_i32_50 = arith.constant 16 : i32
    %120 = vector.broadcast %c16_i32_50 : i32 to vector<1x256xi32>
    %121 = arith.cmpi slt, %119, %120 : vector<1x256xi32>
    %122 = arith.andi %117, %121 : vector<1x256xi1>
    %cst_51 = arith.constant 1.000000e+00 : f32
    %cst_52 = arith.constant 0.000000e+00 : f32
    %123 = vector.broadcast %cst_51 : f32 to vector<1x256xf32>
    %124 = vector.broadcast %cst_52 : f32 to vector<1x256xf32>
    %125 = arith.select %122, %123, %124 : vector<1x256xi1>, vector<1x256xf32>
    %c3_i32 = arith.constant 3 : i32
    %126 = vector.broadcast %c3_i32 : i32 to vector<1x256xi32>
    %127 = arith.addi %28, %126 : vector<1x256xi32>
    %c0_i32_53 = arith.constant 0 : i32
    %128 = vector.broadcast %c0_i32_53 : i32 to vector<1x256xi32>
    %129 = arith.cmpi sge, %127, %128 : vector<1x256xi32>
    %c3_i32_54 = arith.constant 3 : i32
    %130 = vector.broadcast %c3_i32_54 : i32 to vector<1x256xi32>
    %131 = arith.addi %28, %130 : vector<1x256xi32>
    %c16_i32_55 = arith.constant 16 : i32
    %132 = vector.broadcast %c16_i32_55 : i32 to vector<1x256xi32>
    %133 = arith.cmpi slt, %131, %132 : vector<1x256xi32>
    %134 = arith.andi %129, %133 : vector<1x256xi1>
    %cst_56 = arith.constant 1.000000e+00 : f32
    %cst_57 = arith.constant 0.000000e+00 : f32
    %135 = vector.broadcast %cst_56 : f32 to vector<1x256xf32>
    %136 = vector.broadcast %cst_57 : f32 to vector<1x256xf32>
    %137 = arith.select %134, %135, %136 : vector<1x256xi1>, vector<1x256xf32>
    %c4_i32 = arith.constant 4 : i32
    %138 = vector.broadcast %c4_i32 : i32 to vector<1x256xi32>
    %139 = arith.addi %28, %138 : vector<1x256xi32>
    %c0_i32_58 = arith.constant 0 : i32
    %140 = vector.broadcast %c0_i32_58 : i32 to vector<1x256xi32>
    %141 = arith.cmpi sge, %139, %140 : vector<1x256xi32>
    %c4_i32_59 = arith.constant 4 : i32
    %142 = vector.broadcast %c4_i32_59 : i32 to vector<1x256xi32>
    %143 = arith.addi %28, %142 : vector<1x256xi32>
    %c16_i32_60 = arith.constant 16 : i32
    %144 = vector.broadcast %c16_i32_60 : i32 to vector<1x256xi32>
    %145 = arith.cmpi slt, %143, %144 : vector<1x256xi32>
    %146 = arith.andi %141, %145 : vector<1x256xi1>
    %cst_61 = arith.constant 1.000000e+00 : f32
    %cst_62 = arith.constant 0.000000e+00 : f32
    %147 = vector.broadcast %cst_61 : f32 to vector<1x256xf32>
    %148 = vector.broadcast %cst_62 : f32 to vector<1x256xf32>
    %149 = arith.select %146, %147, %148 : vector<1x256xi1>, vector<1x256xf32>
    %c-5_i32_63 = arith.constant -5 : i32
    %150 = vector.broadcast %c-5_i32_63 : i32 to vector<1x256xi32>
    %151 = arith.addi %29, %150 : vector<1x256xi32>
    %c0_i32_64 = arith.constant 0 : i32
    %152 = vector.broadcast %c0_i32_64 : i32 to vector<1x256xi32>
    %153 = arith.cmpi sge, %151, %152 : vector<1x256xi32>
    %c-5_i32_65 = arith.constant -5 : i32
    %154 = vector.broadcast %c-5_i32_65 : i32 to vector<1x256xi32>
    %155 = arith.addi %29, %154 : vector<1x256xi32>
    %c16_i32_66 = arith.constant 16 : i32
    %156 = vector.broadcast %c16_i32_66 : i32 to vector<1x256xi32>
    %157 = arith.cmpi slt, %155, %156 : vector<1x256xi32>
    %158 = arith.andi %153, %157 : vector<1x256xi1>
    %cst_67 = arith.constant 1.000000e+00 : f32
    %cst_68 = arith.constant 0.000000e+00 : f32
    %159 = vector.broadcast %cst_67 : f32 to vector<1x256xf32>
    %160 = vector.broadcast %cst_68 : f32 to vector<1x256xf32>
    %161 = arith.select %158, %159, %160 : vector<1x256xi1>, vector<1x256xf32>
    %c-4_i32_69 = arith.constant -4 : i32
    %162 = vector.broadcast %c-4_i32_69 : i32 to vector<1x256xi32>
    %163 = arith.addi %29, %162 : vector<1x256xi32>
    %c0_i32_70 = arith.constant 0 : i32
    %164 = vector.broadcast %c0_i32_70 : i32 to vector<1x256xi32>
    %165 = arith.cmpi sge, %163, %164 : vector<1x256xi32>
    %c-4_i32_71 = arith.constant -4 : i32
    %166 = vector.broadcast %c-4_i32_71 : i32 to vector<1x256xi32>
    %167 = arith.addi %29, %166 : vector<1x256xi32>
    %c16_i32_72 = arith.constant 16 : i32
    %168 = vector.broadcast %c16_i32_72 : i32 to vector<1x256xi32>
    %169 = arith.cmpi slt, %167, %168 : vector<1x256xi32>
    %170 = arith.andi %165, %169 : vector<1x256xi1>
    %cst_73 = arith.constant 1.000000e+00 : f32
    %cst_74 = arith.constant 0.000000e+00 : f32
    %171 = vector.broadcast %cst_73 : f32 to vector<1x256xf32>
    %172 = vector.broadcast %cst_74 : f32 to vector<1x256xf32>
    %173 = arith.select %170, %171, %172 : vector<1x256xi1>, vector<1x256xf32>
    %c-3_i32_75 = arith.constant -3 : i32
    %174 = vector.broadcast %c-3_i32_75 : i32 to vector<1x256xi32>
    %175 = arith.addi %29, %174 : vector<1x256xi32>
    %c0_i32_76 = arith.constant 0 : i32
    %176 = vector.broadcast %c0_i32_76 : i32 to vector<1x256xi32>
    %177 = arith.cmpi sge, %175, %176 : vector<1x256xi32>
    %c-3_i32_77 = arith.constant -3 : i32
    %178 = vector.broadcast %c-3_i32_77 : i32 to vector<1x256xi32>
    %179 = arith.addi %29, %178 : vector<1x256xi32>
    %c16_i32_78 = arith.constant 16 : i32
    %180 = vector.broadcast %c16_i32_78 : i32 to vector<1x256xi32>
    %181 = arith.cmpi slt, %179, %180 : vector<1x256xi32>
    %182 = arith.andi %177, %181 : vector<1x256xi1>
    %cst_79 = arith.constant 1.000000e+00 : f32
    %cst_80 = arith.constant 0.000000e+00 : f32
    %183 = vector.broadcast %cst_79 : f32 to vector<1x256xf32>
    %184 = vector.broadcast %cst_80 : f32 to vector<1x256xf32>
    %185 = arith.select %182, %183, %184 : vector<1x256xi1>, vector<1x256xf32>
    %c-2_i32_81 = arith.constant -2 : i32
    %186 = vector.broadcast %c-2_i32_81 : i32 to vector<1x256xi32>
    %187 = arith.addi %29, %186 : vector<1x256xi32>
    %c0_i32_82 = arith.constant 0 : i32
    %188 = vector.broadcast %c0_i32_82 : i32 to vector<1x256xi32>
    %189 = arith.cmpi sge, %187, %188 : vector<1x256xi32>
    %c-2_i32_83 = arith.constant -2 : i32
    %190 = vector.broadcast %c-2_i32_83 : i32 to vector<1x256xi32>
    %191 = arith.addi %29, %190 : vector<1x256xi32>
    %c16_i32_84 = arith.constant 16 : i32
    %192 = vector.broadcast %c16_i32_84 : i32 to vector<1x256xi32>
    %193 = arith.cmpi slt, %191, %192 : vector<1x256xi32>
    %194 = arith.andi %189, %193 : vector<1x256xi1>
    %cst_85 = arith.constant 1.000000e+00 : f32
    %cst_86 = arith.constant 0.000000e+00 : f32
    %195 = vector.broadcast %cst_85 : f32 to vector<1x256xf32>
    %196 = vector.broadcast %cst_86 : f32 to vector<1x256xf32>
    %197 = arith.select %194, %195, %196 : vector<1x256xi1>, vector<1x256xf32>
    %c-1_i32_87 = arith.constant -1 : i32
    %198 = vector.broadcast %c-1_i32_87 : i32 to vector<1x256xi32>
    %199 = arith.addi %29, %198 : vector<1x256xi32>
    %c0_i32_88 = arith.constant 0 : i32
    %200 = vector.broadcast %c0_i32_88 : i32 to vector<1x256xi32>
    %201 = arith.cmpi sge, %199, %200 : vector<1x256xi32>
    %c-1_i32_89 = arith.constant -1 : i32
    %202 = vector.broadcast %c-1_i32_89 : i32 to vector<1x256xi32>
    %203 = arith.addi %29, %202 : vector<1x256xi32>
    %c16_i32_90 = arith.constant 16 : i32
    %204 = vector.broadcast %c16_i32_90 : i32 to vector<1x256xi32>
    %205 = arith.cmpi slt, %203, %204 : vector<1x256xi32>
    %206 = arith.andi %201, %205 : vector<1x256xi1>
    %cst_91 = arith.constant 1.000000e+00 : f32
    %cst_92 = arith.constant 0.000000e+00 : f32
    %207 = vector.broadcast %cst_91 : f32 to vector<1x256xf32>
    %208 = vector.broadcast %cst_92 : f32 to vector<1x256xf32>
    %209 = arith.select %206, %207, %208 : vector<1x256xi1>, vector<1x256xf32>
    %c0_i32_93 = arith.constant 0 : i32
    %210 = vector.broadcast %c0_i32_93 : i32 to vector<1x256xi32>
    %211 = arith.addi %29, %210 : vector<1x256xi32>
    %c0_i32_94 = arith.constant 0 : i32
    %212 = vector.broadcast %c0_i32_94 : i32 to vector<1x256xi32>
    %213 = arith.cmpi sge, %211, %212 : vector<1x256xi32>
    %c0_i32_95 = arith.constant 0 : i32
    %214 = vector.broadcast %c0_i32_95 : i32 to vector<1x256xi32>
    %215 = arith.addi %29, %214 : vector<1x256xi32>
    %c16_i32_96 = arith.constant 16 : i32
    %216 = vector.broadcast %c16_i32_96 : i32 to vector<1x256xi32>
    %217 = arith.cmpi slt, %215, %216 : vector<1x256xi32>
    %218 = arith.andi %213, %217 : vector<1x256xi1>
    %cst_97 = arith.constant 1.000000e+00 : f32
    %cst_98 = arith.constant 0.000000e+00 : f32
    %219 = vector.broadcast %cst_97 : f32 to vector<1x256xf32>
    %220 = vector.broadcast %cst_98 : f32 to vector<1x256xf32>
    %221 = arith.select %218, %219, %220 : vector<1x256xi1>, vector<1x256xf32>
    %c1_i32_99 = arith.constant 1 : i32
    %222 = vector.broadcast %c1_i32_99 : i32 to vector<1x256xi32>
    %223 = arith.addi %29, %222 : vector<1x256xi32>
    %c0_i32_100 = arith.constant 0 : i32
    %224 = vector.broadcast %c0_i32_100 : i32 to vector<1x256xi32>
    %225 = arith.cmpi sge, %223, %224 : vector<1x256xi32>
    %c1_i32_101 = arith.constant 1 : i32
    %226 = vector.broadcast %c1_i32_101 : i32 to vector<1x256xi32>
    %227 = arith.addi %29, %226 : vector<1x256xi32>
    %c16_i32_102 = arith.constant 16 : i32
    %228 = vector.broadcast %c16_i32_102 : i32 to vector<1x256xi32>
    %229 = arith.cmpi slt, %227, %228 : vector<1x256xi32>
    %230 = arith.andi %225, %229 : vector<1x256xi1>
    %cst_103 = arith.constant 1.000000e+00 : f32
    %cst_104 = arith.constant 0.000000e+00 : f32
    %231 = vector.broadcast %cst_103 : f32 to vector<1x256xf32>
    %232 = vector.broadcast %cst_104 : f32 to vector<1x256xf32>
    %233 = arith.select %230, %231, %232 : vector<1x256xi1>, vector<1x256xf32>
    %c2_i32_105 = arith.constant 2 : i32
    %234 = vector.broadcast %c2_i32_105 : i32 to vector<1x256xi32>
    %235 = arith.addi %29, %234 : vector<1x256xi32>
    %c0_i32_106 = arith.constant 0 : i32
    %236 = vector.broadcast %c0_i32_106 : i32 to vector<1x256xi32>
    %237 = arith.cmpi sge, %235, %236 : vector<1x256xi32>
    %c2_i32_107 = arith.constant 2 : i32
    %238 = vector.broadcast %c2_i32_107 : i32 to vector<1x256xi32>
    %239 = arith.addi %29, %238 : vector<1x256xi32>
    %c16_i32_108 = arith.constant 16 : i32
    %240 = vector.broadcast %c16_i32_108 : i32 to vector<1x256xi32>
    %241 = arith.cmpi slt, %239, %240 : vector<1x256xi32>
    %242 = arith.andi %237, %241 : vector<1x256xi1>
    %cst_109 = arith.constant 1.000000e+00 : f32
    %cst_110 = arith.constant 0.000000e+00 : f32
    %243 = vector.broadcast %cst_109 : f32 to vector<1x256xf32>
    %244 = vector.broadcast %cst_110 : f32 to vector<1x256xf32>
    %245 = arith.select %242, %243, %244 : vector<1x256xi1>, vector<1x256xf32>
    %c3_i32_111 = arith.constant 3 : i32
    %246 = vector.broadcast %c3_i32_111 : i32 to vector<1x256xi32>
    %247 = arith.addi %29, %246 : vector<1x256xi32>
    %c0_i32_112 = arith.constant 0 : i32
    %248 = vector.broadcast %c0_i32_112 : i32 to vector<1x256xi32>
    %249 = arith.cmpi sge, %247, %248 : vector<1x256xi32>
    %c3_i32_113 = arith.constant 3 : i32
    %250 = vector.broadcast %c3_i32_113 : i32 to vector<1x256xi32>
    %251 = arith.addi %29, %250 : vector<1x256xi32>
    %c16_i32_114 = arith.constant 16 : i32
    %252 = vector.broadcast %c16_i32_114 : i32 to vector<1x256xi32>
    %253 = arith.cmpi slt, %251, %252 : vector<1x256xi32>
    %254 = arith.andi %249, %253 : vector<1x256xi1>
    %cst_115 = arith.constant 1.000000e+00 : f32
    %cst_116 = arith.constant 0.000000e+00 : f32
    %255 = vector.broadcast %cst_115 : f32 to vector<1x256xf32>
    %256 = vector.broadcast %cst_116 : f32 to vector<1x256xf32>
    %257 = arith.select %254, %255, %256 : vector<1x256xi1>, vector<1x256xf32>
    %c4_i32_117 = arith.constant 4 : i32
    %258 = vector.broadcast %c4_i32_117 : i32 to vector<1x256xi32>
    %259 = arith.addi %29, %258 : vector<1x256xi32>
    %c0_i32_118 = arith.constant 0 : i32
    %260 = vector.broadcast %c0_i32_118 : i32 to vector<1x256xi32>
    %261 = arith.cmpi sge, %259, %260 : vector<1x256xi32>
    %c4_i32_119 = arith.constant 4 : i32
    %262 = vector.broadcast %c4_i32_119 : i32 to vector<1x256xi32>
    %263 = arith.addi %29, %262 : vector<1x256xi32>
    %c16_i32_120 = arith.constant 16 : i32
    %264 = vector.broadcast %c16_i32_120 : i32 to vector<1x256xi32>
    %265 = arith.cmpi slt, %263, %264 : vector<1x256xi32>
    %266 = arith.andi %261, %265 : vector<1x256xi1>
    %cst_121 = arith.constant 1.000000e+00 : f32
    %cst_122 = arith.constant 0.000000e+00 : f32
    %267 = vector.broadcast %cst_121 : f32 to vector<1x256xf32>
    %268 = vector.broadcast %cst_122 : f32 to vector<1x256xf32>
    %269 = arith.select %266, %267, %268 : vector<1x256xi1>, vector<1x256xf32>
    %cst_123 = arith.constant 0.000000e+00 : f32
    %270 = vector.broadcast %cst_123 : f32 to vector<4x256xf32>
    %cst_124 = arith.constant 0.000000e+00 : f32
    %271 = vector.broadcast %cst_124 : f32 to vector<4x256xf32>
    %cst_125 = arith.constant 0.000000e+00 : f32
    %272 = vector.broadcast %cst_125 : f32 to vector<4x256xf32>
    %cst_126 = arith.constant 0.000000e+00 : f32
    %273 = vector.broadcast %cst_126 : f32 to vector<4x256xf32>
    %c85_i32 = arith.constant 85 : i32
    %274 = tpu.dynamic_rotate %1 by %c85_i32 dim 1 : vector<4x256xf32>, i32 -> vector<4x256xf32>
    %c85_i32_127 = arith.constant 85 : i32
    %275 = tpu.dynamic_rotate %3 by %c85_i32_127 dim 1 : vector<4x256xf32>, i32 -> vector<4x256xf32>
    %276 = arith.subf %1, %274 : vector<4x256xf32>
    %277 = arith.mulf %276, %276 : vector<4x256xf32>
    %cst_128 = arith.constant dense<0.000000e+00> : vector<256xf32>
    %278 = vector.multi_reduction <add>, %277, %cst_128 [0] : vector<4x256xf32> to vector<256xf32>
    %279 = vector.shape_cast %278 : vector<256xf32> to vector<1x256xf32>
    %280 = arith.mulf %41, %161 : vector<1x256xf32>
    %281 = math.sqrt %279 : vector<1x256xf32>
    %cst_129 = arith.constant 1.250000e+00 : f32
    %282 = vector.broadcast %cst_129 : f32 to vector<1x256xf32>
    %283 = arith.mulf %282, %281 : vector<1x256xf32>
    %284 = arith.mulf %280, %283 : vector<1x256xf32>
    %285 = vector.broadcast %284 : vector<1x256xf32> to vector<4x256xf32>
    %286 = arith.mulf %285, %275 : vector<4x256xf32>
    %287 = arith.addf %270, %286 : vector<4x256xf32>
    %c84_i32 = arith.constant 84 : i32
    %288 = tpu.dynamic_rotate %1 by %c84_i32 dim 1 : vector<4x256xf32>, i32 -> vector<4x256xf32>
    %c84_i32_130 = arith.constant 84 : i32
    %289 = tpu.dynamic_rotate %3 by %c84_i32_130 dim 1 : vector<4x256xf32>, i32 -> vector<4x256xf32>
    %290 = arith.subf %1, %288 : vector<4x256xf32>
    %291 = arith.mulf %290, %290 : vector<4x256xf32>
    %cst_131 = arith.constant dense<0.000000e+00> : vector<256xf32>
    %292 = vector.multi_reduction <add>, %291, %cst_131 [0] : vector<4x256xf32> to vector<256xf32>
    %293 = vector.shape_cast %292 : vector<256xf32> to vector<1x256xf32>
    %294 = arith.mulf %41, %173 : vector<1x256xf32>
    %295 = math.sqrt %293 : vector<1x256xf32>
    %cst_132 = arith.constant 1.025000e+00 : f32
    %296 = vector.broadcast %cst_132 : f32 to vector<1x256xf32>
    %297 = arith.mulf %296, %295 : vector<1x256xf32>
    %298 = arith.mulf %294, %297 : vector<1x256xf32>
    %299 = vector.broadcast %298 : vector<1x256xf32> to vector<4x256xf32>
    %300 = arith.mulf %299, %289 : vector<4x256xf32>
    %301 = arith.addf %271, %300 : vector<4x256xf32>
    %c83_i32 = arith.constant 83 : i32
    %302 = tpu.dynamic_rotate %1 by %c83_i32 dim 1 : vector<4x256xf32>, i32 -> vector<4x256xf32>
    %c83_i32_133 = arith.constant 83 : i32
    %303 = tpu.dynamic_rotate %3 by %c83_i32_133 dim 1 : vector<4x256xf32>, i32 -> vector<4x256xf32>
    %304 = arith.subf %1, %302 : vector<4x256xf32>
    %305 = arith.mulf %304, %304 : vector<4x256xf32>
    %cst_134 = arith.constant dense<0.000000e+00> : vector<256xf32>
    %306 = vector.multi_reduction <add>, %305, %cst_134 [0] : vector<4x256xf32> to vector<256xf32>
    %307 = vector.shape_cast %306 : vector<256xf32> to vector<1x256xf32>
    %308 = arith.mulf %41, %185 : vector<1x256xf32>
    %309 = math.sqrt %307 : vector<1x256xf32>
    %cst_135 = arith.constant 8.500000e-01 : f32
    %310 = vector.broadcast %cst_135 : f32 to vector<1x256xf32>
    %311 = arith.mulf %310, %309 : vector<1x256xf32>
    %312 = arith.mulf %308, %311 : vector<1x256xf32>
    %313 = vector.broadcast %312 : vector<1x256xf32> to vector<4x256xf32>
    %314 = arith.mulf %313, %303 : vector<4x256xf32>
    %315 = arith.addf %272, %314 : vector<4x256xf32>
    %c82_i32 = arith.constant 82 : i32
    %316 = tpu.dynamic_rotate %1 by %c82_i32 dim 1 : vector<4x256xf32>, i32 -> vector<4x256xf32>
    %c82_i32_136 = arith.constant 82 : i32
    %317 = tpu.dynamic_rotate %3 by %c82_i32_136 dim 1 : vector<4x256xf32>, i32 -> vector<4x256xf32>
    %318 = arith.subf %1, %316 : vector<4x256xf32>
    %319 = arith.mulf %318, %318 : vector<4x256xf32>
    %cst_137 = arith.constant dense<0.000000e+00> : vector<256xf32>
    %320 = vector.multi_reduction <add>, %319, %cst_137 [0] : vector<4x256xf32> to vector<256xf32>
    %321 = vector.shape_cast %320 : vector<256xf32> to vector<1x256xf32>
    %322 = arith.mulf %41, %197 : vector<1x256xf32>
    %323 = math.sqrt %321 : vector<1x256xf32>
    %cst_138 = arith.constant 7.250000e-01 : f32
    %324 = vector.broadcast %cst_138 : f32 to vector<1x256xf32>
    %325 = arith.mulf %324, %323 : vector<1x256xf32>
    %326 = arith.mulf %322, %325 : vector<1x256xf32>
    %327 = vector.broadcast %326 : vector<1x256xf32> to vector<4x256xf32>
    %328 = arith.mulf %327, %317 : vector<4x256xf32>
    %329 = arith.addf %273, %328 : vector<4x256xf32>
    %c81_i32 = arith.constant 81 : i32
    %330 = tpu.dynamic_rotate %1 by %c81_i32 dim 1 : vector<4x256xf32>, i32 -> vector<4x256xf32>
    %c81_i32_139 = arith.constant 81 : i32
    %331 = tpu.dynamic_rotate %3 by %c81_i32_139 dim 1 : vector<4x256xf32>, i32 -> vector<4x256xf32>
    %332 = arith.subf %1, %330 : vector<4x256xf32>
    %333 = arith.mulf %332, %332 : vector<4x256xf32>
    %cst_140 = arith.constant dense<0.000000e+00> : vector<256xf32>
    %334 = vector.multi_reduction <add>, %333, %cst_140 [0] : vector<4x256xf32> to vector<256xf32>
    %335 = vector.shape_cast %334 : vector<256xf32> to vector<1x256xf32>
    %336 = arith.mulf %41, %209 : vector<1x256xf32>
    %337 = math.sqrt %335 : vector<1x256xf32>
    %cst_141 = arith.constant 6.500000e-01 : f32
    %338 = vector.broadcast %cst_141 : f32 to vector<1x256xf32>
    %339 = arith.mulf %338, %337 : vector<1x256xf32>
    %340 = arith.mulf %336, %339 : vector<1x256xf32>
    %341 = vector.broadcast %340 : vector<1x256xf32> to vector<4x256xf32>
    %342 = arith.mulf %341, %331 : vector<4x256xf32>
    %343 = arith.addf %287, %342 : vector<4x256xf32>
    %c80_i32 = arith.constant 80 : i32
    %344 = tpu.dynamic_rotate %1 by %c80_i32 dim 1 : vector<4x256xf32>, i32 -> vector<4x256xf32>
    %c80_i32_142 = arith.constant 80 : i32
    %345 = tpu.dynamic_rotate %3 by %c80_i32_142 dim 1 : vector<4x256xf32>, i32 -> vector<4x256xf32>
    %346 = arith.subf %1, %344 : vector<4x256xf32>
    %347 = arith.mulf %346, %346 : vector<4x256xf32>
    %cst_143 = arith.constant dense<0.000000e+00> : vector<256xf32>
    %348 = vector.multi_reduction <add>, %347, %cst_143 [0] : vector<4x256xf32> to vector<256xf32>
    %349 = vector.shape_cast %348 : vector<256xf32> to vector<1x256xf32>
    %350 = arith.mulf %41, %221 : vector<1x256xf32>
    %351 = math.sqrt %349 : vector<1x256xf32>
    %cst_144 = arith.constant 6.250000e-01 : f32
    %352 = vector.broadcast %cst_144 : f32 to vector<1x256xf32>
    %353 = arith.mulf %352, %351 : vector<1x256xf32>
    %354 = arith.mulf %350, %353 : vector<1x256xf32>
    %355 = vector.broadcast %354 : vector<1x256xf32> to vector<4x256xf32>
    %356 = arith.mulf %355, %345 : vector<4x256xf32>
    %357 = arith.addf %301, %356 : vector<4x256xf32>
    %c79_i32 = arith.constant 79 : i32
    %358 = tpu.dynamic_rotate %1 by %c79_i32 dim 1 : vector<4x256xf32>, i32 -> vector<4x256xf32>
    %c79_i32_145 = arith.constant 79 : i32
    %359 = tpu.dynamic_rotate %3 by %c79_i32_145 dim 1 : vector<4x256xf32>, i32 -> vector<4x256xf32>
    %360 = arith.subf %1, %358 : vector<4x256xf32>
    %361 = arith.mulf %360, %360 : vector<4x256xf32>
    %cst_146 = arith.constant dense<0.000000e+00> : vector<256xf32>
    %362 = vector.multi_reduction <add>, %361, %cst_146 [0] : vector<4x256xf32> to vector<256xf32>
    %363 = vector.shape_cast %362 : vector<256xf32> to vector<1x256xf32>
    %364 = arith.mulf %41, %233 : vector<1x256xf32>
    %365 = math.sqrt %363 : vector<1x256xf32>
    %cst_147 = arith.constant 6.500000e-01 : f32
    %366 = vector.broadcast %cst_147 : f32 to vector<1x256xf32>
    %367 = arith.mulf %366, %365 : vector<1x256xf32>
    %368 = arith.mulf %364, %367 : vector<1x256xf32>
    %369 = vector.broadcast %368 : vector<1x256xf32> to vector<4x256xf32>
    %370 = arith.mulf %369, %359 : vector<4x256xf32>
    %371 = arith.addf %315, %370 : vector<4x256xf32>
    %c78_i32 = arith.constant 78 : i32
    %372 = tpu.dynamic_rotate %1 by %c78_i32 dim 1 : vector<4x256xf32>, i32 -> vector<4x256xf32>
    %c78_i32_148 = arith.constant 78 : i32
    %373 = tpu.dynamic_rotate %3 by %c78_i32_148 dim 1 : vector<4x256xf32>, i32 -> vector<4x256xf32>
    %374 = arith.subf %1, %372 : vector<4x256xf32>
    %375 = arith.mulf %374, %374 : vector<4x256xf32>
    %cst_149 = arith.constant dense<0.000000e+00> : vector<256xf32>
    %376 = vector.multi_reduction <add>, %375, %cst_149 [0] : vector<4x256xf32> to vector<256xf32>
    %377 = vector.shape_cast %376 : vector<256xf32> to vector<1x256xf32>
    %378 = arith.mulf %41, %245 : vector<1x256xf32>
    %379 = math.sqrt %377 : vector<1x256xf32>
    %cst_150 = arith.constant 7.250000e-01 : f32
    %380 = vector.broadcast %cst_150 : f32 to vector<1x256xf32>
    %381 = arith.mulf %380, %379 : vector<1x256xf32>
    %382 = arith.mulf %378, %381 : vector<1x256xf32>
    %383 = vector.broadcast %382 : vector<1x256xf32> to vector<4x256xf32>
    %384 = arith.mulf %383, %373 : vector<4x256xf32>
    %385 = arith.addf %329, %384 : vector<4x256xf32>
    %c77_i32 = arith.constant 77 : i32
    %386 = tpu.dynamic_rotate %1 by %c77_i32 dim 1 : vector<4x256xf32>, i32 -> vector<4x256xf32>
    %c77_i32_151 = arith.constant 77 : i32
    %387 = tpu.dynamic_rotate %3 by %c77_i32_151 dim 1 : vector<4x256xf32>, i32 -> vector<4x256xf32>
    %388 = arith.subf %1, %386 : vector<4x256xf32>
    %389 = arith.mulf %388, %388 : vector<4x256xf32>
    %cst_152 = arith.constant dense<0.000000e+00> : vector<256xf32>
    %390 = vector.multi_reduction <add>, %389, %cst_152 [0] : vector<4x256xf32> to vector<256xf32>
    %391 = vector.shape_cast %390 : vector<256xf32> to vector<1x256xf32>
    %392 = arith.mulf %41, %257 : vector<1x256xf32>
    %393 = math.sqrt %391 : vector<1x256xf32>
    %cst_153 = arith.constant 8.500000e-01 : f32
    %394 = vector.broadcast %cst_153 : f32 to vector<1x256xf32>
    %395 = arith.mulf %394, %393 : vector<1x256xf32>
    %396 = arith.mulf %392, %395 : vector<1x256xf32>
    %397 = vector.broadcast %396 : vector<1x256xf32> to vector<4x256xf32>
    %398 = arith.mulf %397, %387 : vector<4x256xf32>
    %399 = arith.addf %343, %398 : vector<4x256xf32>
    %c76_i32 = arith.constant 76 : i32
    %400 = tpu.dynamic_rotate %1 by %c76_i32 dim 1 : vector<4x256xf32>, i32 -> vector<4x256xf32>
    %c76_i32_154 = arith.constant 76 : i32
    %401 = tpu.dynamic_rotate %3 by %c76_i32_154 dim 1 : vector<4x256xf32>, i32 -> vector<4x256xf32>
    %402 = arith.subf %1, %400 : vector<4x256xf32>
    %403 = arith.mulf %402, %402 : vector<4x256xf32>
    %cst_155 = arith.constant dense<0.000000e+00> : vector<256xf32>
    %404 = vector.multi_reduction <add>, %403, %cst_155 [0] : vector<4x256xf32> to vector<256xf32>
    %405 = vector.shape_cast %404 : vector<256xf32> to vector<1x256xf32>
    %406 = arith.mulf %41, %269 : vector<1x256xf32>
    %407 = math.sqrt %405 : vector<1x256xf32>
    %cst_156 = arith.constant 1.025000e+00 : f32
    %408 = vector.broadcast %cst_156 : f32 to vector<1x256xf32>
    %409 = arith.mulf %408, %407 : vector<1x256xf32>
    %410 = arith.mulf %406, %409 : vector<1x256xf32>
    %411 = vector.broadcast %410 : vector<1x256xf32> to vector<4x256xf32>
    %412 = arith.mulf %411, %401 : vector<4x256xf32>
    %413 = arith.addf %357, %412 : vector<4x256xf32>
    %c69_i32 = arith.constant 69 : i32
    %414 = tpu.dynamic_rotate %1 by %c69_i32 dim 1 : vector<4x256xf32>, i32 -> vector<4x256xf32>
    %c69_i32_157 = arith.constant 69 : i32
    %415 = tpu.dynamic_rotate %3 by %c69_i32_157 dim 1 : vector<4x256xf32>, i32 -> vector<4x256xf32>
    %416 = arith.subf %1, %414 : vector<4x256xf32>
    %417 = arith.mulf %416, %416 : vector<4x256xf32>
    %cst_158 = arith.constant dense<0.000000e+00> : vector<256xf32>
    %418 = vector.multi_reduction <add>, %417, %cst_158 [0] : vector<4x256xf32> to vector<256xf32>
    %419 = vector.shape_cast %418 : vector<256xf32> to vector<1x256xf32>
    %420 = arith.mulf %53, %161 : vector<1x256xf32>
    %421 = math.sqrt %419 : vector<1x256xf32>
    %cst_159 = arith.constant 1.025000e+00 : f32
    %422 = vector.broadcast %cst_159 : f32 to vector<1x256xf32>
    %423 = arith.mulf %422, %421 : vector<1x256xf32>
    %424 = arith.mulf %420, %423 : vector<1x256xf32>
    %425 = vector.broadcast %424 : vector<1x256xf32> to vector<4x256xf32>
    %426 = arith.mulf %425, %415 : vector<4x256xf32>
    %427 = arith.addf %371, %426 : vector<4x256xf32>
    %c53_i32 = arith.constant 53 : i32
    %428 = tpu.dynamic_rotate %1 by %c53_i32 dim 1 : vector<4x256xf32>, i32 -> vector<4x256xf32>
    %c53_i32_160 = arith.constant 53 : i32
    %429 = tpu.dynamic_rotate %3 by %c53_i32_160 dim 1 : vector<4x256xf32>, i32 -> vector<4x256xf32>
    %430 = arith.subf %1, %428 : vector<4x256xf32>
    %431 = arith.mulf %430, %430 : vector<4x256xf32>
    %cst_161 = arith.constant dense<0.000000e+00> : vector<256xf32>
    %432 = vector.multi_reduction <add>, %431, %cst_161 [0] : vector<4x256xf32> to vector<256xf32>
    %433 = vector.shape_cast %432 : vector<256xf32> to vector<1x256xf32>
    %434 = arith.mulf %65, %161 : vector<1x256xf32>
    %435 = math.sqrt %433 : vector<1x256xf32>
    %cst_162 = arith.constant 8.500000e-01 : f32
    %436 = vector.broadcast %cst_162 : f32 to vector<1x256xf32>
    %437 = arith.mulf %436, %435 : vector<1x256xf32>
    %438 = arith.mulf %434, %437 : vector<1x256xf32>
    %439 = vector.broadcast %438 : vector<1x256xf32> to vector<4x256xf32>
    %440 = arith.mulf %439, %429 : vector<4x256xf32>
    %441 = arith.addf %385, %440 : vector<4x256xf32>
    %c37_i32 = arith.constant 37 : i32
    %442 = tpu.dynamic_rotate %1 by %c37_i32 dim 1 : vector<4x256xf32>, i32 -> vector<4x256xf32>
    %c37_i32_163 = arith.constant 37 : i32
    %443 = tpu.dynamic_rotate %3 by %c37_i32_163 dim 1 : vector<4x256xf32>, i32 -> vector<4x256xf32>
    %444 = arith.subf %1, %442 : vector<4x256xf32>
    %445 = arith.mulf %444, %444 : vector<4x256xf32>
    %cst_164 = arith.constant dense<0.000000e+00> : vector<256xf32>
    %446 = vector.multi_reduction <add>, %445, %cst_164 [0] : vector<4x256xf32> to vector<256xf32>
    %447 = vector.shape_cast %446 : vector<256xf32> to vector<1x256xf32>
    %448 = arith.mulf %77, %161 : vector<1x256xf32>
    %449 = math.sqrt %447 : vector<1x256xf32>
    %cst_165 = arith.constant 7.250000e-01 : f32
    %450 = vector.broadcast %cst_165 : f32 to vector<1x256xf32>
    %451 = arith.mulf %450, %449 : vector<1x256xf32>
    %452 = arith.mulf %448, %451 : vector<1x256xf32>
    %453 = vector.broadcast %452 : vector<1x256xf32> to vector<4x256xf32>
    %454 = arith.mulf %453, %443 : vector<4x256xf32>
    %455 = arith.addf %399, %454 : vector<4x256xf32>
    %c21_i32 = arith.constant 21 : i32
    %456 = tpu.dynamic_rotate %1 by %c21_i32 dim 1 : vector<4x256xf32>, i32 -> vector<4x256xf32>
    %c21_i32_166 = arith.constant 21 : i32
    %457 = tpu.dynamic_rotate %3 by %c21_i32_166 dim 1 : vector<4x256xf32>, i32 -> vector<4x256xf32>
    %458 = arith.subf %1, %456 : vector<4x256xf32>
    %459 = arith.mulf %458, %458 : vector<4x256xf32>
    %cst_167 = arith.constant dense<0.000000e+00> : vector<256xf32>
    %460 = vector.multi_reduction <add>, %459, %cst_167 [0] : vector<4x256xf32> to vector<256xf32>
    %461 = vector.shape_cast %460 : vector<256xf32> to vector<1x256xf32>
    %462 = arith.mulf %89, %161 : vector<1x256xf32>
    %463 = math.sqrt %461 : vector<1x256xf32>
    %cst_168 = arith.constant 6.500000e-01 : f32
    %464 = vector.broadcast %cst_168 : f32 to vector<1x256xf32>
    %465 = arith.mulf %464, %463 : vector<1x256xf32>
    %466 = arith.mulf %462, %465 : vector<1x256xf32>
    %467 = vector.broadcast %466 : vector<1x256xf32> to vector<4x256xf32>
    %468 = arith.mulf %467, %457 : vector<4x256xf32>
    %469 = arith.addf %413, %468 : vector<4x256xf32>
    %c5_i32 = arith.constant 5 : i32
    %470 = tpu.dynamic_rotate %1 by %c5_i32 dim 1 : vector<4x256xf32>, i32 -> vector<4x256xf32>
    %c5_i32_169 = arith.constant 5 : i32
    %471 = tpu.dynamic_rotate %3 by %c5_i32_169 dim 1 : vector<4x256xf32>, i32 -> vector<4x256xf32>
    %472 = arith.subf %1, %470 : vector<4x256xf32>
    %473 = arith.mulf %472, %472 : vector<4x256xf32>
    %cst_170 = arith.constant dense<0.000000e+00> : vector<256xf32>
    %474 = vector.multi_reduction <add>, %473, %cst_170 [0] : vector<4x256xf32> to vector<256xf32>
    %475 = vector.shape_cast %474 : vector<256xf32> to vector<1x256xf32>
    %476 = arith.mulf %101, %161 : vector<1x256xf32>
    %477 = math.sqrt %475 : vector<1x256xf32>
    %cst_171 = arith.constant 6.250000e-01 : f32
    %478 = vector.broadcast %cst_171 : f32 to vector<1x256xf32>
    %479 = arith.mulf %478, %477 : vector<1x256xf32>
    %480 = arith.mulf %476, %479 : vector<1x256xf32>
    %481 = vector.broadcast %480 : vector<1x256xf32> to vector<4x256xf32>
    %482 = arith.mulf %481, %471 : vector<4x256xf32>
    %483 = arith.addf %427, %482 : vector<4x256xf32>
    %c252_i32 = arith.constant 252 : i32
    %484 = tpu.dynamic_rotate %1 by %c252_i32 dim 1 : vector<4x256xf32>, i32 -> vector<4x256xf32>
    %c252_i32_172 = arith.constant 252 : i32
    %485 = tpu.dynamic_rotate %3 by %c252_i32_172 dim 1 : vector<4x256xf32>, i32 -> vector<4x256xf32>
    %486 = arith.subf %1, %484 : vector<4x256xf32>
    %487 = arith.mulf %486, %486 : vector<4x256xf32>
    %cst_173 = arith.constant dense<0.000000e+00> : vector<256xf32>
    %488 = vector.multi_reduction <add>, %487, %cst_173 [0] : vector<4x256xf32> to vector<256xf32>
    %489 = vector.shape_cast %488 : vector<256xf32> to vector<1x256xf32>
    %490 = arith.mulf %101, %269 : vector<1x256xf32>
    %491 = math.sqrt %489 : vector<1x256xf32>
    %cst_174 = arith.constant 8.000000e-01 : f32
    %492 = vector.broadcast %cst_174 : f32 to vector<1x256xf32>
    %493 = arith.mulf %492, %491 : vector<1x256xf32>
    %494 = arith.mulf %490, %493 : vector<1x256xf32>
    %495 = vector.broadcast %494 : vector<1x256xf32> to vector<4x256xf32>
    %496 = arith.mulf %495, %485 : vector<4x256xf32>
    %497 = arith.addf %441, %496 : vector<4x256xf32>
    %c245_i32 = arith.constant 245 : i32
    %498 = tpu.dynamic_rotate %1 by %c245_i32 dim 1 : vector<4x256xf32>, i32 -> vector<4x256xf32>
    %c245_i32_175 = arith.constant 245 : i32
    %499 = tpu.dynamic_rotate %3 by %c245_i32_175 dim 1 : vector<4x256xf32>, i32 -> vector<4x256xf32>
    %500 = arith.subf %1, %498 : vector<4x256xf32>
    %501 = arith.mulf %500, %500 : vector<4x256xf32>
    %cst_176 = arith.constant dense<0.000000e+00> : vector<256xf32>
    %502 = vector.multi_reduction <add>, %501, %cst_176 [0] : vector<4x256xf32> to vector<256xf32>
    %503 = vector.shape_cast %502 : vector<256xf32> to vector<1x256xf32>
    %504 = arith.mulf %113, %161 : vector<1x256xf32>
    %505 = math.sqrt %503 : vector<1x256xf32>
    %cst_177 = arith.constant 6.500000e-01 : f32
    %506 = vector.broadcast %cst_177 : f32 to vector<1x256xf32>
    %507 = arith.mulf %506, %505 : vector<1x256xf32>
    %508 = arith.mulf %504, %507 : vector<1x256xf32>
    %509 = vector.broadcast %508 : vector<1x256xf32> to vector<4x256xf32>
    %510 = arith.mulf %509, %499 : vector<4x256xf32>
    %511 = arith.addf %455, %510 : vector<4x256xf32>
    %c244_i32 = arith.constant 244 : i32
    %512 = tpu.dynamic_rotate %1 by %c244_i32 dim 1 : vector<4x256xf32>, i32 -> vector<4x256xf32>
    %c244_i32_178 = arith.constant 244 : i32
    %513 = tpu.dynamic_rotate %3 by %c244_i32_178 dim 1 : vector<4x256xf32>, i32 -> vector<4x256xf32>
    %514 = arith.subf %1, %512 : vector<4x256xf32>
    %515 = arith.mulf %514, %514 : vector<4x256xf32>
    %cst_179 = arith.constant dense<0.000000e+00> : vector<256xf32>
    %516 = vector.multi_reduction <add>, %515, %cst_179 [0] : vector<4x256xf32> to vector<256xf32>
    %517 = vector.shape_cast %516 : vector<256xf32> to vector<1x256xf32>
    %518 = arith.mulf %113, %173 : vector<1x256xf32>
    %519 = math.sqrt %517 : vector<1x256xf32>
    %cst_180 = arith.constant 8.500000e-01 : f32
    %520 = vector.broadcast %cst_180 : f32 to vector<1x256xf32>
    %521 = arith.mulf %520, %519 : vector<1x256xf32>
    %522 = arith.mulf %518, %521 : vector<1x256xf32>
    %523 = vector.broadcast %522 : vector<1x256xf32> to vector<4x256xf32>
    %524 = arith.mulf %523, %513 : vector<4x256xf32>
    %525 = arith.addf %469, %524 : vector<4x256xf32>
    %c236_i32 = arith.constant 236 : i32
    %526 = tpu.dynamic_rotate %1 by %c236_i32 dim 1 : vector<4x256xf32>, i32 -> vector<4x256xf32>
    %c236_i32_181 = arith.constant 236 : i32
    %527 = tpu.dynamic_rotate %3 by %c236_i32_181 dim 1 : vector<4x256xf32>, i32 -> vector<4x256xf32>
    %528 = arith.subf %1, %526 : vector<4x256xf32>
    %529 = arith.mulf %528, %528 : vector<4x256xf32>
    %cst_182 = arith.constant dense<0.000000e+00> : vector<256xf32>
    %530 = vector.multi_reduction <add>, %529, %cst_182 [0] : vector<4x256xf32> to vector<256xf32>
    %531 = vector.shape_cast %530 : vector<256xf32> to vector<1x256xf32>
    %532 = arith.mulf %113, %269 : vector<1x256xf32>
    %533 = math.sqrt %531 : vector<1x256xf32>
    %cst_183 = arith.constant 8.500000e-01 : f32
    %534 = vector.broadcast %cst_183 : f32 to vector<1x256xf32>
    %535 = arith.mulf %534, %533 : vector<1x256xf32>
    %536 = arith.mulf %532, %535 : vector<1x256xf32>
    %537 = vector.broadcast %536 : vector<1x256xf32> to vector<4x256xf32>
    %538 = arith.mulf %537, %527 : vector<4x256xf32>
    %539 = arith.addf %483, %538 : vector<4x256xf32>
    %c229_i32 = arith.constant 229 : i32
    %540 = tpu.dynamic_rotate %1 by %c229_i32 dim 1 : vector<4x256xf32>, i32 -> vector<4x256xf32>
    %c229_i32_184 = arith.constant 229 : i32
    %541 = tpu.dynamic_rotate %3 by %c229_i32_184 dim 1 : vector<4x256xf32>, i32 -> vector<4x256xf32>
    %542 = arith.subf %1, %540 : vector<4x256xf32>
    %543 = arith.mulf %542, %542 : vector<4x256xf32>
    %cst_185 = arith.constant dense<0.000000e+00> : vector<256xf32>
    %544 = vector.multi_reduction <add>, %543, %cst_185 [0] : vector<4x256xf32> to vector<256xf32>
    %545 = vector.shape_cast %544 : vector<256xf32> to vector<1x256xf32>
    %546 = arith.mulf %125, %161 : vector<1x256xf32>
    %547 = math.sqrt %545 : vector<1x256xf32>
    %cst_186 = arith.constant 7.250000e-01 : f32
    %548 = vector.broadcast %cst_186 : f32 to vector<1x256xf32>
    %549 = arith.mulf %548, %547 : vector<1x256xf32>
    %550 = arith.mulf %546, %549 : vector<1x256xf32>
    %551 = vector.broadcast %550 : vector<1x256xf32> to vector<4x256xf32>
    %552 = arith.mulf %551, %541 : vector<4x256xf32>
    %553 = arith.addf %497, %552 : vector<4x256xf32>
    %c228_i32 = arith.constant 228 : i32
    %554 = tpu.dynamic_rotate %1 by %c228_i32 dim 1 : vector<4x256xf32>, i32 -> vector<4x256xf32>
    %c228_i32_187 = arith.constant 228 : i32
    %555 = tpu.dynamic_rotate %3 by %c228_i32_187 dim 1 : vector<4x256xf32>, i32 -> vector<4x256xf32>
    %556 = arith.subf %1, %554 : vector<4x256xf32>
    %557 = arith.mulf %556, %556 : vector<4x256xf32>
    %cst_188 = arith.constant dense<0.000000e+00> : vector<256xf32>
    %558 = vector.multi_reduction <add>, %557, %cst_188 [0] : vector<4x256xf32> to vector<256xf32>
    %559 = vector.shape_cast %558 : vector<256xf32> to vector<1x256xf32>
    %560 = arith.mulf %125, %173 : vector<1x256xf32>
    %561 = math.sqrt %559 : vector<1x256xf32>
    %cst_189 = arith.constant 1.000000e+00 : f32
    %562 = vector.broadcast %cst_189 : f32 to vector<1x256xf32>
    %563 = arith.mulf %562, %561 : vector<1x256xf32>
    %564 = arith.mulf %560, %563 : vector<1x256xf32>
    %565 = vector.broadcast %564 : vector<1x256xf32> to vector<4x256xf32>
    %566 = arith.mulf %565, %555 : vector<4x256xf32>
    %567 = arith.addf %511, %566 : vector<4x256xf32>
    %c220_i32 = arith.constant 220 : i32
    %568 = tpu.dynamic_rotate %1 by %c220_i32 dim 1 : vector<4x256xf32>, i32 -> vector<4x256xf32>
    %c220_i32_190 = arith.constant 220 : i32
    %569 = tpu.dynamic_rotate %3 by %c220_i32_190 dim 1 : vector<4x256xf32>, i32 -> vector<4x256xf32>
    %570 = arith.subf %1, %568 : vector<4x256xf32>
    %571 = arith.mulf %570, %570 : vector<4x256xf32>
    %cst_191 = arith.constant dense<0.000000e+00> : vector<256xf32>
    %572 = vector.multi_reduction <add>, %571, %cst_191 [0] : vector<4x256xf32> to vector<256xf32>
    %573 = vector.shape_cast %572 : vector<256xf32> to vector<1x256xf32>
    %574 = arith.mulf %125, %269 : vector<1x256xf32>
    %575 = math.sqrt %573 : vector<1x256xf32>
    %cst_192 = arith.constant 1.000000e+00 : f32
    %576 = vector.broadcast %cst_192 : f32 to vector<1x256xf32>
    %577 = arith.mulf %576, %575 : vector<1x256xf32>
    %578 = arith.mulf %574, %577 : vector<1x256xf32>
    %579 = vector.broadcast %578 : vector<1x256xf32> to vector<4x256xf32>
    %580 = arith.mulf %579, %569 : vector<4x256xf32>
    %581 = arith.addf %525, %580 : vector<4x256xf32>
    %c213_i32 = arith.constant 213 : i32
    %582 = tpu.dynamic_rotate %1 by %c213_i32 dim 1 : vector<4x256xf32>, i32 -> vector<4x256xf32>
    %c213_i32_193 = arith.constant 213 : i32
    %583 = tpu.dynamic_rotate %3 by %c213_i32_193 dim 1 : vector<4x256xf32>, i32 -> vector<4x256xf32>
    %584 = arith.subf %1, %582 : vector<4x256xf32>
    %585 = arith.mulf %584, %584 : vector<4x256xf32>
    %cst_194 = arith.constant dense<0.000000e+00> : vector<256xf32>
    %586 = vector.multi_reduction <add>, %585, %cst_194 [0] : vector<4x256xf32> to vector<256xf32>
    %587 = vector.shape_cast %586 : vector<256xf32> to vector<1x256xf32>
    %588 = arith.mulf %137, %161 : vector<1x256xf32>
    %589 = math.sqrt %587 : vector<1x256xf32>
    %cst_195 = arith.constant 8.500000e-01 : f32
    %590 = vector.broadcast %cst_195 : f32 to vector<1x256xf32>
    %591 = arith.mulf %590, %589 : vector<1x256xf32>
    %592 = arith.mulf %588, %591 : vector<1x256xf32>
    %593 = vector.broadcast %592 : vector<1x256xf32> to vector<4x256xf32>
    %594 = arith.mulf %593, %583 : vector<4x256xf32>
    %595 = arith.addf %539, %594 : vector<4x256xf32>
    %c212_i32 = arith.constant 212 : i32
    %596 = tpu.dynamic_rotate %1 by %c212_i32 dim 1 : vector<4x256xf32>, i32 -> vector<4x256xf32>
    %c212_i32_196 = arith.constant 212 : i32
    %597 = tpu.dynamic_rotate %3 by %c212_i32_196 dim 1 : vector<4x256xf32>, i32 -> vector<4x256xf32>
    %598 = arith.subf %1, %596 : vector<4x256xf32>
    %599 = arith.mulf %598, %598 : vector<4x256xf32>
    %cst_197 = arith.constant dense<0.000000e+00> : vector<256xf32>
    %600 = vector.multi_reduction <add>, %599, %cst_197 [0] : vector<4x256xf32> to vector<256xf32>
    %601 = vector.shape_cast %600 : vector<256xf32> to vector<1x256xf32>
    %602 = arith.mulf %137, %173 : vector<1x256xf32>
    %603 = math.sqrt %601 : vector<1x256xf32>
    %cst_198 = arith.constant 1.250000e+00 : f32
    %604 = vector.broadcast %cst_198 : f32 to vector<1x256xf32>
    %605 = arith.mulf %604, %603 : vector<1x256xf32>
    %606 = arith.mulf %602, %605 : vector<1x256xf32>
    %607 = vector.broadcast %606 : vector<1x256xf32> to vector<4x256xf32>
    %608 = arith.mulf %607, %597 : vector<4x256xf32>
    %609 = arith.addf %553, %608 : vector<4x256xf32>
    %c211_i32 = arith.constant 211 : i32
    %610 = tpu.dynamic_rotate %1 by %c211_i32 dim 1 : vector<4x256xf32>, i32 -> vector<4x256xf32>
    %c211_i32_199 = arith.constant 211 : i32
    %611 = tpu.dynamic_rotate %3 by %c211_i32_199 dim 1 : vector<4x256xf32>, i32 -> vector<4x256xf32>
    %612 = arith.subf %1, %610 : vector<4x256xf32>
    %613 = arith.mulf %612, %612 : vector<4x256xf32>
    %cst_200 = arith.constant dense<0.000000e+00> : vector<256xf32>
    %614 = vector.multi_reduction <add>, %613, %cst_200 [0] : vector<4x256xf32> to vector<256xf32>
    %615 = vector.shape_cast %614 : vector<256xf32> to vector<1x256xf32>
    %616 = arith.mulf %137, %185 : vector<1x256xf32>
    %617 = math.sqrt %615 : vector<1x256xf32>
    %cst_201 = arith.constant 0.899999976 : f32
    %618 = vector.broadcast %cst_201 : f32 to vector<1x256xf32>
    %619 = arith.mulf %618, %617 : vector<1x256xf32>
    %620 = arith.mulf %616, %619 : vector<1x256xf32>
    %621 = vector.broadcast %620 : vector<1x256xf32> to vector<4x256xf32>
    %622 = arith.mulf %621, %611 : vector<4x256xf32>
    %623 = arith.addf %567, %622 : vector<4x256xf32>
    %c205_i32 = arith.constant 205 : i32
    %624 = tpu.dynamic_rotate %1 by %c205_i32 dim 1 : vector<4x256xf32>, i32 -> vector<4x256xf32>
    %c205_i32_202 = arith.constant 205 : i32
    %625 = tpu.dynamic_rotate %3 by %c205_i32_202 dim 1 : vector<4x256xf32>, i32 -> vector<4x256xf32>
    %626 = arith.subf %1, %624 : vector<4x256xf32>
    %627 = arith.mulf %626, %626 : vector<4x256xf32>
    %cst_203 = arith.constant dense<0.000000e+00> : vector<256xf32>
    %628 = vector.multi_reduction <add>, %627, %cst_203 [0] : vector<4x256xf32> to vector<256xf32>
    %629 = vector.shape_cast %628 : vector<256xf32> to vector<1x256xf32>
    %630 = arith.mulf %137, %257 : vector<1x256xf32>
    %631 = math.sqrt %629 : vector<1x256xf32>
    %cst_204 = arith.constant 0.899999976 : f32
    %632 = vector.broadcast %cst_204 : f32 to vector<1x256xf32>
    %633 = arith.mulf %632, %631 : vector<1x256xf32>
    %634 = arith.mulf %630, %633 : vector<1x256xf32>
    %635 = vector.broadcast %634 : vector<1x256xf32> to vector<4x256xf32>
    %636 = arith.mulf %635, %625 : vector<4x256xf32>
    %637 = arith.addf %581, %636 : vector<4x256xf32>
    %c204_i32 = arith.constant 204 : i32
    %638 = tpu.dynamic_rotate %1 by %c204_i32 dim 1 : vector<4x256xf32>, i32 -> vector<4x256xf32>
    %c204_i32_205 = arith.constant 204 : i32
    %639 = tpu.dynamic_rotate %3 by %c204_i32_205 dim 1 : vector<4x256xf32>, i32 -> vector<4x256xf32>
    %640 = arith.subf %1, %638 : vector<4x256xf32>
    %641 = arith.mulf %640, %640 : vector<4x256xf32>
    %cst_206 = arith.constant dense<0.000000e+00> : vector<256xf32>
    %642 = vector.multi_reduction <add>, %641, %cst_206 [0] : vector<4x256xf32> to vector<256xf32>
    %643 = vector.shape_cast %642 : vector<256xf32> to vector<1x256xf32>
    %644 = arith.mulf %137, %269 : vector<1x256xf32>
    %645 = math.sqrt %643 : vector<1x256xf32>
    %cst_207 = arith.constant 1.250000e+00 : f32
    %646 = vector.broadcast %cst_207 : f32 to vector<1x256xf32>
    %647 = arith.mulf %646, %645 : vector<1x256xf32>
    %648 = arith.mulf %644, %647 : vector<1x256xf32>
    %649 = vector.broadcast %648 : vector<1x256xf32> to vector<4x256xf32>
    %650 = arith.mulf %649, %639 : vector<4x256xf32>
    %651 = arith.addf %595, %650 : vector<4x256xf32>
    %c197_i32 = arith.constant 197 : i32
    %652 = tpu.dynamic_rotate %1 by %c197_i32 dim 1 : vector<4x256xf32>, i32 -> vector<4x256xf32>
    %c197_i32_208 = arith.constant 197 : i32
    %653 = tpu.dynamic_rotate %3 by %c197_i32_208 dim 1 : vector<4x256xf32>, i32 -> vector<4x256xf32>
    %654 = arith.subf %1, %652 : vector<4x256xf32>
    %655 = arith.mulf %654, %654 : vector<4x256xf32>
    %cst_209 = arith.constant dense<0.000000e+00> : vector<256xf32>
    %656 = vector.multi_reduction <add>, %655, %cst_209 [0] : vector<4x256xf32> to vector<256xf32>
    %657 = vector.shape_cast %656 : vector<256xf32> to vector<1x256xf32>
    %658 = arith.mulf %149, %161 : vector<1x256xf32>
    %659 = math.sqrt %657 : vector<1x256xf32>
    %cst_210 = arith.constant 1.025000e+00 : f32
    %660 = vector.broadcast %cst_210 : f32 to vector<1x256xf32>
    %661 = arith.mulf %660, %659 : vector<1x256xf32>
    %662 = arith.mulf %658, %661 : vector<1x256xf32>
    %663 = vector.broadcast %662 : vector<1x256xf32> to vector<4x256xf32>
    %664 = arith.mulf %663, %653 : vector<4x256xf32>
    %665 = arith.addf %609, %664 : vector<4x256xf32>
    %c196_i32 = arith.constant 196 : i32
    %666 = tpu.dynamic_rotate %1 by %c196_i32 dim 1 : vector<4x256xf32>, i32 -> vector<4x256xf32>
    %c196_i32_211 = arith.constant 196 : i32
    %667 = tpu.dynamic_rotate %3 by %c196_i32_211 dim 1 : vector<4x256xf32>, i32 -> vector<4x256xf32>
    %668 = arith.subf %1, %666 : vector<4x256xf32>
    %669 = arith.mulf %668, %668 : vector<4x256xf32>
    %cst_212 = arith.constant dense<0.000000e+00> : vector<256xf32>
    %670 = vector.multi_reduction <add>, %669, %cst_212 [0] : vector<4x256xf32> to vector<256xf32>
    %671 = vector.shape_cast %670 : vector<256xf32> to vector<1x256xf32>
    %672 = arith.mulf %149, %173 : vector<1x256xf32>
    %673 = math.sqrt %671 : vector<1x256xf32>
    %cst_213 = arith.constant 1.600000e+00 : f32
    %674 = vector.broadcast %cst_213 : f32 to vector<1x256xf32>
    %675 = arith.mulf %674, %673 : vector<1x256xf32>
    %676 = arith.mulf %672, %675 : vector<1x256xf32>
    %677 = vector.broadcast %676 : vector<1x256xf32> to vector<4x256xf32>
    %678 = arith.mulf %677, %667 : vector<4x256xf32>
    %679 = arith.addf %623, %678 : vector<4x256xf32>
    %c195_i32 = arith.constant 195 : i32
    %680 = tpu.dynamic_rotate %1 by %c195_i32 dim 1 : vector<4x256xf32>, i32 -> vector<4x256xf32>
    %c195_i32_214 = arith.constant 195 : i32
    %681 = tpu.dynamic_rotate %3 by %c195_i32_214 dim 1 : vector<4x256xf32>, i32 -> vector<4x256xf32>
    %682 = arith.subf %1, %680 : vector<4x256xf32>
    %683 = arith.mulf %682, %682 : vector<4x256xf32>
    %cst_215 = arith.constant dense<0.000000e+00> : vector<256xf32>
    %684 = vector.multi_reduction <add>, %683, %cst_215 [0] : vector<4x256xf32> to vector<256xf32>
    %685 = vector.shape_cast %684 : vector<256xf32> to vector<1x256xf32>
    %686 = arith.mulf %149, %185 : vector<1x256xf32>
    %687 = math.sqrt %685 : vector<1x256xf32>
    %cst_216 = arith.constant 1.250000e+00 : f32
    %688 = vector.broadcast %cst_216 : f32 to vector<1x256xf32>
    %689 = arith.mulf %688, %687 : vector<1x256xf32>
    %690 = arith.mulf %686, %689 : vector<1x256xf32>
    %691 = vector.broadcast %690 : vector<1x256xf32> to vector<4x256xf32>
    %692 = arith.mulf %691, %681 : vector<4x256xf32>
    %693 = arith.addf %637, %692 : vector<4x256xf32>
    %c194_i32 = arith.constant 194 : i32
    %694 = tpu.dynamic_rotate %1 by %c194_i32 dim 1 : vector<4x256xf32>, i32 -> vector<4x256xf32>
    %c194_i32_217 = arith.constant 194 : i32
    %695 = tpu.dynamic_rotate %3 by %c194_i32_217 dim 1 : vector<4x256xf32>, i32 -> vector<4x256xf32>
    %696 = arith.subf %1, %694 : vector<4x256xf32>
    %697 = arith.mulf %696, %696 : vector<4x256xf32>
    %cst_218 = arith.constant dense<0.000000e+00> : vector<256xf32>
    %698 = vector.multi_reduction <add>, %697, %cst_218 [0] : vector<4x256xf32> to vector<256xf32>
    %699 = vector.shape_cast %698 : vector<256xf32> to vector<1x256xf32>
    %700 = arith.mulf %149, %197 : vector<1x256xf32>
    %701 = math.sqrt %699 : vector<1x256xf32>
    %cst_219 = arith.constant 1.000000e+00 : f32
    %702 = vector.broadcast %cst_219 : f32 to vector<1x256xf32>
    %703 = arith.mulf %702, %701 : vector<1x256xf32>
    %704 = arith.mulf %700, %703 : vector<1x256xf32>
    %705 = vector.broadcast %704 : vector<1x256xf32> to vector<4x256xf32>
    %706 = arith.mulf %705, %695 : vector<4x256xf32>
    %707 = arith.addf %651, %706 : vector<4x256xf32>
    %c193_i32 = arith.constant 193 : i32
    %708 = tpu.dynamic_rotate %1 by %c193_i32 dim 1 : vector<4x256xf32>, i32 -> vector<4x256xf32>
    %c193_i32_220 = arith.constant 193 : i32
    %709 = tpu.dynamic_rotate %3 by %c193_i32_220 dim 1 : vector<4x256xf32>, i32 -> vector<4x256xf32>
    %710 = arith.subf %1, %708 : vector<4x256xf32>
    %711 = arith.mulf %710, %710 : vector<4x256xf32>
    %cst_221 = arith.constant dense<0.000000e+00> : vector<256xf32>
    %712 = vector.multi_reduction <add>, %711, %cst_221 [0] : vector<4x256xf32> to vector<256xf32>
    %713 = vector.shape_cast %712 : vector<256xf32> to vector<1x256xf32>
    %714 = arith.mulf %149, %209 : vector<1x256xf32>
    %715 = math.sqrt %713 : vector<1x256xf32>
    %cst_222 = arith.constant 8.500000e-01 : f32
    %716 = vector.broadcast %cst_222 : f32 to vector<1x256xf32>
    %717 = arith.mulf %716, %715 : vector<1x256xf32>
    %718 = arith.mulf %714, %717 : vector<1x256xf32>
    %719 = vector.broadcast %718 : vector<1x256xf32> to vector<4x256xf32>
    %720 = arith.mulf %719, %709 : vector<4x256xf32>
    %721 = arith.addf %665, %720 : vector<4x256xf32>
    %c192_i32 = arith.constant 192 : i32
    %722 = tpu.dynamic_rotate %1 by %c192_i32 dim 1 : vector<4x256xf32>, i32 -> vector<4x256xf32>
    %c192_i32_223 = arith.constant 192 : i32
    %723 = tpu.dynamic_rotate %3 by %c192_i32_223 dim 1 : vector<4x256xf32>, i32 -> vector<4x256xf32>
    %724 = arith.subf %1, %722 : vector<4x256xf32>
    %725 = arith.mulf %724, %724 : vector<4x256xf32>
    %cst_224 = arith.constant dense<0.000000e+00> : vector<256xf32>
    %726 = vector.multi_reduction <add>, %725, %cst_224 [0] : vector<4x256xf32> to vector<256xf32>
    %727 = vector.shape_cast %726 : vector<256xf32> to vector<1x256xf32>
    %728 = arith.mulf %149, %221 : vector<1x256xf32>
    %729 = math.sqrt %727 : vector<1x256xf32>
    %cst_225 = arith.constant 8.000000e-01 : f32
    %730 = vector.broadcast %cst_225 : f32 to vector<1x256xf32>
    %731 = arith.mulf %730, %729 : vector<1x256xf32>
    %732 = arith.mulf %728, %731 : vector<1x256xf32>
    %733 = vector.broadcast %732 : vector<1x256xf32> to vector<4x256xf32>
    %734 = arith.mulf %733, %723 : vector<4x256xf32>
    %735 = arith.addf %679, %734 : vector<4x256xf32>
    %c191_i32 = arith.constant 191 : i32
    %736 = tpu.dynamic_rotate %1 by %c191_i32 dim 1 : vector<4x256xf32>, i32 -> vector<4x256xf32>
    %c191_i32_226 = arith.constant 191 : i32
    %737 = tpu.dynamic_rotate %3 by %c191_i32_226 dim 1 : vector<4x256xf32>, i32 -> vector<4x256xf32>
    %738 = arith.subf %1, %736 : vector<4x256xf32>
    %739 = arith.mulf %738, %738 : vector<4x256xf32>
    %cst_227 = arith.constant dense<0.000000e+00> : vector<256xf32>
    %740 = vector.multi_reduction <add>, %739, %cst_227 [0] : vector<4x256xf32> to vector<256xf32>
    %741 = vector.shape_cast %740 : vector<256xf32> to vector<1x256xf32>
    %742 = arith.mulf %149, %233 : vector<1x256xf32>
    %743 = math.sqrt %741 : vector<1x256xf32>
    %cst_228 = arith.constant 8.500000e-01 : f32
    %744 = vector.broadcast %cst_228 : f32 to vector<1x256xf32>
    %745 = arith.mulf %744, %743 : vector<1x256xf32>
    %746 = arith.mulf %742, %745 : vector<1x256xf32>
    %747 = vector.broadcast %746 : vector<1x256xf32> to vector<4x256xf32>
    %748 = arith.mulf %747, %737 : vector<4x256xf32>
    %749 = arith.addf %693, %748 : vector<4x256xf32>
    %c190_i32 = arith.constant 190 : i32
    %750 = tpu.dynamic_rotate %1 by %c190_i32 dim 1 : vector<4x256xf32>, i32 -> vector<4x256xf32>
    %c190_i32_229 = arith.constant 190 : i32
    %751 = tpu.dynamic_rotate %3 by %c190_i32_229 dim 1 : vector<4x256xf32>, i32 -> vector<4x256xf32>
    %752 = arith.subf %1, %750 : vector<4x256xf32>
    %753 = arith.mulf %752, %752 : vector<4x256xf32>
    %cst_230 = arith.constant dense<0.000000e+00> : vector<256xf32>
    %754 = vector.multi_reduction <add>, %753, %cst_230 [0] : vector<4x256xf32> to vector<256xf32>
    %755 = vector.shape_cast %754 : vector<256xf32> to vector<1x256xf32>
    %756 = arith.mulf %149, %245 : vector<1x256xf32>
    %757 = math.sqrt %755 : vector<1x256xf32>
    %cst_231 = arith.constant 1.000000e+00 : f32
    %758 = vector.broadcast %cst_231 : f32 to vector<1x256xf32>
    %759 = arith.mulf %758, %757 : vector<1x256xf32>
    %760 = arith.mulf %756, %759 : vector<1x256xf32>
    %761 = vector.broadcast %760 : vector<1x256xf32> to vector<4x256xf32>
    %762 = arith.mulf %761, %751 : vector<4x256xf32>
    %763 = arith.addf %707, %762 : vector<4x256xf32>
    %c189_i32 = arith.constant 189 : i32
    %764 = tpu.dynamic_rotate %1 by %c189_i32 dim 1 : vector<4x256xf32>, i32 -> vector<4x256xf32>
    %c189_i32_232 = arith.constant 189 : i32
    %765 = tpu.dynamic_rotate %3 by %c189_i32_232 dim 1 : vector<4x256xf32>, i32 -> vector<4x256xf32>
    %766 = arith.subf %1, %764 : vector<4x256xf32>
    %767 = arith.mulf %766, %766 : vector<4x256xf32>
    %cst_233 = arith.constant dense<0.000000e+00> : vector<256xf32>
    %768 = vector.multi_reduction <add>, %767, %cst_233 [0] : vector<4x256xf32> to vector<256xf32>
    %769 = vector.shape_cast %768 : vector<256xf32> to vector<1x256xf32>
    %770 = arith.mulf %149, %257 : vector<1x256xf32>
    %771 = math.sqrt %769 : vector<1x256xf32>
    %cst_234 = arith.constant 1.250000e+00 : f32
    %772 = vector.broadcast %cst_234 : f32 to vector<1x256xf32>
    %773 = arith.mulf %772, %771 : vector<1x256xf32>
    %774 = arith.mulf %770, %773 : vector<1x256xf32>
    %775 = vector.broadcast %774 : vector<1x256xf32> to vector<4x256xf32>
    %776 = arith.mulf %775, %765 : vector<4x256xf32>
    %777 = arith.addf %721, %776 : vector<4x256xf32>
    %c188_i32 = arith.constant 188 : i32
    %778 = tpu.dynamic_rotate %1 by %c188_i32 dim 1 : vector<4x256xf32>, i32 -> vector<4x256xf32>
    %c188_i32_235 = arith.constant 188 : i32
    %779 = tpu.dynamic_rotate %3 by %c188_i32_235 dim 1 : vector<4x256xf32>, i32 -> vector<4x256xf32>
    %780 = arith.subf %1, %778 : vector<4x256xf32>
    %781 = arith.mulf %780, %780 : vector<4x256xf32>
    %cst_236 = arith.constant dense<0.000000e+00> : vector<256xf32>
    %782 = vector.multi_reduction <add>, %781, %cst_236 [0] : vector<4x256xf32> to vector<256xf32>
    %783 = vector.shape_cast %782 : vector<256xf32> to vector<1x256xf32>
    %784 = arith.mulf %149, %269 : vector<1x256xf32>
    %785 = math.sqrt %783 : vector<1x256xf32>
    %cst_237 = arith.constant 1.600000e+00 : f32
    %786 = vector.broadcast %cst_237 : f32 to vector<1x256xf32>
    %787 = arith.mulf %786, %785 : vector<1x256xf32>
    %788 = arith.mulf %784, %787 : vector<1x256xf32>
    %789 = vector.broadcast %788 : vector<1x256xf32> to vector<4x256xf32>
    %790 = arith.mulf %789, %779 : vector<4x256xf32>
    %791 = arith.addf %735, %790 : vector<4x256xf32>
    %792 = arith.addf %791, %749 : vector<4x256xf32>
    %793 = arith.addf %792, %763 : vector<4x256xf32>
    %794 = arith.addf %793, %777 : vector<4x256xf32>
    %795 = arith.mulf %3, %794 : vector<4x256xf32>
    %cst_238 = arith.constant dense<0.000000e+00> : vector<4xf32>
    %796 = vector.multi_reduction <add>, %795, %cst_238 [1] : vector<4x256xf32> to vector<4xf32>
    %797 = vector.shape_cast %796 : vector<4xf32> to vector<4x1xf32>
    %798 = arith.divf %797, %27 : vector<4x1xf32>
    %799 = vector.shape_cast %798 : vector<4x1xf32> to vector<1x4x1xf32>
    %cst_239 = arith.constant dense<0.000000e+00> : vector<1xf32>
    %800 = vector.multi_reduction <add>, %799, %cst_239 [1, 2] : vector<1x4x1xf32> to vector<1xf32>
    %801 = vector.shape_cast %800 : vector<1xf32> to vector<1x1x1xf32>
    %802 = vector.extract %801[0, 0, 0] : f32 from vector<1x1x1xf32>
    %cst_240 = arith.constant 4.000000e+00 : f32
    %803 = arith.subf %cst_240, %802 : f32
    %804 = vector.broadcast %803 : f32 to vector<1x1x1xf32>
    %c0_241 = arith.constant 0 : index
    %c0_242 = arith.constant 0 : index
    %c0_243 = arith.constant 0 : index
    %805 = vector.load %arg4[%c0_241, %c0_242, %c0_243] : memref<1x1x1xf32, #tpu.memory_space<vmem>>, vector<1x1x1xf32>
    tpu.vector_store %arg4[%c0_241, %c0_242, %c0_243], %804 {strides = array<i32>} : memref<1x1x1xf32, #tpu.memory_space<vmem>>, vector<1x1x1xf32>,
    return
  }
  func.func @transform_0(%arg0: i32) -> (i32, i32) {
    %c0_i32 = arith.constant 0 : i32
    %c0_i32_0 = arith.constant 0 : i32
    %c0_i32_1 = arith.constant 0 : i32
    return %c0_i32, %c0_i32_0 : i32, i32
  }
  func.func @transform_1(%arg0: i32) -> (i32, i32, i32) {
    %c0_i32 = arith.constant 0 : i32
    %c0_i32_0 = arith.constant 0 : i32
    %c0_i32_1 = arith.constant 0 : i32
    return %arg0, %c0_i32, %c0_i32_0 : i32, i32, i32
  }
  func.func @transform_2(%arg0: i32) -> (i32, i32, i32) {
    %c0_i32 = arith.constant 0 : i32
    %c0_i32_0 = arith.constant 0 : i32
    %c0_i32_1 = arith.constant 0 : i32
    return %arg0, %c0_i32, %c0_i32_0 : i32, i32, i32
  }
  func.func @transform_3(%arg0: i32) -> (i32, i32, i32) {
    %c0_i32 = arith.constant 0 : i32
    %c0_i32_0 = arith.constant 0 : i32
    %c0_i32_1 = arith.constant 0 : i32
    return %arg0, %c0_i32, %c0_i32_0 : i32, i32, i32
  }
}

</mosaic_0001>

<llo_original>
// kernel: tpu_custom_call.1
$region0: #{tpu_custom_call.1}
  #allocation0 [shape = 'u32[]', space=smem, size = 0x4, offset = 0x4, fixed_abs, tag = 'smem constant byte address 0x4 - core index']
  #allocation1 [shape = 'u32[144,128]{1,0:T(1,128)}', space=vmem, size = 0x12000, scoped, tag = 'internal scratch']
  %s0 = inlined_call_operand.hbm [shape: s32[2,256], index: 0, kind: input, shape index: {}]
  %s1 = inlined_call_operand.hbm [shape: f32[2,4,256], index: 1, kind: input, shape index: {}]
  %s2 = inlined_call_operand.hbm [shape: f32[2,4,256], index: 2, kind: input, shape index: {}]
  %s3 = inlined_call_operand.vmem [shape: f32[2,1,1], index: 3, kind: output, shape index: {}]
  %s4 = sld [smem:[#allocation0]]
  $region57: #{tpu_custom_call.1} parent=0
    _
  %s6 = ssub.s32 1, %s4
  %s7 = scalar_select 0, %s6, %s4
  $region1: #{tpu_custom_call.1} parent=0
    #allocation2 [shape = 'u8[2048]{0}', space=vmem, size = 0x800, scoped, tag = 'input window, operand 0, single buffered']
    #allocation3 [shape = 's32[2]{0}', space=sflag, size = 0x8, scoped, tag = 'scoped memory for tpu_custom_call.1']
    #allocation4 [shape = 'u8[8192]{0}', space=vmem, size = 0x2000, scoped, tag = 'input window, operand 1']
    #allocation5 [shape = 's32[2]{0}', space=sflag, size = 0x8, scoped, tag = 'scoped memory for tpu_custom_call.1']
    #allocation6 [shape = 'u8[8192]{0}', space=vmem, size = 0x2000, scoped, tag = 'input window, operand 2']
    %8 = vsyncpa [#allocation3], 0
    %9 = vsyncpa [#allocation5], 0
    %s10 = scalar_lea.sflag [#allocation5], 1
    %11 = vsyncpa %s10, 0
    loop: start=0, step=1, limit=4
    $region2: #{tpu_custom_call.1} parent=1 // loop_pre_header
      _
    $region3: #{tpu_custom_call.1} parent=1 // loop_header
      %s13 = sphi 0, %s17
      %p14 = scmp.ge.s32.totalorder %s13, 4
      %s21 = sphi 0, %s21
      %s23 = sphi 0, %s21
      %s24 = sphi 0, %s23
      %s38 = sphi 0, %s24
      %s44 = sphi 0, %s46
      %s47 = sphi 0, %s44
      %s48 = sphi 0, %s47
      %s64 = sphi 0, %s48
      %s70 = sphi 0, %s72
      %s73 = sphi 0, %s70
      %s74 = sphi 0, %s73
      %s90 = sphi 0, %s74
      %s96 = sphi 0, %s98
      %s99 = sphi 0, %s96
      %s100 = sphi 0, %s99
      %s116 = sphi 0, %s100
    $region4: #{tpu_custom_call.1} parent=1 // loop_header_branch
      %16 = sbr.rel (%p14) target = $region8
    $region5: #{tpu_custom_call.1} parent=1 // loop_body
      %s18 = ssub.s32 %s13, 1
      %s19 = ssub.s32 %s13, 2
      %s20 = sadd.s32 %s13, 1
      %s22 = sadd.s32 %s21, 1
      %p25 = scmp.eq.s32.totalorder %s13, 1
      %p26 = scmp.ne.s32.totalorder %s21, %s23
      %p27 = scmp.eq.s32.totalorder %s13, 0
      %p28 = por %p26, %p27
      %p29 = scmp.ne.s32.totalorder %s21, %s23
      %p30 = scmp.eq.s32.totalorder %s18, 1
      %p31 = por %p29, %p30
      %p32 = scmp.ne.s32.totalorder %s23, %s24
      %p33 = scmp.eq.s32.totalorder %s18, 0
      %p34 = por %p32, %p33
      %p35 = scmp.ne.s32.totalorder %s23, %s24
      %p36 = scmp.eq.s32.totalorder %s19, 1
      %p37 = por %p35, %p36
      %p39 = scmp.ne.s32.totalorder %s24, %s38
      %p40 = scmp.eq.s32.totalorder %s19, 0
      %p41 = por %p39, %p40
      %s42 = ssub.s32 %s13, %s20
      %p43 = scmp.eq.s32.totalorder %s42, 0
      %s45 = sadd.s32 %s44, 1
      %s46 = scalar_select %p43, %s44, %s45
      %p49 = pneg %p43
      %p50 = scmp.eq.s32.totalorder %s13, 1
      %p51 = por %p49, %p50
      %p52 = scmp.ne.s32.totalorder %s44, %s47
      %p53 = scmp.eq.s32.totalorder %s13, 0
      %p54 = por %p52, %p53
      %p55 = scmp.ne.s32.totalorder %s44, %s47
      %p56 = scmp.eq.s32.totalorder %s18, 1
      %p57 = por %p55, %p56
      %p58 = scmp.ne.s32.totalorder %s47, %s48
      %p59 = scmp.eq.s32.totalorder %s18, 0
      %p60 = por %p58, %p59
      %p61 = scmp.ne.s32.totalorder %s47, %s48
      %p62 = scmp.eq.s32.totalorder %s19, 1
      %p63 = por %p61, %p62
      %p65 = scmp.ne.s32.totalorder %s48, %s64
      %p66 = scmp.eq.s32.totalorder %s19, 0
      %p67 = por %p65, %p66
      %s68 = ssub.s32 %s13, %s20
      %p69 = scmp.eq.s32.totalorder %s68, 0
      %s71 = sadd.s32 %s70, 1
      %s72 = scalar_select %p69, %s70, %s71
      %p75 = pneg %p69
      %p76 = scmp.eq.s32.totalorder %s13, 1
      %p77 = por %p75, %p76
      %p78 = scmp.ne.s32.totalorder %s70, %s73
      %p79 = scmp.eq.s32.totalorder %s13, 0
      %p80 = por %p78, %p79
      %p81 = scmp.ne.s32.totalorder %s70, %s73
      %p82 = scmp.eq.s32.totalorder %s18, 1
      %p83 = por %p81, %p82
      %p84 = scmp.ne.s32.totalorder %s73, %s74
      %p85 = scmp.eq.s32.totalorder %s18, 0
      %p86 = por %p84, %p85
      %p87 = scmp.ne.s32.totalorder %s73, %s74
      %p88 = scmp.eq.s32.totalorder %s19, 1
      %p89 = por %p87, %p88
      %p91 = scmp.ne.s32.totalorder %s74, %s90
      %p92 = scmp.eq.s32.totalorder %s19, 0
      %p93 = por %p91, %p92
      %s94 = ssub.s32 %s13, %s20
      %p95 = scmp.eq.s32.totalorder %s94, 0
      %s97 = sadd.s32 %s96, 1
      %s98 = scalar_select %p95, %s96, %s97
      %p101 = pneg %p95
      %p102 = scmp.eq.s32.totalorder %s13, 1
      %p103 = por %p101, %p102
      %p104 = scmp.ne.s32.totalorder %s96, %s99
      %p105 = scmp.eq.s32.totalorder %s13, 0
      %p106 = por %p104, %p105
      %p107 = scmp.ne.s32.totalorder %s96, %s99
      %p108 = scmp.eq.s32.totalorder %s18, 1
      %p109 = por %p107, %p108
      %p110 = scmp.ne.s32.totalorder %s99, %s100
      %p111 = scmp.eq.s32.totalorder %s18, 0
      %p112 = por %p110, %p111
      %p113 = scmp.ne.s32.totalorder %s99, %s100
      %p114 = scmp.eq.s32.totalorder %s19, 1
      %p115 = por %p113, %p114
      %p117 = scmp.ne.s32.totalorder %s100, %s116
      %p118 = scmp.eq.s32.totalorder %s19, 0
      %p119 = por %p117, %p118
      %p120 = scmp.le.s32.totalorder 1, %s13
      %p121 = scmp.lt.s32.totalorder %s13, 3
      %p122 = pnand %p120, %p121
      %p123 = pneg %p122
      // Predicated region
      $region9: #{tpu_custom_call.1} parent=5 // pred_check
        _
      $region10: #{tpu_custom_call.1} parent=5 // pred_check_branch
        %125 = sbr.rel (%p122) target = $region12
      $region11: #{tpu_custom_call.1} parent=5 // pred_region
        %s126 = ssub.s32 %s13, 1
        // Predicated region
        $region13: #{tpu_custom_call.1} parent=11 // pred_check
          %p127 = pneg %p34
        $region14: #{tpu_custom_call.1} parent=11 // pred_check_branch
          %129 = sbr.rel (%p127) target = $region16
        $region15: #{tpu_custom_call.1} parent=11 // pred_region
          %s131 = ssub.s32 64, 64
          %132 = vsyncadd [#allocation3], %s131
          %s134 = sshll.u32 [#allocation2], 4
          %s135 = int_to_ptr.vmem [resolvable:$true] %s134
          %137 = dma.hbm_to_vmem [thread:$0]  %s0, 64, %s135, [#allocation3]
        $region16: #{tpu_custom_call.1} parent=11 // pred_fallthru
          _
      $region12: #{tpu_custom_call.1} parent=5 // pred_fallthru
        _
      %p138 = scmp.lt.s32.totalorder %s13, 2
      // Predicated region
      $region17: #{tpu_custom_call.1} parent=5 // pred_check
        %p139 = pneg %p138
      $region18: #{tpu_custom_call.1} parent=5 // pred_check_branch
        %141 = sbr.rel (%p139) target = $region20
      $region19: #{tpu_custom_call.1} parent=5 // pred_region
        // Predicated region
        $region21: #{tpu_custom_call.1} parent=19 // pred_check
          %p142 = pneg %p54
        $region22: #{tpu_custom_call.1} parent=19 // pred_check_branch
          %144 = sbr.rel (%p142) target = $region24
        $region23: #{tpu_custom_call.1} parent=19 // pred_region
          %s145 = sand.u32 %s13, 1
          %s146 = scalar_lea.sflag [#allocation5], %s145
          %s147 = sand.u32 %s44, 1
          %s148 = smul.addr %s147, 8
          %s149 = scalar_lea.vmem [#allocation4], %s148
          %s151 = ssub.s32 128, 128
          %152 = vsyncadd %s146, %s151
          %s153 = smul.addr %s13, 2
          %s154 = smul.addr %s153, 64
          %s155 = scalar_lea.hbm %s1, %s154
          %s157 = sshll.u32 %s149, 4
          %s158 = int_to_ptr.vmem [resolvable:$true] %s157
          %160 = dma.hbm_to_vmem [thread:$0]  %s155, 128, %s158, %s146
        $region24: #{tpu_custom_call.1} parent=19 // pred_fallthru
          _
        // Predicated region
        $region25: #{tpu_custom_call.1} parent=19 // pred_check
          %p161 = pneg %p80
        $region26: #{tpu_custom_call.1} parent=19 // pred_check_branch
          %163 = sbr.rel (%p161) target = $region28
        $region27: #{tpu_custom_call.1} parent=19 // pred_region
          %s164 = sand.u32 %s13, 1
          %s165 = scalar_lea.sflag [#allocation5], %s164
          %s166 = sand.u32 %s70, 1
          %s167 = smul.addr %s166, 8
          %s168 = scalar_lea.vmem [#allocation6], %s167
          %s170 = ssub.s32 128, 128
          %171 = vsyncadd %s165, %s170
          %s172 = smul.addr %s13, 2
          %s173 = smul.addr %s172, 64
          %s174 = scalar_lea.hbm %s2, %s173
          %s176 = sshll.u32 %s168, 4
          %s177 = int_to_ptr.vmem [resolvable:$true] %s176
          %179 = dma.hbm_to_vmem [thread:$0]  %s174, 128, %s177, %s165
        $region28: #{tpu_custom_call.1} parent=19 // pred_fallthru
          _
      $region20: #{tpu_custom_call.1} parent=5 // pred_fallthru
        _
      %p180 = scmp.le.s32.totalorder 1, %s13
      %p181 = scmp.lt.s32.totalorder %s13, 3
      %p182 = pnand %p180, %p181
      %p183 = pneg %p182
      // Predicated region
      $region29: #{tpu_custom_call.1} parent=5 // pred_check
        _
      $region30: #{tpu_custom_call.1} parent=5 // pred_check_branch
        %185 = sbr.rel (%p182) target = $region32
      $region31: #{tpu_custom_call.1} parent=5 // pred_region
        %s186 = ssub.s32 %s13, 1
        // Predicated region
        $region33: #{tpu_custom_call.1} parent=31 // pred_check
          %p187 = pneg %p34
        $region34: #{tpu_custom_call.1} parent=31 // pred_check_branch
          %189 = sbr.rel (%p187) target = $region36
        $region35: #{tpu_custom_call.1} parent=31 // pred_region
          %190 = dma.done [#allocation3], 64
        $region36: #{tpu_custom_call.1} parent=31 // pred_fallthru
          _
        %s191 = sand.u32 %s18, 1
        %s192 = scalar_lea.sflag [#allocation5], %s191
        %s193 = sand.u32 %s47, 1
        %s194 = smul.addr %s193, 8
        %s195 = scalar_lea.vmem [#allocation4], %s194
        // Predicated region
        $region37: #{tpu_custom_call.1} parent=31 // pred_check
          %p196 = pneg %p60
        $region38: #{tpu_custom_call.1} parent=31 // pred_check_branch
          %198 = sbr.rel (%p196) target = $region40
        $region39: #{tpu_custom_call.1} parent=31 // pred_region
          %199 = dma.done %s192, 128
        $region40: #{tpu_custom_call.1} parent=31 // pred_fallthru
          _
        %s200 = sand.u32 %s18, 1
        %s201 = scalar_lea.sflag [#allocation5], %s200
        %s202 = sand.u32 %s73, 1
        %s203 = smul.addr %s202, 8
        %s204 = scalar_lea.vmem [#allocation6], %s203
        // Predicated region
        $region41: #{tpu_custom_call.1} parent=31 // pred_check
          %p205 = pneg %p86
        $region42: #{tpu_custom_call.1} parent=31 // pred_check_branch
          %207 = sbr.rel (%p205) target = $region44
        $region43: #{tpu_custom_call.1} parent=31 // pred_region
          %208 = dma.done %s201, 128
        $region44: #{tpu_custom_call.1} parent=31 // pred_fallthru
          _
        %p209 = pneg %p34
        %p210 = pneg %p31
        %s211 = sand.u32 %s18, 1
        %s212 = scalar_lea.sflag [#allocation5], %s211
        %s213 = sand.u32 %s47, 1
        %s214 = smul.addr %s213, 8
        %s215 = scalar_lea.vmem [#allocation4], %s214
        %p216 = pneg %p60
        %p217 = pneg %p57
        %s218 = sand.u32 %s18, 1
        %s219 = scalar_lea.sflag [#allocation5], %s218
        %s220 = sand.u32 %s73, 1
        %s221 = smul.addr %s220, 8
        %s222 = scalar_lea.vmem [#allocation6], %s221
        %p223 = pneg %p86
        %p224 = pneg %p83
        %p225 = pneg %p112
        %p226 = pneg %p109
        %p227 = scmp.lt.s32.totalorder %s18, 1
        %s228 = scalar_select %p227, %s18, 1
        %s229 = scalar_lea.vmem %s3, %s228
        %p230 = scmp.lt.s32.totalorder %s18, 1
        %s231 = scalar_select %p230, %s18, 1
        %s232 = scalar_lea.vmem %s3, %s231
        %v233 = vld [vmem:[%s195] sm:$0xff]
        %v234 = vld [vmem:[%s204] sm:$0xff]
        %v235 = vmul.f32 %v233, %v233
        %v237 = vcombine.high %v235, %v235
        %vm239 = vcmask 1043456
        %v240 = vsel %vm239, %v235, 0.0
        %v241 = vrot.slane %v240, 4
        %v242 = vadd.f32 %v240, %v241
        %v243 = vrot.slane %v242, 2
        %v244 = vadd.f32 %v242, %v243
        %v245 = vrot.slane %v244, 1
        %v246 = vadd.f32 %v244, %v245
        %v247 = vsel %vm239, %v237, 0.0
        %v248 = vrot.slane %v247, 4
        %v249 = vadd.f32 %v247, %v248
        %v250 = vrot.slane %v249, 2
        %v251 = vadd.f32 %v249, %v250
        %v252 = vrot.slane %v251, 1
        %v253 = vadd.f32 %v251, %v252
        %vm254 = vcmask 1040384
        %v255 = vsel %vm254, %v246, 0.0
        %v256 = vsel %vm254, %v253, 0.0
        %v257 = vadd.f32 %v255, %v256
        %258 = vadd.xlane.f32.xlu0 %v257
        %v259 = vpop.xlane.xlu0 %258
        %v260 = vrot.slane %v259, 4
        %v261 = vadd.f32 %v259, %v260
        %v262 = vrot.slane %v261, 2
        %v263 = vadd.f32 %v261, %v262
        %v264 = vrot.slane %v263, 1
        %v265 = vadd.f32 %v263, %v264
        %s266 = vtos %v265
        %v268 = vcombine.high %v233, %v233
        %v270 = vsel %vm239, %v233, 0.0
        %v271 = vsel %vm239, %v268, 0.0
        %v272 = vadd.f32 %v270, %v271
        %273 = vadd.xlane.f32.xlu0 %v272
        %v274 = vpop.xlane.xlu0 %273
        %v277 = vunpack.c.l.s4 839922192
        %v278 = vunpack.c.0.s8 %v277
        %v279 = vlaneseq
        %v280 = vshrl.u32 %v279, 7
        %v281 = vsub.s32 %v278, %v280
        %v282 = vrot.slane %v274, %v281
        %v284 = vmul.f32 %v233, %v282
        %v286 = vcombine.high %v284, %v284
        %v288 = vsel %vm239, %v284, 0.0
        %v289 = vrot.slane %v288, 4
        %v290 = vadd.f32 %v288, %v289
        %v291 = vrot.slane %v290, 2
        %v292 = vadd.f32 %v290, %v291
        %v293 = vrot.slane %v292, 1
        %v294 = vadd.f32 %v292, %v293
        %v295 = vsel %vm239, %v286, 0.0
        %v296 = vrot.slane %v295, 4
        %v297 = vadd.f32 %v295, %v296
        %v298 = vrot.slane %v297, 2
        %v299 = vadd.f32 %v297, %v298
        %v300 = vrot.slane %v299, 1
        %v301 = vadd.f32 %v299, %v300
        %v302 = vmul.f32 %v246, 256.0
        %v303 = vmul.f32 %v253, 256.0
        %v304 = vstv %s266
        %v305 = vadd.f32 %v302, %v304
        %v306 = vadd.f32 %v303, %v304
        %v307 = vmul.f32 %v294, 2.0
        %v308 = vmul.f32 %v301, 2.0
        %v309 = vsub.f32 %v305, %v307
        %v310 = vsub.f32 %v306, %v308
        %v313 = vcombine.low %v309, %v310
        %v315 = vmul.f32 %v234, %v313
        %v317 = vcombine.high %v315, %v315
        %v319 = vsel %vm239, %v315, 0.0
        %v320 = vsel %vm239, %v317, 0.0
        %v321 = vadd.f32 %v319, %v320
        %322 = vadd.xlane.f32.xlu0 %v321
        %v323 = vpop.xlane.xlu0 %322
        %v324 = vld [vmem:[#allocation2] ss:$2 sm:$0x3]
        %s325 = scalar_lea.vmem [#allocation2], 1
        %v326 = vld [vmem:[%s325] ss:$2 sm:$0x3]
        %v327 = vadd.s32 %v324, 4294967291
        %vm328 = vcmp.ge.s32.totalorder %v327, 0
        %vm329 = vcmp.lt.s32.totalorder %v327, 16
        %vm330 = vmand %vm328, %vm329
        %v331 = vsel %vm330, 1.0, 0.0
        %v332 = vadd.s32 %v324, 4294967292
        %vm333 = vcmp.ge.s32.totalorder %v332, 0
        %vm334 = vcmp.lt.s32.totalorder %v332, 16
        %vm335 = vmand %vm333, %vm334
        %v336 = vsel %vm335, 1.0, 0.0
        %v337 = vadd.s32 %v324, 4294967293
        %vm338 = vcmp.ge.s32.totalorder %v337, 0
        %vm339 = vcmp.lt.s32.totalorder %v337, 16
        %vm340 = vmand %vm338, %vm339
        %v341 = vsel %vm340, 1.0, 0.0
        %v342 = vadd.s32 %v324, 4294967294
        %vm343 = vcmp.ge.s32.totalorder %v342, 0
        %vm344 = vcmp.lt.s32.totalorder %v342, 16
        %vm345 = vmand %vm343, %vm344
        %v346 = vsel %vm345, 1.0, 0.0
        %v347 = vadd.s32 %v324, 4294967295
        %vm348 = vcmp.ge.s32.totalorder %v347, 0
        %vm349 = vcmp.lt.s32.totalorder %v347, 16
        %vm350 = vmand %vm348, %vm349
        %v351 = vsel %vm350, 1.0, 0.0
        %vm352 = vcmp.ge.s32.totalorder %v324, 0
        %vm353 = vcmp.lt.s32.totalorder %v324, 16
        %vm354 = vmand %vm352, %vm353
        %v355 = vsel %vm354, 1.0, 0.0
        %v356 = vadd.s32 %v324, 1
        %vm357 = vcmp.ge.s32.totalorder %v356, 0
        %vm358 = vcmp.lt.s32.totalorder %v356, 16
        %vm359 = vmand %vm357, %vm358
        %v360 = vsel %vm359, 1.0, 0.0
        %v361 = vadd.s32 %v324, 2
        %vm362 = vcmp.ge.s32.totalorder %v361, 0
        %vm363 = vcmp.lt.s32.totalorder %v361, 16
        %vm364 = vmand %vm362, %vm363
        %v365 = vsel %vm364, 1.0, 0.0
        %v366 = vadd.s32 %v324, 3
        %vm367 = vcmp.ge.s32.totalorder %v366, 0
        %vm368 = vcmp.lt.s32.totalorder %v366, 16
        %vm369 = vmand %vm367, %vm368
        %v370 = vsel %vm369, 1.0, 0.0
        %v371 = vadd.s32 %v324, 4
        %vm372 = vcmp.ge.s32.totalorder %v371, 0
        %vm373 = vcmp.lt.s32.totalorder %v371, 16
        %vm374 = vmand %vm372, %vm373
        %v375 = vsel %vm374, 1.0, 0.0
        %v376 = vadd.s32 %v326, 4294967291
        %vm377 = vcmp.ge.s32.totalorder %v376, 0
        %vm378 = vcmp.lt.s32.totalorder %v376, 16
        %vm379 = vmand %vm377, %vm378
        %v380 = vsel %vm379, 1.0, 0.0
        %v381 = vadd.s32 %v326, 4294967292
        %vm382 = vcmp.ge.s32.totalorder %v381, 0
        %vm383 = vcmp.lt.s32.totalorder %v381, 16
        %vm384 = vmand %vm382, %vm383
        %v385 = vsel %vm384, 1.0, 0.0
        %v386 = vadd.s32 %v326, 4294967293
        %vm387 = vcmp.ge.s32.totalorder %v386, 0
        %vm388 = vcmp.lt.s32.totalorder %v386, 16
        %vm389 = vmand %vm387, %vm388
        %v390 = vsel %vm389, 1.0, 0.0
        %v391 = vadd.s32 %v326, 4294967294
        %vm392 = vcmp.ge.s32.totalorder %v391, 0
        %vm393 = vcmp.lt.s32.totalorder %v391, 16
        %vm394 = vmand %vm392, %vm393
        %v395 = vsel %vm394, 1.0, 0.0
        %v396 = vadd.s32 %v326, 4294967295
        %vm397 = vcmp.ge.s32.totalorder %v396, 0
        %vm398 = vcmp.lt.s32.totalorder %v396, 16
        %vm399 = vmand %vm397, %vm398
        %v400 = vsel %vm399, 1.0, 0.0
        %vm401 = vcmp.ge.s32.totalorder %v326, 0
        %vm402 = vcmp.lt.s32.totalorder %v326, 16
        %vm403 = vmand %vm401, %vm402
        %v404 = vsel %vm403, 1.0, 0.0
        %v405 = vadd.s32 %v326, 1
        %vm406 = vcmp.ge.s32.totalorder %v405, 0
        %vm407 = vcmp.lt.s32.totalorder %v405, 16
        %vm408 = vmand %vm406, %vm407
        %v409 = vsel %vm408, 1.0, 0.0
        %v410 = vadd.s32 %v326, 2
        %vm411 = vcmp.ge.s32.totalorder %v410, 0
        %vm412 = vcmp.lt.s32.totalorder %v410, 16
        %vm413 = vmand %vm411, %vm412
        %v414 = vsel %vm413, 1.0, 0.0
        %v415 = vadd.s32 %v326, 3
        %vm416 = vcmp.ge.s32.totalorder %v415, 0
        %vm417 = vcmp.lt.s32.totalorder %v415, 16
        %vm418 = vmand %vm416, %vm417
        %v419 = vsel %vm418, 1.0, 0.0
        %v420 = vadd.s32 %v326, 4
        %vm421 = vcmp.ge.s32.totalorder %v420, 0
        %vm422 = vcmp.lt.s32.totalorder %v420, 16
        %vm423 = vmand %vm421, %vm422
        %v424 = vsel %vm423, 1.0, 0.0
        %425 = vrot.lane.b32.xlu0 %v233, 85
        %v426 = vpop.permute.xlu0 %425
        %427 = vrot.lane.b32.xlu0 %v268, 85
        %v428 = vpop.permute.xlu0 %427
        %v429 = vlaneseq
        %v430 = vand.u32 %v429, 127
        %vm431 = vcmp.lt.s32.totalorder %v430, 85
        %v432 = vsel %vm431, %v426, %v428
        %v433 = vsel %vm431, %v428, %v426
        %v435 = vcombine.high %v234, %v234
        %437 = vrot.lane.b32.xlu0 %v234, 85
        %v438 = vpop.permute.xlu0 %437
        %439 = vrot.lane.b32.xlu0 %v435, 85
        %v440 = vpop.permute.xlu0 %439
        %v441 = vsel %vm431, %v438, %v440
        %v442 = vsel %vm431, %v440, %v438
        %v445 = vcombine.low %v433, %v432
        %v447 = vsub.f32 %v233, %v445
        %v448 = vmul.f32 %v447, %v447
        %v450 = vcombine.high %v448, %v448
        %v452 = vsel %vm239, %v448, 0.0
        %v453 = vrot.slane %v452, 4
        %v454 = vadd.f32 %v452, %v453
        %v455 = vrot.slane %v454, 2
        %v456 = vadd.f32 %v454, %v455
        %v457 = vrot.slane %v456, 1
        %v458 = vadd.f32 %v456, %v457
        %v459 = vsel %vm239, %v450, 0.0
        %v460 = vrot.slane %v459, 4
        %v461 = vadd.f32 %v459, %v460
        %v462 = vrot.slane %v461, 2
        %v463 = vadd.f32 %v461, %v462
        %v464 = vrot.slane %v463, 1
        %v465 = vadd.f32 %v463, %v464
        %v466 = vmul.f32 %v331, %v380
        %v467 = vrsqrt.pop %v458
        %v468 = vmul.f32 %v458, %v467
        %vm469 = vcmp.eq.f32.partialorder %v458, inf
        %v470 = vsel %vm469, %v458, %v468
        %vm471 = vcmp.eq.f32.partialorder %v458, 0.0
        %v472 = vand.u32 %v458, 2147483648
        %v473 = vsel %vm471, %v472, %v470
        %v474 = vrsqrt.pop %v465
        %v475 = vmul.f32 %v465, %v474
        %vm476 = vcmp.eq.f32.partialorder %v465, inf
        %v477 = vsel %vm476, %v465, %v475
        %vm478 = vcmp.eq.f32.partialorder %v465, 0.0
        %v479 = vand.u32 %v465, 2147483648
        %v480 = vsel %vm478, %v479, %v477
        %v481 = vmul.f32 %v473, 1.25
        %v482 = vmul.f32 %v480, 1.25
        %v485 = vcombine.low %v481, %v482
        %v487 = vunpack.c.l.s4 1966171168
        %v488 = vunpack.c.0.s8 %v487
        %v489 = vlaneseq
        %v490 = vshrl.u32 %v489, 7
        %v491 = vsub.s32 %v488, %v490
        %v492 = vrot.slane %v485, %v491
        %v494 = vunpack.c.l.s4 1966171168
        %v495 = vunpack.c.0.s8 %v494
        %v496 = vlaneseq
        %v497 = vshrl.u32 %v496, 7
        %v498 = vsub.s32 %v495, %v497
        %v499 = vrot.slane %v492, %v498
        %v501 = vmul.f32 %v466, %v499
        %v503 = vlaneseq
        %v504 = vshrl.u32 %v503, 7
        %v505 = vsub.s32 0, %v504
        %v506 = vrot.slane %v501, %v505
        %v507 = vlaneseq
        %v508 = vshrl.u32 %v507, 7
        %v509 = vsub.s32 1, %v508
        %v510 = vrot.slane %v501, %v509
        %v513 = vmul.f32 %v506, %v442
        %v514 = vmul.f32 %v510, %v441
        %v515 = vadd.f32 %v513, 0.0
        %v516 = vadd.f32 %v514, 0.0
        %517 = vrot.lane.b32.xlu0 %v233, 84
        %v518 = vpop.permute.xlu0 %517
        %519 = vrot.lane.b32.xlu0 %v268, 84
        %v520 = vpop.permute.xlu0 %519
        %vm521 = vcmp.lt.s32.totalorder %v430, 84
        %v522 = vsel %vm521, %v518, %v520
        %v523 = vsel %vm521, %v520, %v518
        %524 = vrot.lane.b32.xlu0 %v234, 84
        %v525 = vpop.permute.xlu0 %524
        %526 = vrot.lane.b32.xlu0 %v435, 84
        %v527 = vpop.permute.xlu0 %526
        %v528 = vsel %vm521, %v525, %v527
        %v529 = vsel %vm521, %v527, %v525
        %v532 = vcombine.low %v523, %v522
        %v534 = vsub.f32 %v233, %v532
        %v535 = vmul.f32 %v534, %v534
        %v537 = vcombine.high %v535, %v535
        %v539 = vsel %vm239, %v535, 0.0
        %v540 = vrot.slane %v539, 4
        %v541 = vadd.f32 %v539, %v540
        %v542 = vrot.slane %v541, 2
        %v543 = vadd.f32 %v541, %v542
        %v544 = vrot.slane %v543, 1
        %v545 = vadd.f32 %v543, %v544
        %v546 = vsel %vm239, %v537, 0.0
        %v547 = vrot.slane %v546, 4
        %v548 = vadd.f32 %v546, %v547
        %v549 = vrot.slane %v548, 2
        %v550 = vadd.f32 %v548, %v549
        %v551 = vrot.slane %v550, 1
        %v552 = vadd.f32 %v550, %v551
        %v553 = vmul.f32 %v331, %v385
        %v554 = vrsqrt.pop %v545
        %v555 = vmul.f32 %v545, %v554
        %vm556 = vcmp.eq.f32.partialorder %v545, inf
        %v557 = vsel %vm556, %v545, %v555
        %vm558 = vcmp.eq.f32.partialorder %v545, 0.0
        %v559 = vand.u32 %v545, 2147483648
        %v560 = vsel %vm558, %v559, %v557
        %v561 = vrsqrt.pop %v552
        %v562 = vmul.f32 %v552, %v561
        %vm563 = vcmp.eq.f32.partialorder %v552, inf
        %v564 = vsel %vm563, %v552, %v562
        %vm565 = vcmp.eq.f32.partialorder %v552, 0.0
        %v566 = vand.u32 %v552, 2147483648
        %v567 = vsel %vm565, %v566, %v564
        %v568 = vmul.f32 %v560, 1.025
        %v569 = vmul.f32 %v567, 1.025
        %v572 = vcombine.low %v568, %v569
        %v574 = vunpack.c.l.s4 1966171168
        %v575 = vunpack.c.0.s8 %v574
        %v576 = vlaneseq
        %v577 = vshrl.u32 %v576, 7
        %v578 = vsub.s32 %v575, %v577
        %v579 = vrot.slane %v572, %v578
        %v581 = vunpack.c.l.s4 1966171168
        %v582 = vunpack.c.0.s8 %v581
        %v583 = vlaneseq
        %v584 = vshrl.u32 %v583, 7
        %v585 = vsub.s32 %v582, %v584
        %v586 = vrot.slane %v579, %v585
        %v588 = vmul.f32 %v553, %v586
        %v590 = vlaneseq
        %v591 = vshrl.u32 %v590, 7
        %v592 = vsub.s32 0, %v591
        %v593 = vrot.slane %v588, %v592
        %v594 = vlaneseq
        %v595 = vshrl.u32 %v594, 7
        %v596 = vsub.s32 1, %v595
        %v597 = vrot.slane %v588, %v596
        %v600 = vmul.f32 %v593, %v529
        %v601 = vmul.f32 %v597, %v528
        %v602 = vadd.f32 %v600, 0.0
        %v603 = vadd.f32 %v601, 0.0
        %604 = vrot.lane.b32.xlu0 %v233, 83
        %v605 = vpop.permute.xlu0 %604
        %606 = vrot.lane.b32.xlu0 %v268, 83
        %v607 = vpop.permute.xlu0 %606
        %vm608 = vcmp.lt.s32.totalorder %v430, 83
        %v609 = vsel %vm608, %v605, %v607
        %v610 = vsel %vm608, %v607, %v605
        %611 = vrot.lane.b32.xlu0 %v234, 83
        %v612 = vpop.permute.xlu0 %611
        %613 = vrot.lane.b32.xlu0 %v435, 83
        %v614 = vpop.permute.xlu0 %613
        %v615 = vsel %vm608, %v612, %v614
        %v616 = vsel %vm608, %v614, %v612
        %v619 = vcombine.low %v610, %v609
        %v621 = vsub.f32 %v233, %v619
        %v622 = vmul.f32 %v621, %v621
        %v624 = vcombine.high %v622, %v622
        %v626 = vsel %vm239, %v622, 0.0
        %v627 = vrot.slane %v626, 4
        %v628 = vadd.f32 %v626, %v627
        %v629 = vrot.slane %v628, 2
        %v630 = vadd.f32 %v628, %v629
        %v631 = vrot.slane %v630, 1
        %v632 = vadd.f32 %v630, %v631
        %v633 = vsel %vm239, %v624, 0.0
        %v634 = vrot.slane %v633, 4
        %v635 = vadd.f32 %v633, %v634
        %v636 = vrot.slane %v635, 2
        %v637 = vadd.f32 %v635, %v636
        %v638 = vrot.slane %v637, 1
        %v639 = vadd.f32 %v637, %v638
        %v640 = vmul.f32 %v331, %v390
        %v641 = vrsqrt.pop %v632
        %v642 = vmul.f32 %v632, %v641
        %vm643 = vcmp.eq.f32.partialorder %v632, inf
        %v644 = vsel %vm643, %v632, %v642
        %vm645 = vcmp.eq.f32.partialorder %v632, 0.0
        %v646 = vand.u32 %v632, 2147483648
        %v647 = vsel %vm645, %v646, %v644
        %v648 = vrsqrt.pop %v639
        %v649 = vmul.f32 %v639, %v648
        %vm650 = vcmp.eq.f32.partialorder %v639, inf
        %v651 = vsel %vm650, %v639, %v649
        %vm652 = vcmp.eq.f32.partialorder %v639, 0.0
        %v653 = vand.u32 %v639, 2147483648
        %v654 = vsel %vm652, %v653, %v651
        %v655 = vmul.f32 %v647, 0.85
        %v656 = vmul.f32 %v654, 0.85
        %v659 = vcombine.low %v655, %v656
        %v661 = vunpack.c.l.s4 1966171168
        %v662 = vunpack.c.0.s8 %v661
        %v663 = vlaneseq
        %v664 = vshrl.u32 %v663, 7
        %v665 = vsub.s32 %v662, %v664
        %v666 = vrot.slane %v659, %v665
        %v668 = vunpack.c.l.s4 1966171168
        %v669 = vunpack.c.0.s8 %v668
        %v670 = vlaneseq
        %v671 = vshrl.u32 %v670, 7
        %v672 = vsub.s32 %v669, %v671
        %v673 = vrot.slane %v666, %v672
        %v675 = vmul.f32 %v640, %v673
        %v677 = vlaneseq
        %v678 = vshrl.u32 %v677, 7
        %v679 = vsub.s32 0, %v678
        %v680 = vrot.slane %v675, %v679
        %v681 = vlaneseq
        %v682 = vshrl.u32 %v681, 7
        %v683 = vsub.s32 1, %v682
        %v684 = vrot.slane %v675, %v683
        %v687 = vmul.f32 %v680, %v616
        %v688 = vmul.f32 %v684, %v615
        %v689 = vadd.f32 %v687, 0.0
        %v690 = vadd.f32 %v688, 0.0
        %691 = vrot.lane.b32.xlu0 %v233, 82
        %v692 = vpop.permute.xlu0 %691
        %693 = vrot.lane.b32.xlu0 %v268, 82
        %v694 = vpop.permute.xlu0 %693
        %vm695 = vcmp.lt.s32.totalorder %v430, 82
        %v696 = vsel %vm695, %v692, %v694
        %v697 = vsel %vm695, %v694, %v692
        %698 = vrot.lane.b32.xlu0 %v234, 82
        %v699 = vpop.permute.xlu0 %698
        %700 = vrot.lane.b32.xlu0 %v435, 82
        %v701 = vpop.permute.xlu0 %700
        %v702 = vsel %vm695, %v699, %v701
        %v703 = vsel %vm695, %v701, %v699
        %v706 = vcombine.low %v697, %v696
        %v708 = vsub.f32 %v233, %v706
        %v709 = vmul.f32 %v708, %v708
        %v711 = vcombine.high %v709, %v709
        %v713 = vsel %vm239, %v709, 0.0
        %v714 = vrot.slane %v713, 4
        %v715 = vadd.f32 %v713, %v714
        %v716 = vrot.slane %v715, 2
        %v717 = vadd.f32 %v715, %v716
        %v718 = vrot.slane %v717, 1
        %v719 = vadd.f32 %v717, %v718
        %v720 = vsel %vm239, %v711, 0.0
        %v721 = vrot.slane %v720, 4
        %v722 = vadd.f32 %v720, %v721
        %v723 = vrot.slane %v722, 2
        %v724 = vadd.f32 %v722, %v723
        %v725 = vrot.slane %v724, 1
        %v726 = vadd.f32 %v724, %v725
        %v727 = vmul.f32 %v331, %v395
        %v728 = vrsqrt.pop %v719
        %v729 = vmul.f32 %v719, %v728
        %vm730 = vcmp.eq.f32.partialorder %v719, inf
        %v731 = vsel %vm730, %v719, %v729
        %vm732 = vcmp.eq.f32.partialorder %v719, 0.0
        %v733 = vand.u32 %v719, 2147483648
        %v734 = vsel %vm732, %v733, %v731
        %v735 = vrsqrt.pop %v726
        %v736 = vmul.f32 %v726, %v735
        %vm737 = vcmp.eq.f32.partialorder %v726, inf
        %v738 = vsel %vm737, %v726, %v736
        %vm739 = vcmp.eq.f32.partialorder %v726, 0.0
        %v740 = vand.u32 %v726, 2147483648
        %v741 = vsel %vm739, %v740, %v738
        %v742 = vmul.f32 %v734, 0.725
        %v743 = vmul.f32 %v741, 0.725
        %v746 = vcombine.low %v742, %v743
        %v748 = vunpack.c.l.s4 1966171168
        %v749 = vunpack.c.0.s8 %v748
        %v750 = vlaneseq
        %v751 = vshrl.u32 %v750, 7
        %v752 = vsub.s32 %v749, %v751
        %v753 = vrot.slane %v746, %v752
        %v755 = vunpack.c.l.s4 1966171168
        %v756 = vunpack.c.0.s8 %v755
        %v757 = vlaneseq
        %v758 = vshrl.u32 %v757, 7
        %v759 = vsub.s32 %v756, %v758
        %v760 = vrot.slane %v753, %v759
        %v762 = vmul.f32 %v727, %v760
        %v764 = vlaneseq
        %v765 = vshrl.u32 %v764, 7
        %v766 = vsub.s32 0, %v765
        %v767 = vrot.slane %v762, %v766
        %v768 = vlaneseq
        %v769 = vshrl.u32 %v768, 7
        %v770 = vsub.s32 1, %v769
        %v771 = vrot.slane %v762, %v770
        %v774 = vmul.f32 %v767, %v703
        %v775 = vmul.f32 %v771, %v702
        %v776 = vadd.f32 %v774, 0.0
        %v777 = vadd.f32 %v775, 0.0
        %778 = vrot.lane.b32.xlu0 %v233, 81
        %v779 = vpop.permute.xlu0 %778
        %780 = vrot.lane.b32.xlu0 %v268, 81
        %v781 = vpop.permute.xlu0 %780
        %vm782 = vcmp.lt.s32.totalorder %v430, 81
        %v783 = vsel %vm782, %v779, %v781
        %v784 = vsel %vm782, %v781, %v779
        %785 = vrot.lane.b32.xlu0 %v234, 81
        %v786 = vpop.permute.xlu0 %785
        %787 = vrot.lane.b32.xlu0 %v435, 81
        %v788 = vpop.permute.xlu0 %787
        %v789 = vsel %vm782, %v786, %v788
        %v790 = vsel %vm782, %v788, %v786
        %v793 = vcombine.low %v784, %v783
        %v795 = vsub.f32 %v233, %v793
        %v796 = vmul.f32 %v795, %v795
        %v798 = vcombine.high %v796, %v796
        %v800 = vsel %vm239, %v796, 0.0
        %v801 = vrot.slane %v800, 4
        %v802 = vadd.f32 %v800, %v801
        %v803 = vrot.slane %v802, 2
        %v804 = vadd.f32 %v802, %v803
        %v805 = vrot.slane %v804, 1
        %v806 = vadd.f32 %v804, %v805
        %v807 = vsel %vm239, %v798, 0.0
        %v808 = vrot.slane %v807, 4
        %v809 = vadd.f32 %v807, %v808
        %v810 = vrot.slane %v809, 2
        %v811 = vadd.f32 %v809, %v810
        %v812 = vrot.slane %v811, 1
        %v813 = vadd.f32 %v811, %v812
        %v814 = vmul.f32 %v331, %v400
        %v815 = vrsqrt.pop %v806
        %v816 = vmul.f32 %v806, %v815
        %vm817 = vcmp.eq.f32.partialorder %v806, inf
        %v818 = vsel %vm817, %v806, %v816
        %vm819 = vcmp.eq.f32.partialorder %v806, 0.0
        %v820 = vand.u32 %v806, 2147483648
        %v821 = vsel %vm819, %v820, %v818
        %v822 = vrsqrt.pop %v813
        %v823 = vmul.f32 %v813, %v822
        %vm824 = vcmp.eq.f32.partialorder %v813, inf
        %v825 = vsel %vm824, %v813, %v823
        %vm826 = vcmp.eq.f32.partialorder %v813, 0.0
        %v827 = vand.u32 %v813, 2147483648
        %v828 = vsel %vm826, %v827, %v825
        %v829 = vmul.f32 %v821, 0.65
        %v830 = vmul.f32 %v828, 0.65
        %v833 = vcombine.low %v829, %v830
        %v835 = vunpack.c.l.s4 1966171168
        %v836 = vunpack.c.0.s8 %v835
        %v837 = vlaneseq
        %v838 = vshrl.u32 %v837, 7
        %v839 = vsub.s32 %v836, %v838
        %v840 = vrot.slane %v833, %v839
        %v842 = vunpack.c.l.s4 1966171168
        %v843 = vunpack.c.0.s8 %v842
        %v844 = vlaneseq
        %v845 = vshrl.u32 %v844, 7
        %v846 = vsub.s32 %v843, %v845
        %v847 = vrot.slane %v840, %v846
        %v849 = vmul.f32 %v814, %v847
        %v851 = vlaneseq
        %v852 = vshrl.u32 %v851, 7
        %v853 = vsub.s32 0, %v852
        %v854 = vrot.slane %v849, %v853
        %v855 = vlaneseq
        %v856 = vshrl.u32 %v855, 7
        %v857 = vsub.s32 1, %v856
        %v858 = vrot.slane %v849, %v857
        %v861 = vmul.f32 %v854, %v790
        %v862 = vmul.f32 %v858, %v789
        %v863 = vadd.f32 %v515, %v861
        %v864 = vadd.f32 %v516, %v862
        %865 = vrot.lane.b32.xlu0 %v233, 80
        %v866 = vpop.permute.xlu0 %865
        %867 = vrot.lane.b32.xlu0 %v268, 80
        %v868 = vpop.permute.xlu0 %867
        %vm869 = vcmp.lt.s32.totalorder %v430, 80
        %v870 = vsel %vm869, %v866, %v868
        %v871 = vsel %vm869, %v868, %v866
        %872 = vrot.lane.b32.xlu0 %v234, 80
        %v873 = vpop.permute.xlu0 %872
        %874 = vrot.lane.b32.xlu0 %v435, 80
        %v875 = vpop.permute.xlu0 %874
        %v876 = vsel %vm869, %v873, %v875
        %v877 = vsel %vm869, %v875, %v873
        %v880 = vcombine.low %v871, %v870
        %v882 = vsub.f32 %v233, %v880
        %v883 = vmul.f32 %v882, %v882
        %v885 = vcombine.high %v883, %v883
        %v887 = vsel %vm239, %v883, 0.0
        %v888 = vrot.slane %v887, 4
        %v889 = vadd.f32 %v887, %v888
        %v890 = vrot.slane %v889, 2
        %v891 = vadd.f32 %v889, %v890
        %v892 = vrot.slane %v891, 1
        %v893 = vadd.f32 %v891, %v892
        %v894 = vsel %vm239, %v885, 0.0
        %v895 = vrot.slane %v894, 4
        %v896 = vadd.f32 %v894, %v895
        %v897 = vrot.slane %v896, 2
        %v898 = vadd.f32 %v896, %v897
        %v899 = vrot.slane %v898, 1
        %v900 = vadd.f32 %v898, %v899
        %v901 = vmul.f32 %v331, %v404
        %v902 = vrsqrt.pop %v893
        %v903 = vmul.f32 %v893, %v902
        %vm904 = vcmp.eq.f32.partialorder %v893, inf
        %v905 = vsel %vm904, %v893, %v903
        %vm906 = vcmp.eq.f32.partialorder %v893, 0.0
        %v907 = vand.u32 %v893, 2147483648
        %v908 = vsel %vm906, %v907, %v905
        %v909 = vrsqrt.pop %v900
        %v910 = vmul.f32 %v900, %v909
        %vm911 = vcmp.eq.f32.partialorder %v900, inf
        %v912 = vsel %vm911, %v900, %v910
        %vm913 = vcmp.eq.f32.partialorder %v900, 0.0
        %v914 = vand.u32 %v900, 2147483648
        %v915 = vsel %vm913, %v914, %v912
        %v916 = vmul.f32 %v908, 0.625
        %v917 = vmul.f32 %v915, 0.625
        %v920 = vcombine.low %v916, %v917
        %v922 = vunpack.c.l.s4 1966171168
        %v923 = vunpack.c.0.s8 %v922
        %v924 = vlaneseq
        %v925 = vshrl.u32 %v924, 7
        %v926 = vsub.s32 %v923, %v925
        %v927 = vrot.slane %v920, %v926
        %v929 = vunpack.c.l.s4 1966171168
        %v930 = vunpack.c.0.s8 %v929
        %v931 = vlaneseq
        %v932 = vshrl.u32 %v931, 7
        %v933 = vsub.s32 %v930, %v932
        %v934 = vrot.slane %v927, %v933
        %v936 = vmul.f32 %v901, %v934
        %v938 = vlaneseq
        %v939 = vshrl.u32 %v938, 7
        %v940 = vsub.s32 0, %v939
        %v941 = vrot.slane %v936, %v940
        %v942 = vlaneseq
        %v943 = vshrl.u32 %v942, 7
        %v944 = vsub.s32 1, %v943
        %v945 = vrot.slane %v936, %v944
        %v948 = vmul.f32 %v941, %v877
        %v949 = vmul.f32 %v945, %v876
        %v950 = vadd.f32 %v602, %v948
        %v951 = vadd.f32 %v603, %v949
        %952 = vrot.lane.b32.xlu0 %v233, 79
        %v953 = vpop.permute.xlu0 %952
        %954 = vrot.lane.b32.xlu0 %v268, 79
        %v955 = vpop.permute.xlu0 %954
        %vm956 = vcmp.lt.s32.totalorder %v430, 79
        %v957 = vsel %vm956, %v953, %v955
        %v958 = vsel %vm956, %v955, %v953
        %959 = vrot.lane.b32.xlu0 %v234, 79
        %v960 = vpop.permute.xlu0 %959
        %961 = vrot.lane.b32.xlu0 %v435, 79
        %v962 = vpop.permute.xlu0 %961
        %v963 = vsel %vm956, %v960, %v962
        %v964 = vsel %vm956, %v962, %v960
        %v967 = vcombine.low %v958, %v957
        %v969 = vsub.f32 %v233, %v967
        %v970 = vmul.f32 %v969, %v969
        %v972 = vcombine.high %v970, %v970
        %v974 = vsel %vm239, %v970, 0.0
        %v975 = vrot.slane %v974, 4
        %v976 = vadd.f32 %v974, %v975
        %v977 = vrot.slane %v976, 2
        %v978 = vadd.f32 %v976, %v977
        %v979 = vrot.slane %v978, 1
        %v980 = vadd.f32 %v978, %v979
        %v981 = vsel %vm239, %v972, 0.0
        %v982 = vrot.slane %v981, 4
        %v983 = vadd.f32 %v981, %v982
        %v984 = vrot.slane %v983, 2
        %v985 = vadd.f32 %v983, %v984
        %v986 = vrot.slane %v985, 1
        %v987 = vadd.f32 %v985, %v986
        %v988 = vmul.f32 %v331, %v409
        %v989 = vrsqrt.pop %v980
        %v990 = vmul.f32 %v980, %v989
        %vm991 = vcmp.eq.f32.partialorder %v980, inf
        %v992 = vsel %vm991, %v980, %v990
        %vm993 = vcmp.eq.f32.partialorder %v980, 0.0
        %v994 = vand.u32 %v980, 2147483648
        %v995 = vsel %vm993, %v994, %v992
        %v996 = vrsqrt.pop %v987
        %v997 = vmul.f32 %v987, %v996
        %vm998 = vcmp.eq.f32.partialorder %v987, inf
        %v999 = vsel %vm998, %v987, %v997
        %vm1000 = vcmp.eq.f32.partialorder %v987, 0.0
        %v1001 = vand.u32 %v987, 2147483648
        %v1002 = vsel %vm1000, %v1001, %v999
        %v1003 = vmul.f32 %v995, 0.65
        %v1004 = vmul.f32 %v1002, 0.65
        %v1007 = vcombine.low %v1003, %v1004
        %v1009 = vunpack.c.l.s4 1966171168
        %v1010 = vunpack.c.0.s8 %v1009
        %v1011 = vlaneseq
        %v1012 = vshrl.u32 %v1011, 7
        %v1013 = vsub.s32 %v1010, %v1012
        %v1014 = vrot.slane %v1007, %v1013
        %v1016 = vunpack.c.l.s4 1966171168
        %v1017 = vunpack.c.0.s8 %v1016
        %v1018 = vlaneseq
        %v1019 = vshrl.u32 %v1018, 7
        %v1020 = vsub.s32 %v1017, %v1019
        %v1021 = vrot.slane %v1014, %v1020
        %v1023 = vmul.f32 %v988, %v1021
        %v1025 = vlaneseq
        %v1026 = vshrl.u32 %v1025, 7
        %v1027 = vsub.s32 0, %v1026
        %v1028 = vrot.slane %v1023, %v1027
        %v1029 = vlaneseq
        %v1030 = vshrl.u32 %v1029, 7
        %v1031 = vsub.s32 1, %v1030
        %v1032 = vrot.slane %v1023, %v1031
        %v1035 = vmul.f32 %v1028, %v964
        %v1036 = vmul.f32 %v1032, %v963
        %v1037 = vadd.f32 %v689, %v1035
        %v1038 = vadd.f32 %v690, %v1036
        %1039 = vrot.lane.b32.xlu0 %v233, 78
        %v1040 = vpop.permute.xlu0 %1039
        %1041 = vrot.lane.b32.xlu0 %v268, 78
        %v1042 = vpop.permute.xlu0 %1041
        %vm1043 = vcmp.lt.s32.totalorder %v430, 78
        %v1044 = vsel %vm1043, %v1040, %v1042
        %v1045 = vsel %vm1043, %v1042, %v1040
        %1046 = vrot.lane.b32.xlu0 %v234, 78
        %v1047 = vpop.permute.xlu0 %1046
        %1048 = vrot.lane.b32.xlu0 %v435, 78
        %v1049 = vpop.permute.xlu0 %1048
        %v1050 = vsel %vm1043, %v1047, %v1049
        %v1051 = vsel %vm1043, %v1049, %v1047
        %v1054 = vcombine.low %v1045, %v1044
        %v1056 = vsub.f32 %v233, %v1054
        %v1057 = vmul.f32 %v1056, %v1056
        %v1059 = vcombine.high %v1057, %v1057
        %v1061 = vsel %vm239, %v1057, 0.0
        %v1062 = vrot.slane %v1061, 4
        %v1063 = vadd.f32 %v1061, %v1062
        %v1064 = vrot.slane %v1063, 2
        %v1065 = vadd.f32 %v1063, %v1064
        %v1066 = vrot.slane %v1065, 1
        %v1067 = vadd.f32 %v1065, %v1066
        %v1068 = vsel %vm239, %v1059, 0.0
        %v1069 = vrot.slane %v1068, 4
        %v1070 = vadd.f32 %v1068, %v1069
        %v1071 = vrot.slane %v1070, 2
        %v1072 = vadd.f32 %v1070, %v1071
        %v1073 = vrot.slane %v1072, 1
        %v1074 = vadd.f32 %v1072, %v1073
        %v1075 = vmul.f32 %v331, %v414
        %v1076 = vrsqrt.pop %v1067
        %v1077 = vmul.f32 %v1067, %v1076
        %vm1078 = vcmp.eq.f32.partialorder %v1067, inf
        %v1079 = vsel %vm1078, %v1067, %v1077
        %vm1080 = vcmp.eq.f32.partialorder %v1067, 0.0
        %v1081 = vand.u32 %v1067, 2147483648
        %v1082 = vsel %vm1080, %v1081, %v1079
        %v1083 = vrsqrt.pop %v1074
        %v1084 = vmul.f32 %v1074, %v1083
        %vm1085 = vcmp.eq.f32.partialorder %v1074, inf
        %v1086 = vsel %vm1085, %v1074, %v1084
        %vm1087 = vcmp.eq.f32.partialorder %v1074, 0.0
        %v1088 = vand.u32 %v1074, 2147483648
        %v1089 = vsel %vm1087, %v1088, %v1086
        %v1090 = vmul.f32 %v1082, 0.725
        %v1091 = vmul.f32 %v1089, 0.725
        %v1094 = vcombine.low %v1090, %v1091
        %v1096 = vunpack.c.l.s4 1966171168
        %v1097 = vunpack.c.0.s8 %v1096
        %v1098 = vlaneseq
        %v1099 = vshrl.u32 %v1098, 7
        %v1100 = vsub.s32 %v1097, %v1099
        %v1101 = vrot.slane %v1094, %v1100
        %v1103 = vunpack.c.l.s4 1966171168
        %v1104 = vunpack.c.0.s8 %v1103
        %v1105 = vlaneseq
        %v1106 = vshrl.u32 %v1105, 7
        %v1107 = vsub.s32 %v1104, %v1106
        %v1108 = vrot.slane %v1101, %v1107
        %v1110 = vmul.f32 %v1075, %v1108
        %v1112 = vlaneseq
        %v1113 = vshrl.u32 %v1112, 7
        %v1114 = vsub.s32 0, %v1113
        %v1115 = vrot.slane %v1110, %v1114
        %v1116 = vlaneseq
        %v1117 = vshrl.u32 %v1116, 7
        %v1118 = vsub.s32 1, %v1117
        %v1119 = vrot.slane %v1110, %v1118
        %v1122 = vmul.f32 %v1115, %v1051
        %v1123 = vmul.f32 %v1119, %v1050
        %v1124 = vadd.f32 %v776, %v1122
        %v1125 = vadd.f32 %v777, %v1123
        %1126 = vrot.lane.b32.xlu0 %v233, 77
        %v1127 = vpop.permute.xlu0 %1126
        %1128 = vrot.lane.b32.xlu0 %v268, 77
        %v1129 = vpop.permute.xlu0 %1128
        %vm1130 = vcmp.lt.s32.totalorder %v430, 77
        %v1131 = vsel %vm1130, %v1127, %v1129
        %v1132 = vsel %vm1130, %v1129, %v1127
        %1133 = vrot.lane.b32.xlu0 %v234, 77
        %v1134 = vpop.permute.xlu0 %1133
        %1135 = vrot.lane.b32.xlu0 %v435, 77
        %v1136 = vpop.permute.xlu0 %1135
        %v1137 = vsel %vm1130, %v1134, %v1136
        %v1138 = vsel %vm1130, %v1136, %v1134
        %v1141 = vcombine.low %v1132, %v1131
        %v1143 = vsub.f32 %v233, %v1141
        %v1144 = vmul.f32 %v1143, %v1143
        %v1146 = vcombine.high %v1144, %v1144
        %v1148 = vsel %vm239, %v1144, 0.0
        %v1149 = vrot.slane %v1148, 4
        %v1150 = vadd.f32 %v1148, %v1149
        %v1151 = vrot.slane %v1150, 2
        %v1152 = vadd.f32 %v1150, %v1151
        %v1153 = vrot.slane %v1152, 1
        %v1154 = vadd.f32 %v1152, %v1153
        %v1155 = vsel %vm239, %v1146, 0.0
        %v1156 = vrot.slane %v1155, 4
        %v1157 = vadd.f32 %v1155, %v1156
        %v1158 = vrot.slane %v1157, 2
        %v1159 = vadd.f32 %v1157, %v1158
        %v1160 = vrot.slane %v1159, 1
        %v1161 = vadd.f32 %v1159, %v1160
        %v1162 = vmul.f32 %v331, %v419
        %v1163 = vrsqrt.pop %v1154
        %v1164 = vmul.f32 %v1154, %v1163
        %vm1165 = vcmp.eq.f32.partialorder %v1154, inf
        %v1166 = vsel %vm1165, %v1154, %v1164
        %vm1167 = vcmp.eq.f32.partialorder %v1154, 0.0
        %v1168 = vand.u32 %v1154, 2147483648
        %v1169 = vsel %vm1167, %v1168, %v1166
        %v1170 = vrsqrt.pop %v1161
        %v1171 = vmul.f32 %v1161, %v1170
        %vm1172 = vcmp.eq.f32.partialorder %v1161, inf
        %v1173 = vsel %vm1172, %v1161, %v1171
        %vm1174 = vcmp.eq.f32.partialorder %v1161, 0.0
        %v1175 = vand.u32 %v1161, 2147483648
        %v1176 = vsel %vm1174, %v1175, %v1173
        %v1177 = vmul.f32 %v1169, 0.85
        %v1178 = vmul.f32 %v1176, 0.85
        %v1181 = vcombine.low %v1177, %v1178
        %v1183 = vunpack.c.l.s4 1966171168
        %v1184 = vunpack.c.0.s8 %v1183
        %v1185 = vlaneseq
        %v1186 = vshrl.u32 %v1185, 7
        %v1187 = vsub.s32 %v1184, %v1186
        %v1188 = vrot.slane %v1181, %v1187
        %v1190 = vunpack.c.l.s4 1966171168
        %v1191 = vunpack.c.0.s8 %v1190
        %v1192 = vlaneseq
        %v1193 = vshrl.u32 %v1192, 7
        %v1194 = vsub.s32 %v1191, %v1193
        %v1195 = vrot.slane %v1188, %v1194
        %v1197 = vmul.f32 %v1162, %v1195
        %v1199 = vlaneseq
        %v1200 = vshrl.u32 %v1199, 7
        %v1201 = vsub.s32 0, %v1200
        %v1202 = vrot.slane %v1197, %v1201
        %v1203 = vlaneseq
        %v1204 = vshrl.u32 %v1203, 7
        %v1205 = vsub.s32 1, %v1204
        %v1206 = vrot.slane %v1197, %v1205
        %v1209 = vmul.f32 %v1202, %v1138
        %v1210 = vmul.f32 %v1206, %v1137
        %v1211 = vadd.f32 %v863, %v1209
        %v1212 = vadd.f32 %v864, %v1210
        %1213 = vrot.lane.b32.xlu0 %v233, 76
        %v1214 = vpop.permute.xlu0 %1213
        %1215 = vrot.lane.b32.xlu0 %v268, 76
        %v1216 = vpop.permute.xlu0 %1215
        %vm1217 = vcmp.lt.s32.totalorder %v430, 76
        %v1218 = vsel %vm1217, %v1214, %v1216
        %v1219 = vsel %vm1217, %v1216, %v1214
        %1220 = vrot.lane.b32.xlu0 %v234, 76
        %v1221 = vpop.permute.xlu0 %1220
        %1222 = vrot.lane.b32.xlu0 %v435, 76
        %v1223 = vpop.permute.xlu0 %1222
        %v1224 = vsel %vm1217, %v1221, %v1223
        %v1225 = vsel %vm1217, %v1223, %v1221
        %v1228 = vcombine.low %v1219, %v1218
        %v1230 = vsub.f32 %v233, %v1228
        %v1231 = vmul.f32 %v1230, %v1230
        %v1233 = vcombine.high %v1231, %v1231
        %v1235 = vsel %vm239, %v1231, 0.0
        %v1236 = vrot.slane %v1235, 4
        %v1237 = vadd.f32 %v1235, %v1236
        %v1238 = vrot.slane %v1237, 2
        %v1239 = vadd.f32 %v1237, %v1238
        %v1240 = vrot.slane %v1239, 1
        %v1241 = vadd.f32 %v1239, %v1240
        %v1242 = vsel %vm239, %v1233, 0.0
        %v1243 = vrot.slane %v1242, 4
        %v1244 = vadd.f32 %v1242, %v1243
        %v1245 = vrot.slane %v1244, 2
        %v1246 = vadd.f32 %v1244, %v1245
        %v1247 = vrot.slane %v1246, 1
        %v1248 = vadd.f32 %v1246, %v1247
        %v1249 = vmul.f32 %v331, %v424
        %v1250 = vrsqrt.pop %v1241
        %v1251 = vmul.f32 %v1241, %v1250
        %vm1252 = vcmp.eq.f32.partialorder %v1241, inf
        %v1253 = vsel %vm1252, %v1241, %v1251
        %vm1254 = vcmp.eq.f32.partialorder %v1241, 0.0
        %v1255 = vand.u32 %v1241, 2147483648
        %v1256 = vsel %vm1254, %v1255, %v1253
        %v1257 = vrsqrt.pop %v1248
        %v1258 = vmul.f32 %v1248, %v1257
        %vm1259 = vcmp.eq.f32.partialorder %v1248, inf
        %v1260 = vsel %vm1259, %v1248, %v1258
        %vm1261 = vcmp.eq.f32.partialorder %v1248, 0.0
        %v1262 = vand.u32 %v1248, 2147483648
        %v1263 = vsel %vm1261, %v1262, %v1260
        %v1264 = vmul.f32 %v1256, 1.025
        %v1265 = vmul.f32 %v1263, 1.025
        %v1268 = vcombine.low %v1264, %v1265
        %v1270 = vunpack.c.l.s4 1966171168
        %v1271 = vunpack.c.0.s8 %v1270
        %v1272 = vlaneseq
        %v1273 = vshrl.u32 %v1272, 7
        %v1274 = vsub.s32 %v1271, %v1273
        %v1275 = vrot.slane %v1268, %v1274
        %v1277 = vunpack.c.l.s4 1966171168
        %v1278 = vunpack.c.0.s8 %v1277
        %v1279 = vlaneseq
        %v1280 = vshrl.u32 %v1279, 7
        %v1281 = vsub.s32 %v1278, %v1280
        %v1282 = vrot.slane %v1275, %v1281
        %v1284 = vmul.f32 %v1249, %v1282
        %v1286 = vlaneseq
        %v1287 = vshrl.u32 %v1286, 7
        %v1288 = vsub.s32 0, %v1287
        %v1289 = vrot.slane %v1284, %v1288
        %v1290 = vlaneseq
        %v1291 = vshrl.u32 %v1290, 7
        %v1292 = vsub.s32 1, %v1291
        %v1293 = vrot.slane %v1284, %v1292
        %v1296 = vmul.f32 %v1289, %v1225
        %v1297 = vmul.f32 %v1293, %v1224
        %v1298 = vadd.f32 %v950, %v1296
        %v1299 = vadd.f32 %v951, %v1297
        %1300 = vrot.lane.b32.xlu0 %v233, 69
        %v1301 = vpop.permute.xlu0 %1300
        %1302 = vrot.lane.b32.xlu0 %v268, 69
        %v1303 = vpop.permute.xlu0 %1302
        %vm1304 = vcmp.lt.s32.totalorder %v430, 69
        %v1305 = vsel %vm1304, %v1301, %v1303
        %v1306 = vsel %vm1304, %v1303, %v1301
        %1307 = vrot.lane.b32.xlu0 %v234, 69
        %v1308 = vpop.permute.xlu0 %1307
        %1309 = vrot.lane.b32.xlu0 %v435, 69
        %v1310 = vpop.permute.xlu0 %1309
        %v1311 = vsel %vm1304, %v1308, %v1310
        %v1312 = vsel %vm1304, %v1310, %v1308
        %v1315 = vcombine.low %v1306, %v1305
        %v1317 = vsub.f32 %v233, %v1315
        %v1318 = vmul.f32 %v1317, %v1317
        %v1320 = vcombine.high %v1318, %v1318
        %v1322 = vsel %vm239, %v1318, 0.0
        %v1323 = vrot.slane %v1322, 4
        %v1324 = vadd.f32 %v1322, %v1323
        %v1325 = vrot.slane %v1324, 2
        %v1326 = vadd.f32 %v1324, %v1325
        %v1327 = vrot.slane %v1326, 1
        %v1328 = vadd.f32 %v1326, %v1327
        %v1329 = vsel %vm239, %v1320, 0.0
        %v1330 = vrot.slane %v1329, 4
        %v1331 = vadd.f32 %v1329, %v1330
        %v1332 = vrot.slane %v1331, 2
        %v1333 = vadd.f32 %v1331, %v1332
        %v1334 = vrot.slane %v1333, 1
        %v1335 = vadd.f32 %v1333, %v1334
        %v1336 = vmul.f32 %v336, %v380
        %v1337 = vrsqrt.pop %v1328
        %v1338 = vmul.f32 %v1328, %v1337
        %vm1339 = vcmp.eq.f32.partialorder %v1328, inf
        %v1340 = vsel %vm1339, %v1328, %v1338
        %vm1341 = vcmp.eq.f32.partialorder %v1328, 0.0
        %v1342 = vand.u32 %v1328, 2147483648
        %v1343 = vsel %vm1341, %v1342, %v1340
        %v1344 = vrsqrt.pop %v1335
        %v1345 = vmul.f32 %v1335, %v1344
        %vm1346 = vcmp.eq.f32.partialorder %v1335, inf
        %v1347 = vsel %vm1346, %v1335, %v1345
        %vm1348 = vcmp.eq.f32.partialorder %v1335, 0.0
        %v1349 = vand.u32 %v1335, 2147483648
        %v1350 = vsel %vm1348, %v1349, %v1347
        %v1351 = vmul.f32 %v1343, 1.025
        %v1352 = vmul.f32 %v1350, 1.025
        %v1355 = vcombine.low %v1351, %v1352
        %v1357 = vunpack.c.l.s4 1966171168
        %v1358 = vunpack.c.0.s8 %v1357
        %v1359 = vlaneseq
        %v1360 = vshrl.u32 %v1359, 7
        %v1361 = vsub.s32 %v1358, %v1360
        %v1362 = vrot.slane %v1355, %v1361
        %v1364 = vunpack.c.l.s4 1966171168
        %v1365 = vunpack.c.0.s8 %v1364
        %v1366 = vlaneseq
        %v1367 = vshrl.u32 %v1366, 7
        %v1368 = vsub.s32 %v1365, %v1367
        %v1369 = vrot.slane %v1362, %v1368
        %v1371 = vmul.f32 %v1336, %v1369
        %v1373 = vlaneseq
        %v1374 = vshrl.u32 %v1373, 7
        %v1375 = vsub.s32 0, %v1374
        %v1376 = vrot.slane %v1371, %v1375
        %v1377 = vlaneseq
        %v1378 = vshrl.u32 %v1377, 7
        %v1379 = vsub.s32 1, %v1378
        %v1380 = vrot.slane %v1371, %v1379
        %v1383 = vmul.f32 %v1376, %v1312
        %v1384 = vmul.f32 %v1380, %v1311
        %v1385 = vadd.f32 %v1037, %v1383
        %v1386 = vadd.f32 %v1038, %v1384
        %1387 = vrot.lane.b32.xlu0 %v233, 53
        %v1388 = vpop.permute.xlu0 %1387
        %1389 = vrot.lane.b32.xlu0 %v268, 53
        %v1390 = vpop.permute.xlu0 %1389
        %vm1391 = vcmp.lt.s32.totalorder %v430, 53
        %v1392 = vsel %vm1391, %v1388, %v1390
        %v1393 = vsel %vm1391, %v1390, %v1388
        %1394 = vrot.lane.b32.xlu0 %v234, 53
        %v1395 = vpop.permute.xlu0 %1394
        %1396 = vrot.lane.b32.xlu0 %v435, 53
        %v1397 = vpop.permute.xlu0 %1396
        %v1398 = vsel %vm1391, %v1395, %v1397
        %v1399 = vsel %vm1391, %v1397, %v1395
        %v1402 = vcombine.low %v1393, %v1392
        %v1404 = vsub.f32 %v233, %v1402
        %v1405 = vmul.f32 %v1404, %v1404
        %v1407 = vcombine.high %v1405, %v1405
        %v1409 = vsel %vm239, %v1405, 0.0
        %v1410 = vrot.slane %v1409, 4
        %v1411 = vadd.f32 %v1409, %v1410
        %v1412 = vrot.slane %v1411, 2
        %v1413 = vadd.f32 %v1411, %v1412
        %v1414 = vrot.slane %v1413, 1
        %v1415 = vadd.f32 %v1413, %v1414
        %v1416 = vsel %vm239, %v1407, 0.0
        %v1417 = vrot.slane %v1416, 4
        %v1418 = vadd.f32 %v1416, %v1417
        %v1419 = vrot.slane %v1418, 2
        %v1420 = vadd.f32 %v1418, %v1419
        %v1421 = vrot.slane %v1420, 1
        %v1422 = vadd.f32 %v1420, %v1421
        %v1423 = vmul.f32 %v341, %v380
        %v1424 = vrsqrt.pop %v1415
        %v1425 = vmul.f32 %v1415, %v1424
        %vm1426 = vcmp.eq.f32.partialorder %v1415, inf
        %v1427 = vsel %vm1426, %v1415, %v1425
        %vm1428 = vcmp.eq.f32.partialorder %v1415, 0.0
        %v1429 = vand.u32 %v1415, 2147483648
        %v1430 = vsel %vm1428, %v1429, %v1427
        %v1431 = vrsqrt.pop %v1422
        %v1432 = vmul.f32 %v1422, %v1431
        %vm1433 = vcmp.eq.f32.partialorder %v1422, inf
        %v1434 = vsel %vm1433, %v1422, %v1432
        %vm1435 = vcmp.eq.f32.partialorder %v1422, 0.0
        %v1436 = vand.u32 %v1422, 2147483648
        %v1437 = vsel %vm1435, %v1436, %v1434
        %v1438 = vmul.f32 %v1430, 0.85
        %v1439 = vmul.f32 %v1437, 0.85
        %v1442 = vcombine.low %v1438, %v1439
        %v1444 = vunpack.c.l.s4 1966171168
        %v1445 = vunpack.c.0.s8 %v1444
        %v1446 = vlaneseq
        %v1447 = vshrl.u32 %v1446, 7
        %v1448 = vsub.s32 %v1445, %v1447
        %v1449 = vrot.slane %v1442, %v1448
        %v1451 = vunpack.c.l.s4 1966171168
        %v1452 = vunpack.c.0.s8 %v1451
        %v1453 = vlaneseq
        %v1454 = vshrl.u32 %v1453, 7
        %v1455 = vsub.s32 %v1452, %v1454
        %v1456 = vrot.slane %v1449, %v1455
        %v1458 = vmul.f32 %v1423, %v1456
        %v1460 = vlaneseq
        %v1461 = vshrl.u32 %v1460, 7
        %v1462 = vsub.s32 0, %v1461
        %v1463 = vrot.slane %v1458, %v1462
        %v1464 = vlaneseq
        %v1465 = vshrl.u32 %v1464, 7
        %v1466 = vsub.s32 1, %v1465
        %v1467 = vrot.slane %v1458, %v1466
        %v1470 = vmul.f32 %v1463, %v1399
        %v1471 = vmul.f32 %v1467, %v1398
        %v1472 = vadd.f32 %v1124, %v1470
        %v1473 = vadd.f32 %v1125, %v1471
        %1474 = vrot.lane.b32.xlu0 %v233, 37
        %v1475 = vpop.permute.xlu0 %1474
        %1476 = vrot.lane.b32.xlu0 %v268, 37
        %v1477 = vpop.permute.xlu0 %1476
        %vm1478 = vcmp.lt.s32.totalorder %v430, 37
        %v1479 = vsel %vm1478, %v1475, %v1477
        %v1480 = vsel %vm1478, %v1477, %v1475
        %1481 = vrot.lane.b32.xlu0 %v234, 37
        %v1482 = vpop.permute.xlu0 %1481
        %1483 = vrot.lane.b32.xlu0 %v435, 37
        %v1484 = vpop.permute.xlu0 %1483
        %v1485 = vsel %vm1478, %v1482, %v1484
        %v1486 = vsel %vm1478, %v1484, %v1482
        %v1489 = vcombine.low %v1480, %v1479
        %v1491 = vsub.f32 %v233, %v1489
        %v1492 = vmul.f32 %v1491, %v1491
        %v1494 = vcombine.high %v1492, %v1492
        %v1496 = vsel %vm239, %v1492, 0.0
        %v1497 = vrot.slane %v1496, 4
        %v1498 = vadd.f32 %v1496, %v1497
        %v1499 = vrot.slane %v1498, 2
        %v1500 = vadd.f32 %v1498, %v1499
        %v1501 = vrot.slane %v1500, 1
        %v1502 = vadd.f32 %v1500, %v1501
        %v1503 = vsel %vm239, %v1494, 0.0
        %v1504 = vrot.slane %v1503, 4
        %v1505 = vadd.f32 %v1503, %v1504
        %v1506 = vrot.slane %v1505, 2
        %v1507 = vadd.f32 %v1505, %v1506
        %v1508 = vrot.slane %v1507, 1
        %v1509 = vadd.f32 %v1507, %v1508
        %v1510 = vmul.f32 %v346, %v380
        %v1511 = vrsqrt.pop %v1502
        %v1512 = vmul.f32 %v1502, %v1511
        %vm1513 = vcmp.eq.f32.partialorder %v1502, inf
        %v1514 = vsel %vm1513, %v1502, %v1512
        %vm1515 = vcmp.eq.f32.partialorder %v1502, 0.0
        %v1516 = vand.u32 %v1502, 2147483648
        %v1517 = vsel %vm1515, %v1516, %v1514
        %v1518 = vrsqrt.pop %v1509
        %v1519 = vmul.f32 %v1509, %v1518
        %vm1520 = vcmp.eq.f32.partialorder %v1509, inf
        %v1521 = vsel %vm1520, %v1509, %v1519
        %vm1522 = vcmp.eq.f32.partialorder %v1509, 0.0
        %v1523 = vand.u32 %v1509, 2147483648
        %v1524 = vsel %vm1522, %v1523, %v1521
        %v1525 = vmul.f32 %v1517, 0.725
        %v1526 = vmul.f32 %v1524, 0.725
        %v1529 = vcombine.low %v1525, %v1526
        %v1531 = vunpack.c.l.s4 1966171168
        %v1532 = vunpack.c.0.s8 %v1531
        %v1533 = vlaneseq
        %v1534 = vshrl.u32 %v1533, 7
        %v1535 = vsub.s32 %v1532, %v1534
        %v1536 = vrot.slane %v1529, %v1535
        %v1538 = vunpack.c.l.s4 1966171168
        %v1539 = vunpack.c.0.s8 %v1538
        %v1540 = vlaneseq
        %v1541 = vshrl.u32 %v1540, 7
        %v1542 = vsub.s32 %v1539, %v1541
        %v1543 = vrot.slane %v1536, %v1542
        %v1545 = vmul.f32 %v1510, %v1543
        %v1547 = vlaneseq
        %v1548 = vshrl.u32 %v1547, 7
        %v1549 = vsub.s32 0, %v1548
        %v1550 = vrot.slane %v1545, %v1549
        %v1551 = vlaneseq
        %v1552 = vshrl.u32 %v1551, 7
        %v1553 = vsub.s32 1, %v1552
        %v1554 = vrot.slane %v1545, %v1553
        %v1557 = vmul.f32 %v1550, %v1486
        %v1558 = vmul.f32 %v1554, %v1485
        %v1559 = vadd.f32 %v1211, %v1557
        %v1560 = vadd.f32 %v1212, %v1558
        %1561 = vrot.lane.b32.xlu0 %v233, 21
        %v1562 = vpop.permute.xlu0 %1561
        %1563 = vrot.lane.b32.xlu0 %v268, 21
        %v1564 = vpop.permute.xlu0 %1563
        %vm1565 = vcmp.lt.s32.totalorder %v430, 21
        %v1566 = vsel %vm1565, %v1562, %v1564
        %v1567 = vsel %vm1565, %v1564, %v1562
        %1568 = vrot.lane.b32.xlu0 %v234, 21
        %v1569 = vpop.permute.xlu0 %1568
        %1570 = vrot.lane.b32.xlu0 %v435, 21
        %v1571 = vpop.permute.xlu0 %1570
        %v1572 = vsel %vm1565, %v1569, %v1571
        %v1573 = vsel %vm1565, %v1571, %v1569
        %v1576 = vcombine.low %v1567, %v1566
        %v1578 = vsub.f32 %v233, %v1576
        %v1579 = vmul.f32 %v1578, %v1578
        %v1581 = vcombine.high %v1579, %v1579
        %v1583 = vsel %vm239, %v1579, 0.0
        %v1584 = vrot.slane %v1583, 4
        %v1585 = vadd.f32 %v1583, %v1584
        %v1586 = vrot.slane %v1585, 2
        %v1587 = vadd.f32 %v1585, %v1586
        %v1588 = vrot.slane %v1587, 1
        %v1589 = vadd.f32 %v1587, %v1588
        %v1590 = vsel %vm239, %v1581, 0.0
        %v1591 = vrot.slane %v1590, 4
        %v1592 = vadd.f32 %v1590, %v1591
        %v1593 = vrot.slane %v1592, 2
        %v1594 = vadd.f32 %v1592, %v1593
        %v1595 = vrot.slane %v1594, 1
        %v1596 = vadd.f32 %v1594, %v1595
        %v1597 = vmul.f32 %v351, %v380
        %v1598 = vrsqrt.pop %v1589
        %v1599 = vmul.f32 %v1589, %v1598
        %vm1600 = vcmp.eq.f32.partialorder %v1589, inf
        %v1601 = vsel %vm1600, %v1589, %v1599
        %vm1602 = vcmp.eq.f32.partialorder %v1589, 0.0
        %v1603 = vand.u32 %v1589, 2147483648
        %v1604 = vsel %vm1602, %v1603, %v1601
        %v1605 = vrsqrt.pop %v1596
        %v1606 = vmul.f32 %v1596, %v1605
        %vm1607 = vcmp.eq.f32.partialorder %v1596, inf
        %v1608 = vsel %vm1607, %v1596, %v1606
        %vm1609 = vcmp.eq.f32.partialorder %v1596, 0.0
        %v1610 = vand.u32 %v1596, 2147483648
        %v1611 = vsel %vm1609, %v1610, %v1608
        %v1612 = vmul.f32 %v1604, 0.65
        %v1613 = vmul.f32 %v1611, 0.65
        %v1616 = vcombine.low %v1612, %v1613
        %v1618 = vunpack.c.l.s4 1966171168
        %v1619 = vunpack.c.0.s8 %v1618
        %v1620 = vlaneseq
        %v1621 = vshrl.u32 %v1620, 7
        %v1622 = vsub.s32 %v1619, %v1621
        %v1623 = vrot.slane %v1616, %v1622
        %v1625 = vunpack.c.l.s4 1966171168
        %v1626 = vunpack.c.0.s8 %v1625
        %v1627 = vlaneseq
        %v1628 = vshrl.u32 %v1627, 7
        %v1629 = vsub.s32 %v1626, %v1628
        %v1630 = vrot.slane %v1623, %v1629
        %v1632 = vmul.f32 %v1597, %v1630
        %v1634 = vlaneseq
        %v1635 = vshrl.u32 %v1634, 7
        %v1636 = vsub.s32 0, %v1635
        %v1637 = vrot.slane %v1632, %v1636
        %v1638 = vlaneseq
        %v1639 = vshrl.u32 %v1638, 7
        %v1640 = vsub.s32 1, %v1639
        %v1641 = vrot.slane %v1632, %v1640
        %v1644 = vmul.f32 %v1637, %v1573
        %v1645 = vmul.f32 %v1641, %v1572
        %v1646 = vadd.f32 %v1298, %v1644
        %v1647 = vadd.f32 %v1299, %v1645
        %1648 = vrot.lane.b32.xlu0 %v233, 5
        %v1649 = vpop.permute.xlu0 %1648
        %1650 = vrot.lane.b32.xlu0 %v268, 5
        %v1651 = vpop.permute.xlu0 %1650
        %vm1652 = vcmp.lt.s32.totalorder %v430, 5
        %v1653 = vsel %vm1652, %v1649, %v1651
        %v1654 = vsel %vm1652, %v1651, %v1649
        %1655 = vrot.lane.b32.xlu0 %v234, 5
        %v1656 = vpop.permute.xlu0 %1655
        %1657 = vrot.lane.b32.xlu0 %v435, 5
        %v1658 = vpop.permute.xlu0 %1657
        %v1659 = vsel %vm1652, %v1656, %v1658
        %v1660 = vsel %vm1652, %v1658, %v1656
        %v1663 = vcombine.low %v1654, %v1653
        %v1665 = vsub.f32 %v233, %v1663
        %v1666 = vmul.f32 %v1665, %v1665
        %v1668 = vcombine.high %v1666, %v1666
        %v1670 = vsel %vm239, %v1666, 0.0
        %v1671 = vrot.slane %v1670, 4
        %v1672 = vadd.f32 %v1670, %v1671
        %v1673 = vrot.slane %v1672, 2
        %v1674 = vadd.f32 %v1672, %v1673
        %v1675 = vrot.slane %v1674, 1
        %v1676 = vadd.f32 %v1674, %v1675
        %v1677 = vsel %vm239, %v1668, 0.0
        %v1678 = vrot.slane %v1677, 4
        %v1679 = vadd.f32 %v1677, %v1678
        %v1680 = vrot.slane %v1679, 2
        %v1681 = vadd.f32 %v1679, %v1680
        %v1682 = vrot.slane %v1681, 1
        %v1683 = vadd.f32 %v1681, %v1682
        %v1684 = vmul.f32 %v355, %v380
        %v1685 = vrsqrt.pop %v1676
        %v1686 = vmul.f32 %v1676, %v1685
        %vm1687 = vcmp.eq.f32.partialorder %v1676, inf
        %v1688 = vsel %vm1687, %v1676, %v1686
        %vm1689 = vcmp.eq.f32.partialorder %v1676, 0.0
        %v1690 = vand.u32 %v1676, 2147483648
        %v1691 = vsel %vm1689, %v1690, %v1688
        %v1692 = vrsqrt.pop %v1683
        %v1693 = vmul.f32 %v1683, %v1692
        %vm1694 = vcmp.eq.f32.partialorder %v1683, inf
        %v1695 = vsel %vm1694, %v1683, %v1693
        %vm1696 = vcmp.eq.f32.partialorder %v1683, 0.0
        %v1697 = vand.u32 %v1683, 2147483648
        %v1698 = vsel %vm1696, %v1697, %v1695
        %v1699 = vmul.f32 %v1691, 0.625
        %v1700 = vmul.f32 %v1698, 0.625
        %v1703 = vcombine.low %v1699, %v1700
        %v1705 = vunpack.c.l.s4 1966171168
        %v1706 = vunpack.c.0.s8 %v1705
        %v1707 = vlaneseq
        %v1708 = vshrl.u32 %v1707, 7
        %v1709 = vsub.s32 %v1706, %v1708
        %v1710 = vrot.slane %v1703, %v1709
        %v1712 = vunpack.c.l.s4 1966171168
        %v1713 = vunpack.c.0.s8 %v1712
        %v1714 = vlaneseq
        %v1715 = vshrl.u32 %v1714, 7
        %v1716 = vsub.s32 %v1713, %v1715
        %v1717 = vrot.slane %v1710, %v1716
        %v1719 = vmul.f32 %v1684, %v1717
        %v1721 = vlaneseq
        %v1722 = vshrl.u32 %v1721, 7
        %v1723 = vsub.s32 0, %v1722
        %v1724 = vrot.slane %v1719, %v1723
        %v1725 = vlaneseq
        %v1726 = vshrl.u32 %v1725, 7
        %v1727 = vsub.s32 1, %v1726
        %v1728 = vrot.slane %v1719, %v1727
        %v1731 = vmul.f32 %v1724, %v1660
        %v1732 = vmul.f32 %v1728, %v1659
        %v1733 = vadd.f32 %v1385, %v1731
        %v1734 = vadd.f32 %v1386, %v1732
        %1735 = vrot.lane.b32.xlu0 %v233, 124
        %v1736 = vpop.permute.xlu0 %1735
        %1737 = vrot.lane.b32.xlu0 %v268, 124
        %v1738 = vpop.permute.xlu0 %1737
        %vm1739 = vcmp.lt.s32.totalorder %v430, 124
        %v1740 = vsel %vm1739, %v1736, %v1738
        %v1741 = vsel %vm1739, %v1738, %v1736
        %1742 = vrot.lane.b32.xlu0 %v234, 124
        %v1743 = vpop.permute.xlu0 %1742
        %1744 = vrot.lane.b32.xlu0 %v435, 124
        %v1745 = vpop.permute.xlu0 %1744
        %v1746 = vsel %vm1739, %v1743, %v1745
        %v1747 = vsel %vm1739, %v1745, %v1743
        %v1750 = vcombine.low %v1740, %v1741
        %v1752 = vsub.f32 %v233, %v1750
        %v1753 = vmul.f32 %v1752, %v1752
        %v1755 = vcombine.high %v1753, %v1753
        %v1757 = vsel %vm239, %v1753, 0.0
        %v1758 = vrot.slane %v1757, 4
        %v1759 = vadd.f32 %v1757, %v1758
        %v1760 = vrot.slane %v1759, 2
        %v1761 = vadd.f32 %v1759, %v1760
        %v1762 = vrot.slane %v1761, 1
        %v1763 = vadd.f32 %v1761, %v1762
        %v1764 = vsel %vm239, %v1755, 0.0
        %v1765 = vrot.slane %v1764, 4
        %v1766 = vadd.f32 %v1764, %v1765
        %v1767 = vrot.slane %v1766, 2
        %v1768 = vadd.f32 %v1766, %v1767
        %v1769 = vrot.slane %v1768, 1
        %v1770 = vadd.f32 %v1768, %v1769
        %v1771 = vmul.f32 %v355, %v424
        %v1772 = vrsqrt.pop %v1763
        %v1773 = vmul.f32 %v1763, %v1772
        %vm1774 = vcmp.eq.f32.partialorder %v1763, inf
        %v1775 = vsel %vm1774, %v1763, %v1773
        %vm1776 = vcmp.eq.f32.partialorder %v1763, 0.0
        %v1777 = vand.u32 %v1763, 2147483648
        %v1778 = vsel %vm1776, %v1777, %v1775
        %v1779 = vrsqrt.pop %v1770
        %v1780 = vmul.f32 %v1770, %v1779
        %vm1781 = vcmp.eq.f32.partialorder %v1770, inf
        %v1782 = vsel %vm1781, %v1770, %v1780
        %vm1783 = vcmp.eq.f32.partialorder %v1770, 0.0
        %v1784 = vand.u32 %v1770, 2147483648
        %v1785 = vsel %vm1783, %v1784, %v1782
        %v1786 = vmul.f32 %v1778, 0.8
        %v1787 = vmul.f32 %v1785, 0.8
        %v1790 = vcombine.low %v1786, %v1787
        %v1792 = vunpack.c.l.s4 1966171168
        %v1793 = vunpack.c.0.s8 %v1792
        %v1794 = vlaneseq
        %v1795 = vshrl.u32 %v1794, 7
        %v1796 = vsub.s32 %v1793, %v1795
        %v1797 = vrot.slane %v1790, %v1796
        %v1799 = vunpack.c.l.s4 1966171168
        %v1800 = vunpack.c.0.s8 %v1799
        %v1801 = vlaneseq
        %v1802 = vshrl.u32 %v1801, 7
        %v1803 = vsub.s32 %v1800, %v1802
        %v1804 = vrot.slane %v1797, %v1803
        %v1806 = vmul.f32 %v1771, %v1804
        %v1808 = vlaneseq
        %v1809 = vshrl.u32 %v1808, 7
        %v1810 = vsub.s32 0, %v1809
        %v1811 = vrot.slane %v1806, %v1810
        %v1812 = vlaneseq
        %v1813 = vshrl.u32 %v1812, 7
        %v1814 = vsub.s32 1, %v1813
        %v1815 = vrot.slane %v1806, %v1814
        %v1818 = vmul.f32 %v1811, %v1746
        %v1819 = vmul.f32 %v1815, %v1747
        %v1820 = vadd.f32 %v1472, %v1818
        %v1821 = vadd.f32 %v1473, %v1819
        %1822 = vrot.lane.b32.xlu0 %v233, 117
        %v1823 = vpop.permute.xlu0 %1822
        %1824 = vrot.lane.b32.xlu0 %v268, 117
        %v1825 = vpop.permute.xlu0 %1824
        %vm1826 = vcmp.lt.s32.totalorder %v430, 117
        %v1827 = vsel %vm1826, %v1823, %v1825
        %v1828 = vsel %vm1826, %v1825, %v1823
        %1829 = vrot.lane.b32.xlu0 %v234, 117
        %v1830 = vpop.permute.xlu0 %1829
        %1831 = vrot.lane.b32.xlu0 %v435, 117
        %v1832 = vpop.permute.xlu0 %1831
        %v1833 = vsel %vm1826, %v1830, %v1832
        %v1834 = vsel %vm1826, %v1832, %v1830
        %v1837 = vcombine.low %v1827, %v1828
        %v1839 = vsub.f32 %v233, %v1837
        %v1840 = vmul.f32 %v1839, %v1839
        %v1842 = vcombine.high %v1840, %v1840
        %v1844 = vsel %vm239, %v1840, 0.0
        %v1845 = vrot.slane %v1844, 4
        %v1846 = vadd.f32 %v1844, %v1845
        %v1847 = vrot.slane %v1846, 2
        %v1848 = vadd.f32 %v1846, %v1847
        %v1849 = vrot.slane %v1848, 1
        %v1850 = vadd.f32 %v1848, %v1849
        %v1851 = vsel %vm239, %v1842, 0.0
        %v1852 = vrot.slane %v1851, 4
        %v1853 = vadd.f32 %v1851, %v1852
        %v1854 = vrot.slane %v1853, 2
        %v1855 = vadd.f32 %v1853, %v1854
        %v1856 = vrot.slane %v1855, 1
        %v1857 = vadd.f32 %v1855, %v1856
        %v1858 = vmul.f32 %v360, %v380
        %v1859 = vrsqrt.pop %v1850
        %v1860 = vmul.f32 %v1850, %v1859
        %vm1861 = vcmp.eq.f32.partialorder %v1850, inf
        %v1862 = vsel %vm1861, %v1850, %v1860
        %vm1863 = vcmp.eq.f32.partialorder %v1850, 0.0
        %v1864 = vand.u32 %v1850, 2147483648
        %v1865 = vsel %vm1863, %v1864, %v1862
        %v1866 = vrsqrt.pop %v1857
        %v1867 = vmul.f32 %v1857, %v1866
        %vm1868 = vcmp.eq.f32.partialorder %v1857, inf
        %v1869 = vsel %vm1868, %v1857, %v1867
        %vm1870 = vcmp.eq.f32.partialorder %v1857, 0.0
        %v1871 = vand.u32 %v1857, 2147483648
        %v1872 = vsel %vm1870, %v1871, %v1869
        %v1873 = vmul.f32 %v1865, 0.65
        %v1874 = vmul.f32 %v1872, 0.65
        %v1877 = vcombine.low %v1873, %v1874
        %v1879 = vunpack.c.l.s4 1966171168
        %v1880 = vunpack.c.0.s8 %v1879
        %v1881 = vlaneseq
        %v1882 = vshrl.u32 %v1881, 7
        %v1883 = vsub.s32 %v1880, %v1882
        %v1884 = vrot.slane %v1877, %v1883
        %v1886 = vunpack.c.l.s4 1966171168
        %v1887 = vunpack.c.0.s8 %v1886
        %v1888 = vlaneseq
        %v1889 = vshrl.u32 %v1888, 7
        %v1890 = vsub.s32 %v1887, %v1889
        %v1891 = vrot.slane %v1884, %v1890
        %v1893 = vmul.f32 %v1858, %v1891
        %v1895 = vlaneseq
        %v1896 = vshrl.u32 %v1895, 7
        %v1897 = vsub.s32 0, %v1896
        %v1898 = vrot.slane %v1893, %v1897
        %v1899 = vlaneseq
        %v1900 = vshrl.u32 %v1899, 7
        %v1901 = vsub.s32 1, %v1900
        %v1902 = vrot.slane %v1893, %v1901
        %v1905 = vmul.f32 %v1898, %v1833
        %v1906 = vmul.f32 %v1902, %v1834
        %v1907 = vadd.f32 %v1559, %v1905
        %v1908 = vadd.f32 %v1560, %v1906
        %1909 = vrot.lane.b32.xlu0 %v233, 116
        %v1910 = vpop.permute.xlu0 %1909
        %1911 = vrot.lane.b32.xlu0 %v268, 116
        %v1912 = vpop.permute.xlu0 %1911
        %vm1913 = vcmp.lt.s32.totalorder %v430, 116
        %v1914 = vsel %vm1913, %v1910, %v1912
        %v1915 = vsel %vm1913, %v1912, %v1910
        %1916 = vrot.lane.b32.xlu0 %v234, 116
        %v1917 = vpop.permute.xlu0 %1916
        %1918 = vrot.lane.b32.xlu0 %v435, 116
        %v1919 = vpop.permute.xlu0 %1918
        %v1920 = vsel %vm1913, %v1917, %v1919
        %v1921 = vsel %vm1913, %v1919, %v1917
        %v1924 = vcombine.low %v1914, %v1915
        %v1926 = vsub.f32 %v233, %v1924
        %v1927 = vmul.f32 %v1926, %v1926
        %v1929 = vcombine.high %v1927, %v1927
        %v1931 = vsel %vm239, %v1927, 0.0
        %v1932 = vrot.slane %v1931, 4
        %v1933 = vadd.f32 %v1931, %v1932
        %v1934 = vrot.slane %v1933, 2
        %v1935 = vadd.f32 %v1933, %v1934
        %v1936 = vrot.slane %v1935, 1
        %v1937 = vadd.f32 %v1935, %v1936
        %v1938 = vsel %vm239, %v1929, 0.0
        %v1939 = vrot.slane %v1938, 4
        %v1940 = vadd.f32 %v1938, %v1939
        %v1941 = vrot.slane %v1940, 2
        %v1942 = vadd.f32 %v1940, %v1941
        %v1943 = vrot.slane %v1942, 1
        %v1944 = vadd.f32 %v1942, %v1943
        %v1945 = vmul.f32 %v360, %v385
        %v1946 = vrsqrt.pop %v1937
        %v1947 = vmul.f32 %v1937, %v1946
        %vm1948 = vcmp.eq.f32.partialorder %v1937, inf
        %v1949 = vsel %vm1948, %v1937, %v1947
        %vm1950 = vcmp.eq.f32.partialorder %v1937, 0.0
        %v1951 = vand.u32 %v1937, 2147483648
        %v1952 = vsel %vm1950, %v1951, %v1949
        %v1953 = vrsqrt.pop %v1944
        %v1954 = vmul.f32 %v1944, %v1953
        %vm1955 = vcmp.eq.f32.partialorder %v1944, inf
        %v1956 = vsel %vm1955, %v1944, %v1954
        %vm1957 = vcmp.eq.f32.partialorder %v1944, 0.0
        %v1958 = vand.u32 %v1944, 2147483648
        %v1959 = vsel %vm1957, %v1958, %v1956
        %v1960 = vmul.f32 %v1952, 0.85
        %v1961 = vmul.f32 %v1959, 0.85
        %v1964 = vcombine.low %v1960, %v1961
        %v1966 = vunpack.c.l.s4 1966171168
        %v1967 = vunpack.c.0.s8 %v1966
        %v1968 = vlaneseq
        %v1969 = vshrl.u32 %v1968, 7
        %v1970 = vsub.s32 %v1967, %v1969
        %v1971 = vrot.slane %v1964, %v1970
        %v1973 = vunpack.c.l.s4 1966171168
        %v1974 = vunpack.c.0.s8 %v1973
        %v1975 = vlaneseq
        %v1976 = vshrl.u32 %v1975, 7
        %v1977 = vsub.s32 %v1974, %v1976
        %v1978 = vrot.slane %v1971, %v1977
        %v1980 = vmul.f32 %v1945, %v1978
        %v1982 = vlaneseq
        %v1983 = vshrl.u32 %v1982, 7
        %v1984 = vsub.s32 0, %v1983
        %v1985 = vrot.slane %v1980, %v1984
        %v1986 = vlaneseq
        %v1987 = vshrl.u32 %v1986, 7
        %v1988 = vsub.s32 1, %v1987
        %v1989 = vrot.slane %v1980, %v1988
        %v1992 = vmul.f32 %v1985, %v1920
        %v1993 = vmul.f32 %v1989, %v1921
        %v1994 = vadd.f32 %v1646, %v1992
        %v1995 = vadd.f32 %v1647, %v1993
        %1996 = vrot.lane.b32.xlu0 %v233, 108
        %v1997 = vpop.permute.xlu0 %1996
        %1998 = vrot.lane.b32.xlu0 %v268, 108
        %v1999 = vpop.permute.xlu0 %1998
        %vm2000 = vcmp.lt.s32.totalorder %v430, 108
        %v2001 = vsel %vm2000, %v1997, %v1999
        %v2002 = vsel %vm2000, %v1999, %v1997
        %2003 = vrot.lane.b32.xlu0 %v234, 108
        %v2004 = vpop.permute.xlu0 %2003
        %2005 = vrot.lane.b32.xlu0 %v435, 108
        %v2006 = vpop.permute.xlu0 %2005
        %v2007 = vsel %vm2000, %v2004, %v2006
        %v2008 = vsel %vm2000, %v2006, %v2004
        %v2011 = vcombine.low %v2001, %v2002
        %v2013 = vsub.f32 %v233, %v2011
        %v2014 = vmul.f32 %v2013, %v2013
        %v2016 = vcombine.high %v2014, %v2014
        %v2018 = vsel %vm239, %v2014, 0.0
        %v2019 = vrot.slane %v2018, 4
        %v2020 = vadd.f32 %v2018, %v2019
        %v2021 = vrot.slane %v2020, 2
        %v2022 = vadd.f32 %v2020, %v2021
        %v2023 = vrot.slane %v2022, 1
        %v2024 = vadd.f32 %v2022, %v2023
        %v2025 = vsel %vm239, %v2016, 0.0
        %v2026 = vrot.slane %v2025, 4
        %v2027 = vadd.f32 %v2025, %v2026
        %v2028 = vrot.slane %v2027, 2
        %v2029 = vadd.f32 %v2027, %v2028
        %v2030 = vrot.slane %v2029, 1
        %v2031 = vadd.f32 %v2029, %v2030
        %v2032 = vmul.f32 %v360, %v424
        %v2033 = vrsqrt.pop %v2024
        %v2034 = vmul.f32 %v2024, %v2033
        %vm2035 = vcmp.eq.f32.partialorder %v2024, inf
        %v2036 = vsel %vm2035, %v2024, %v2034
        %vm2037 = vcmp.eq.f32.partialorder %v2024, 0.0
        %v2038 = vand.u32 %v2024, 2147483648
        %v2039 = vsel %vm2037, %v2038, %v2036
        %v2040 = vrsqrt.pop %v2031
        %v2041 = vmul.f32 %v2031, %v2040
        %vm2042 = vcmp.eq.f32.partialorder %v2031, inf
        %v2043 = vsel %vm2042, %v2031, %v2041
        %vm2044 = vcmp.eq.f32.partialorder %v2031, 0.0
        %v2045 = vand.u32 %v2031, 2147483648
        %v2046 = vsel %vm2044, %v2045, %v2043
        %v2047 = vmul.f32 %v2039, 0.85
        %v2048 = vmul.f32 %v2046, 0.85
        %v2051 = vcombine.low %v2047, %v2048
        %v2053 = vunpack.c.l.s4 1966171168
        %v2054 = vunpack.c.0.s8 %v2053
        %v2055 = vlaneseq
        %v2056 = vshrl.u32 %v2055, 7
        %v2057 = vsub.s32 %v2054, %v2056
        %v2058 = vrot.slane %v2051, %v2057
        %v2060 = vunpack.c.l.s4 1966171168
        %v2061 = vunpack.c.0.s8 %v2060
        %v2062 = vlaneseq
        %v2063 = vshrl.u32 %v2062, 7
        %v2064 = vsub.s32 %v2061, %v2063
        %v2065 = vrot.slane %v2058, %v2064
        %v2067 = vmul.f32 %v2032, %v2065
        %v2069 = vlaneseq
        %v2070 = vshrl.u32 %v2069, 7
        %v2071 = vsub.s32 0, %v2070
        %v2072 = vrot.slane %v2067, %v2071
        %v2073 = vlaneseq
        %v2074 = vshrl.u32 %v2073, 7
        %v2075 = vsub.s32 1, %v2074
        %v2076 = vrot.slane %v2067, %v2075
        %v2079 = vmul.f32 %v2072, %v2007
        %v2080 = vmul.f32 %v2076, %v2008
        %v2081 = vadd.f32 %v1733, %v2079
        %v2082 = vadd.f32 %v1734, %v2080
        %2083 = vrot.lane.b32.xlu0 %v233, 101
        %v2084 = vpop.permute.xlu0 %2083
        %2085 = vrot.lane.b32.xlu0 %v268, 101
        %v2086 = vpop.permute.xlu0 %2085
        %vm2087 = vcmp.lt.s32.totalorder %v430, 101
        %v2088 = vsel %vm2087, %v2084, %v2086
        %v2089 = vsel %vm2087, %v2086, %v2084
        %2090 = vrot.lane.b32.xlu0 %v234, 101
        %v2091 = vpop.permute.xlu0 %2090
        %2092 = vrot.lane.b32.xlu0 %v435, 101
        %v2093 = vpop.permute.xlu0 %2092
        %v2094 = vsel %vm2087, %v2091, %v2093
        %v2095 = vsel %vm2087, %v2093, %v2091
        %v2098 = vcombine.low %v2088, %v2089
        %v2100 = vsub.f32 %v233, %v2098
        %v2101 = vmul.f32 %v2100, %v2100
        %v2103 = vcombine.high %v2101, %v2101
        %v2105 = vsel %vm239, %v2101, 0.0
        %v2106 = vrot.slane %v2105, 4
        %v2107 = vadd.f32 %v2105, %v2106
        %v2108 = vrot.slane %v2107, 2
        %v2109 = vadd.f32 %v2107, %v2108
        %v2110 = vrot.slane %v2109, 1
        %v2111 = vadd.f32 %v2109, %v2110
        %v2112 = vsel %vm239, %v2103, 0.0
        %v2113 = vrot.slane %v2112, 4
        %v2114 = vadd.f32 %v2112, %v2113
        %v2115 = vrot.slane %v2114, 2
        %v2116 = vadd.f32 %v2114, %v2115
        %v2117 = vrot.slane %v2116, 1
        %v2118 = vadd.f32 %v2116, %v2117
        %v2119 = vmul.f32 %v365, %v380
        %v2120 = vrsqrt.pop %v2111
        %v2121 = vmul.f32 %v2111, %v2120
        %vm2122 = vcmp.eq.f32.partialorder %v2111, inf
        %v2123 = vsel %vm2122, %v2111, %v2121
        %vm2124 = vcmp.eq.f32.partialorder %v2111, 0.0
        %v2125 = vand.u32 %v2111, 2147483648
        %v2126 = vsel %vm2124, %v2125, %v2123
        %v2127 = vrsqrt.pop %v2118
        %v2128 = vmul.f32 %v2118, %v2127
        %vm2129 = vcmp.eq.f32.partialorder %v2118, inf
        %v2130 = vsel %vm2129, %v2118, %v2128
        %vm2131 = vcmp.eq.f32.partialorder %v2118, 0.0
        %v2132 = vand.u32 %v2118, 2147483648
        %v2133 = vsel %vm2131, %v2132, %v2130
        %v2134 = vmul.f32 %v2126, 0.725
        %v2135 = vmul.f32 %v2133, 0.725
        %v2138 = vcombine.low %v2134, %v2135
        %v2140 = vunpack.c.l.s4 1966171168
        %v2141 = vunpack.c.0.s8 %v2140
        %v2142 = vlaneseq
        %v2143 = vshrl.u32 %v2142, 7
        %v2144 = vsub.s32 %v2141, %v2143
        %v2145 = vrot.slane %v2138, %v2144
        %v2147 = vunpack.c.l.s4 1966171168
        %v2148 = vunpack.c.0.s8 %v2147
        %v2149 = vlaneseq
        %v2150 = vshrl.u32 %v2149, 7
        %v2151 = vsub.s32 %v2148, %v2150
        %v2152 = vrot.slane %v2145, %v2151
        %v2154 = vmul.f32 %v2119, %v2152
        %v2156 = vlaneseq
        %v2157 = vshrl.u32 %v2156, 7
        %v2158 = vsub.s32 0, %v2157
        %v2159 = vrot.slane %v2154, %v2158
        %v2160 = vlaneseq
        %v2161 = vshrl.u32 %v2160, 7
        %v2162 = vsub.s32 1, %v2161
        %v2163 = vrot.slane %v2154, %v2162
        %v2166 = vmul.f32 %v2159, %v2094
        %v2167 = vmul.f32 %v2163, %v2095
        %v2168 = vadd.f32 %v1820, %v2166
        %v2169 = vadd.f32 %v1821, %v2167
        %2170 = vrot.lane.b32.xlu0 %v233, 100
        %v2171 = vpop.permute.xlu0 %2170
        %2172 = vrot.lane.b32.xlu0 %v268, 100
        %v2173 = vpop.permute.xlu0 %2172
        %vm2174 = vcmp.lt.s32.totalorder %v430, 100
        %v2175 = vsel %vm2174, %v2171, %v2173
        %v2176 = vsel %vm2174, %v2173, %v2171
        %2177 = vrot.lane.b32.xlu0 %v234, 100
        %v2178 = vpop.permute.xlu0 %2177
        %2179 = vrot.lane.b32.xlu0 %v435, 100
        %v2180 = vpop.permute.xlu0 %2179
        %v2181 = vsel %vm2174, %v2178, %v2180
        %v2182 = vsel %vm2174, %v2180, %v2178
        %v2185 = vcombine.low %v2175, %v2176
        %v2187 = vsub.f32 %v233, %v2185
        %v2188 = vmul.f32 %v2187, %v2187
        %v2190 = vcombine.high %v2188, %v2188
        %v2192 = vsel %vm239, %v2188, 0.0
        %v2193 = vrot.slane %v2192, 4
        %v2194 = vadd.f32 %v2192, %v2193
        %v2195 = vrot.slane %v2194, 2
        %v2196 = vadd.f32 %v2194, %v2195
        %v2197 = vrot.slane %v2196, 1
        %v2198 = vadd.f32 %v2196, %v2197
        %v2199 = vsel %vm239, %v2190, 0.0
        %v2200 = vrot.slane %v2199, 4
        %v2201 = vadd.f32 %v2199, %v2200
        %v2202 = vrot.slane %v2201, 2
        %v2203 = vadd.f32 %v2201, %v2202
        %v2204 = vrot.slane %v2203, 1
        %v2205 = vadd.f32 %v2203, %v2204
        %v2206 = vmul.f32 %v365, %v385
        %v2207 = vrsqrt.pop %v2198
        %v2208 = vmul.f32 %v2198, %v2207
        %vm2209 = vcmp.eq.f32.partialorder %v2198, inf
        %v2210 = vsel %vm2209, %v2198, %v2208
        %vm2211 = vcmp.eq.f32.partialorder %v2198, 0.0
        %v2212 = vand.u32 %v2198, 2147483648
        %v2213 = vsel %vm2211, %v2212, %v2210
        %v2214 = vrsqrt.pop %v2205
        %v2215 = vmul.f32 %v2205, %v2214
        %vm2216 = vcmp.eq.f32.partialorder %v2205, inf
        %v2217 = vsel %vm2216, %v2205, %v2215
        %vm2218 = vcmp.eq.f32.partialorder %v2205, 0.0
        %v2219 = vand.u32 %v2205, 2147483648
        %v2220 = vsel %vm2218, %v2219, %v2217
        %v2223 = vcombine.low %v2213, %v2220
        %v2225 = vunpack.c.l.s4 1966171168
        %v2226 = vunpack.c.0.s8 %v2225
        %v2227 = vlaneseq
        %v2228 = vshrl.u32 %v2227, 7
        %v2229 = vsub.s32 %v2226, %v2228
        %v2230 = vrot.slane %v2223, %v2229
        %v2232 = vunpack.c.l.s4 1966171168
        %v2233 = vunpack.c.0.s8 %v2232
        %v2234 = vlaneseq
        %v2235 = vshrl.u32 %v2234, 7
        %v2236 = vsub.s32 %v2233, %v2235
        %v2237 = vrot.slane %v2230, %v2236
        %v2239 = vmul.f32 %v2206, %v2237
        %v2241 = vlaneseq
        %v2242 = vshrl.u32 %v2241, 7
        %v2243 = vsub.s32 0, %v2242
        %v2244 = vrot.slane %v2239, %v2243
        %v2245 = vlaneseq
        %v2246 = vshrl.u32 %v2245, 7
        %v2247 = vsub.s32 1, %v2246
        %v2248 = vrot.slane %v2239, %v2247
        %v2251 = vmul.f32 %v2244, %v2181
        %v2252 = vmul.f32 %v2248, %v2182
        %v2253 = vadd.f32 %v1907, %v2251
        %v2254 = vadd.f32 %v1908, %v2252
        %2255 = vrot.lane.b32.xlu0 %v233, 92
        %v2256 = vpop.permute.xlu0 %2255
        %2257 = vrot.lane.b32.xlu0 %v268, 92
        %v2258 = vpop.permute.xlu0 %2257
        %vm2259 = vcmp.lt.s32.totalorder %v430, 92
        %v2260 = vsel %vm2259, %v2256, %v2258
        %v2261 = vsel %vm2259, %v2258, %v2256
        %2262 = vrot.lane.b32.xlu0 %v234, 92
        %v2263 = vpop.permute.xlu0 %2262
        %2264 = vrot.lane.b32.xlu0 %v435, 92
        %v2265 = vpop.permute.xlu0 %2264
        %v2266 = vsel %vm2259, %v2263, %v2265
        %v2267 = vsel %vm2259, %v2265, %v2263
        %v2270 = vcombine.low %v2260, %v2261
        %v2272 = vsub.f32 %v233, %v2270
        %v2273 = vmul.f32 %v2272, %v2272
        %v2275 = vcombine.high %v2273, %v2273
        %v2277 = vsel %vm239, %v2273, 0.0
        %v2278 = vrot.slane %v2277, 4
        %v2279 = vadd.f32 %v2277, %v2278
        %v2280 = vrot.slane %v2279, 2
        %v2281 = vadd.f32 %v2279, %v2280
        %v2282 = vrot.slane %v2281, 1
        %v2283 = vadd.f32 %v2281, %v2282
        %v2284 = vsel %vm239, %v2275, 0.0
        %v2285 = vrot.slane %v2284, 4
        %v2286 = vadd.f32 %v2284, %v2285
        %v2287 = vrot.slane %v2286, 2
        %v2288 = vadd.f32 %v2286, %v2287
        %v2289 = vrot.slane %v2288, 1
        %v2290 = vadd.f32 %v2288, %v2289
        %v2291 = vmul.f32 %v365, %v424
        %v2292 = vrsqrt.pop %v2283
        %v2293 = vmul.f32 %v2283, %v2292
        %vm2294 = vcmp.eq.f32.partialorder %v2283, inf
        %v2295 = vsel %vm2294, %v2283, %v2293
        %vm2296 = vcmp.eq.f32.partialorder %v2283, 0.0
        %v2297 = vand.u32 %v2283, 2147483648
        %v2298 = vsel %vm2296, %v2297, %v2295
        %v2299 = vrsqrt.pop %v2290
        %v2300 = vmul.f32 %v2290, %v2299
        %vm2301 = vcmp.eq.f32.partialorder %v2290, inf
        %v2302 = vsel %vm2301, %v2290, %v2300
        %vm2303 = vcmp.eq.f32.partialorder %v2290, 0.0
        %v2304 = vand.u32 %v2290, 2147483648
        %v2305 = vsel %vm2303, %v2304, %v2302
        %v2308 = vcombine.low %v2298, %v2305
        %v2310 = vunpack.c.l.s4 1966171168
        %v2311 = vunpack.c.0.s8 %v2310
        %v2312 = vlaneseq
        %v2313 = vshrl.u32 %v2312, 7
        %v2314 = vsub.s32 %v2311, %v2313
        %v2315 = vrot.slane %v2308, %v2314
        %v2317 = vunpack.c.l.s4 1966171168
        %v2318 = vunpack.c.0.s8 %v2317
        %v2319 = vlaneseq
        %v2320 = vshrl.u32 %v2319, 7
        %v2321 = vsub.s32 %v2318, %v2320
        %v2322 = vrot.slane %v2315, %v2321
        %v2324 = vmul.f32 %v2291, %v2322
        %v2326 = vlaneseq
        %v2327 = vshrl.u32 %v2326, 7
        %v2328 = vsub.s32 0, %v2327
        %v2329 = vrot.slane %v2324, %v2328
        %v2330 = vlaneseq
        %v2331 = vshrl.u32 %v2330, 7
        %v2332 = vsub.s32 1, %v2331
        %v2333 = vrot.slane %v2324, %v2332
        %v2336 = vmul.f32 %v2329, %v2266
        %v2337 = vmul.f32 %v2333, %v2267
        %v2338 = vadd.f32 %v1994, %v2336
        %v2339 = vadd.f32 %v1995, %v2337
        %v2340 = vcombine.low %v432, %v433
        %v2342 = vsub.f32 %v233, %v2340
        %v2343 = vmul.f32 %v2342, %v2342
        %v2345 = vcombine.high %v2343, %v2343
        %v2347 = vsel %vm239, %v2343, 0.0
        %v2348 = vrot.slane %v2347, 4
        %v2349 = vadd.f32 %v2347, %v2348
        %v2350 = vrot.slane %v2349, 2
        %v2351 = vadd.f32 %v2349, %v2350
        %v2352 = vrot.slane %v2351, 1
        %v2353 = vadd.f32 %v2351, %v2352
        %v2354 = vsel %vm239, %v2345, 0.0
        %v2355 = vrot.slane %v2354, 4
        %v2356 = vadd.f32 %v2354, %v2355
        %v2357 = vrot.slane %v2356, 2
        %v2358 = vadd.f32 %v2356, %v2357
        %v2359 = vrot.slane %v2358, 1
        %v2360 = vadd.f32 %v2358, %v2359
        %v2361 = vmul.f32 %v370, %v380
        %v2362 = vrsqrt.pop %v2353
        %v2363 = vmul.f32 %v2353, %v2362
        %vm2364 = vcmp.eq.f32.partialorder %v2353, inf
        %v2365 = vsel %vm2364, %v2353, %v2363
        %vm2366 = vcmp.eq.f32.partialorder %v2353, 0.0
        %v2367 = vand.u32 %v2353, 2147483648
        %v2368 = vsel %vm2366, %v2367, %v2365
        %v2369 = vrsqrt.pop %v2360
        %v2370 = vmul.f32 %v2360, %v2369
        %vm2371 = vcmp.eq.f32.partialorder %v2360, inf
        %v2372 = vsel %vm2371, %v2360, %v2370
        %vm2373 = vcmp.eq.f32.partialorder %v2360, 0.0
        %v2374 = vand.u32 %v2360, 2147483648
        %v2375 = vsel %vm2373, %v2374, %v2372
        %v2376 = vmul.f32 %v2368, 0.85
        %v2377 = vmul.f32 %v2375, 0.85
        %v2380 = vcombine.low %v2376, %v2377
        %v2382 = vunpack.c.l.s4 1966171168
        %v2383 = vunpack.c.0.s8 %v2382
        %v2384 = vlaneseq
        %v2385 = vshrl.u32 %v2384, 7
        %v2386 = vsub.s32 %v2383, %v2385
        %v2387 = vrot.slane %v2380, %v2386
        %v2389 = vunpack.c.l.s4 1966171168
        %v2390 = vunpack.c.0.s8 %v2389
        %v2391 = vlaneseq
        %v2392 = vshrl.u32 %v2391, 7
        %v2393 = vsub.s32 %v2390, %v2392
        %v2394 = vrot.slane %v2387, %v2393
        %v2396 = vmul.f32 %v2361, %v2394
        %v2398 = vlaneseq
        %v2399 = vshrl.u32 %v2398, 7
        %v2400 = vsub.s32 0, %v2399
        %v2401 = vrot.slane %v2396, %v2400
        %v2402 = vlaneseq
        %v2403 = vshrl.u32 %v2402, 7
        %v2404 = vsub.s32 1, %v2403
        %v2405 = vrot.slane %v2396, %v2404
        %v2408 = vmul.f32 %v2401, %v441
        %v2409 = vmul.f32 %v2405, %v442
        %v2410 = vadd.f32 %v2081, %v2408
        %v2411 = vadd.f32 %v2082, %v2409
        %v2412 = vcombine.low %v522, %v523
        %v2414 = vsub.f32 %v233, %v2412
        %v2415 = vmul.f32 %v2414, %v2414
        %v2417 = vcombine.high %v2415, %v2415
        %v2419 = vsel %vm239, %v2415, 0.0
        %v2420 = vrot.slane %v2419, 4
        %v2421 = vadd.f32 %v2419, %v2420
        %v2422 = vrot.slane %v2421, 2
        %v2423 = vadd.f32 %v2421, %v2422
        %v2424 = vrot.slane %v2423, 1
        %v2425 = vadd.f32 %v2423, %v2424
        %v2426 = vsel %vm239, %v2417, 0.0
        %v2427 = vrot.slane %v2426, 4
        %v2428 = vadd.f32 %v2426, %v2427
        %v2429 = vrot.slane %v2428, 2
        %v2430 = vadd.f32 %v2428, %v2429
        %v2431 = vrot.slane %v2430, 1
        %v2432 = vadd.f32 %v2430, %v2431
        %v2433 = vmul.f32 %v370, %v385
        %v2434 = vrsqrt.pop %v2425
        %v2435 = vmul.f32 %v2425, %v2434
        %vm2436 = vcmp.eq.f32.partialorder %v2425, inf
        %v2437 = vsel %vm2436, %v2425, %v2435
        %vm2438 = vcmp.eq.f32.partialorder %v2425, 0.0
        %v2439 = vand.u32 %v2425, 2147483648
        %v2440 = vsel %vm2438, %v2439, %v2437
        %v2441 = vrsqrt.pop %v2432
        %v2442 = vmul.f32 %v2432, %v2441
        %vm2443 = vcmp.eq.f32.partialorder %v2432, inf
        %v2444 = vsel %vm2443, %v2432, %v2442
        %vm2445 = vcmp.eq.f32.partialorder %v2432, 0.0
        %v2446 = vand.u32 %v2432, 2147483648
        %v2447 = vsel %vm2445, %v2446, %v2444
        %v2448 = vmul.f32 %v2440, 1.25
        %v2449 = vmul.f32 %v2447, 1.25
        %v2452 = vcombine.low %v2448, %v2449
        %v2454 = vunpack.c.l.s4 1966171168
        %v2455 = vunpack.c.0.s8 %v2454
        %v2456 = vlaneseq
        %v2457 = vshrl.u32 %v2456, 7
        %v2458 = vsub.s32 %v2455, %v2457
        %v2459 = vrot.slane %v2452, %v2458
        %v2461 = vunpack.c.l.s4 1966171168
        %v2462 = vunpack.c.0.s8 %v2461
        %v2463 = vlaneseq
        %v2464 = vshrl.u32 %v2463, 7
        %v2465 = vsub.s32 %v2462, %v2464
        %v2466 = vrot.slane %v2459, %v2465
        %v2468 = vmul.f32 %v2433, %v2466
        %v2470 = vlaneseq
        %v2471 = vshrl.u32 %v2470, 7
        %v2472 = vsub.s32 0, %v2471
        %v2473 = vrot.slane %v2468, %v2472
        %v2474 = vlaneseq
        %v2475 = vshrl.u32 %v2474, 7
        %v2476 = vsub.s32 1, %v2475
        %v2477 = vrot.slane %v2468, %v2476
        %v2480 = vmul.f32 %v2473, %v528
        %v2481 = vmul.f32 %v2477, %v529
        %v2482 = vadd.f32 %v2168, %v2480
        %v2483 = vadd.f32 %v2169, %v2481
        %v2484 = vcombine.low %v609, %v610
        %v2486 = vsub.f32 %v233, %v2484
        %v2487 = vmul.f32 %v2486, %v2486
        %v2489 = vcombine.high %v2487, %v2487
        %v2491 = vsel %vm239, %v2487, 0.0
        %v2492 = vrot.slane %v2491, 4
        %v2493 = vadd.f32 %v2491, %v2492
        %v2494 = vrot.slane %v2493, 2
        %v2495 = vadd.f32 %v2493, %v2494
        %v2496 = vrot.slane %v2495, 1
        %v2497 = vadd.f32 %v2495, %v2496
        %v2498 = vsel %vm239, %v2489, 0.0
        %v2499 = vrot.slane %v2498, 4
        %v2500 = vadd.f32 %v2498, %v2499
        %v2501 = vrot.slane %v2500, 2
        %v2502 = vadd.f32 %v2500, %v2501
        %v2503 = vrot.slane %v2502, 1
        %v2504 = vadd.f32 %v2502, %v2503
        %v2505 = vmul.f32 %v370, %v390
        %v2506 = vrsqrt.pop %v2497
        %v2507 = vmul.f32 %v2497, %v2506
        %vm2508 = vcmp.eq.f32.partialorder %v2497, inf
        %v2509 = vsel %vm2508, %v2497, %v2507
        %vm2510 = vcmp.eq.f32.partialorder %v2497, 0.0
        %v2511 = vand.u32 %v2497, 2147483648
        %v2512 = vsel %vm2510, %v2511, %v2509
        %v2513 = vrsqrt.pop %v2504
        %v2514 = vmul.f32 %v2504, %v2513
        %vm2515 = vcmp.eq.f32.partialorder %v2504, inf
        %v2516 = vsel %vm2515, %v2504, %v2514
        %vm2517 = vcmp.eq.f32.partialorder %v2504, 0.0
        %v2518 = vand.u32 %v2504, 2147483648
        %v2519 = vsel %vm2517, %v2518, %v2516
        %v2520 = vmul.f32 %v2512, 0.9
        %v2521 = vmul.f32 %v2519, 0.9
        %v2524 = vcombine.low %v2520, %v2521
        %v2526 = vunpack.c.l.s4 1966171168
        %v2527 = vunpack.c.0.s8 %v2526
        %v2528 = vlaneseq
        %v2529 = vshrl.u32 %v2528, 7
        %v2530 = vsub.s32 %v2527, %v2529
        %v2531 = vrot.slane %v2524, %v2530
        %v2533 = vunpack.c.l.s4 1966171168
        %v2534 = vunpack.c.0.s8 %v2533
        %v2535 = vlaneseq
        %v2536 = vshrl.u32 %v2535, 7
        %v2537 = vsub.s32 %v2534, %v2536
        %v2538 = vrot.slane %v2531, %v2537
        %v2540 = vmul.f32 %v2505, %v2538
        %v2542 = vlaneseq
        %v2543 = vshrl.u32 %v2542, 7
        %v2544 = vsub.s32 0, %v2543
        %v2545 = vrot.slane %v2540, %v2544
        %v2546 = vlaneseq
        %v2547 = vshrl.u32 %v2546, 7
        %v2548 = vsub.s32 1, %v2547
        %v2549 = vrot.slane %v2540, %v2548
        %v2552 = vmul.f32 %v2545, %v615
        %v2553 = vmul.f32 %v2549, %v616
        %v2554 = vadd.f32 %v2253, %v2552
        %v2555 = vadd.f32 %v2254, %v2553
        %v2556 = vcombine.low %v1131, %v1132
        %v2558 = vsub.f32 %v233, %v2556
        %v2559 = vmul.f32 %v2558, %v2558
        %v2561 = vcombine.high %v2559, %v2559
        %v2563 = vsel %vm239, %v2559, 0.0
        %v2564 = vrot.slane %v2563, 4
        %v2565 = vadd.f32 %v2563, %v2564
        %v2566 = vrot.slane %v2565, 2
        %v2567 = vadd.f32 %v2565, %v2566
        %v2568 = vrot.slane %v2567, 1
        %v2569 = vadd.f32 %v2567, %v2568
        %v2570 = vsel %vm239, %v2561, 0.0
        %v2571 = vrot.slane %v2570, 4
        %v2572 = vadd.f32 %v2570, %v2571
        %v2573 = vrot.slane %v2572, 2
        %v2574 = vadd.f32 %v2572, %v2573
        %v2575 = vrot.slane %v2574, 1
        %v2576 = vadd.f32 %v2574, %v2575
        %v2577 = vmul.f32 %v370, %v419
        %v2578 = vrsqrt.pop %v2569
        %v2579 = vmul.f32 %v2569, %v2578
        %vm2580 = vcmp.eq.f32.partialorder %v2569, inf
        %v2581 = vsel %vm2580, %v2569, %v2579
        %vm2582 = vcmp.eq.f32.partialorder %v2569, 0.0
        %v2583 = vand.u32 %v2569, 2147483648
        %v2584 = vsel %vm2582, %v2583, %v2581
        %v2585 = vrsqrt.pop %v2576
        %v2586 = vmul.f32 %v2576, %v2585
        %vm2587 = vcmp.eq.f32.partialorder %v2576, inf
        %v2588 = vsel %vm2587, %v2576, %v2586
        %vm2589 = vcmp.eq.f32.partialorder %v2576, 0.0
        %v2590 = vand.u32 %v2576, 2147483648
        %v2591 = vsel %vm2589, %v2590, %v2588
        %v2592 = vmul.f32 %v2584, 0.9
        %v2593 = vmul.f32 %v2591, 0.9
        %v2596 = vcombine.low %v2592, %v2593
        %v2598 = vunpack.c.l.s4 1966171168
        %v2599 = vunpack.c.0.s8 %v2598
        %v2600 = vlaneseq
        %v2601 = vshrl.u32 %v2600, 7
        %v2602 = vsub.s32 %v2599, %v2601
        %v2603 = vrot.slane %v2596, %v2602
        %v2605 = vunpack.c.l.s4 1966171168
        %v2606 = vunpack.c.0.s8 %v2605
        %v2607 = vlaneseq
        %v2608 = vshrl.u32 %v2607, 7
        %v2609 = vsub.s32 %v2606, %v2608
        %v2610 = vrot.slane %v2603, %v2609
        %v2612 = vmul.f32 %v2577, %v2610
        %v2614 = vlaneseq
        %v2615 = vshrl.u32 %v2614, 7
        %v2616 = vsub.s32 0, %v2615
        %v2617 = vrot.slane %v2612, %v2616
        %v2618 = vlaneseq
        %v2619 = vshrl.u32 %v2618, 7
        %v2620 = vsub.s32 1, %v2619
        %v2621 = vrot.slane %v2612, %v2620
        %v2624 = vmul.f32 %v2617, %v1137
        %v2625 = vmul.f32 %v2621, %v1138
        %v2626 = vadd.f32 %v2338, %v2624
        %v2627 = vadd.f32 %v2339, %v2625
        %v2628 = vcombine.low %v1218, %v1219
        %v2630 = vsub.f32 %v233, %v2628
        %v2631 = vmul.f32 %v2630, %v2630
        %v2633 = vcombine.high %v2631, %v2631
        %v2635 = vsel %vm239, %v2631, 0.0
        %v2636 = vrot.slane %v2635, 4
        %v2637 = vadd.f32 %v2635, %v2636
        %v2638 = vrot.slane %v2637, 2
        %v2639 = vadd.f32 %v2637, %v2638
        %v2640 = vrot.slane %v2639, 1
        %v2641 = vadd.f32 %v2639, %v2640
        %v2642 = vsel %vm239, %v2633, 0.0
        %v2643 = vrot.slane %v2642, 4
        %v2644 = vadd.f32 %v2642, %v2643
        %v2645 = vrot.slane %v2644, 2
        %v2646 = vadd.f32 %v2644, %v2645
        %v2647 = vrot.slane %v2646, 1
        %v2648 = vadd.f32 %v2646, %v2647
        %v2649 = vmul.f32 %v370, %v424
        %v2650 = vrsqrt.pop %v2641
        %v2651 = vmul.f32 %v2641, %v2650
        %vm2652 = vcmp.eq.f32.partialorder %v2641, inf
        %v2653 = vsel %vm2652, %v2641, %v2651
        %vm2654 = vcmp.eq.f32.partialorder %v2641, 0.0
        %v2655 = vand.u32 %v2641, 2147483648
        %v2656 = vsel %vm2654, %v2655, %v2653
        %v2657 = vrsqrt.pop %v2648
        %v2658 = vmul.f32 %v2648, %v2657
        %vm2659 = vcmp.eq.f32.partialorder %v2648, inf
        %v2660 = vsel %vm2659, %v2648, %v2658
        %vm2661 = vcmp.eq.f32.partialorder %v2648, 0.0
        %v2662 = vand.u32 %v2648, 2147483648
        %v2663 = vsel %vm2661, %v2662, %v2660
        %v2664 = vmul.f32 %v2656, 1.25
        %v2665 = vmul.f32 %v2663, 1.25
        %v2668 = vcombine.low %v2664, %v2665
        %v2670 = vunpack.c.l.s4 1966171168
        %v2671 = vunpack.c.0.s8 %v2670
        %v2672 = vlaneseq
        %v2673 = vshrl.u32 %v2672, 7
        %v2674 = vsub.s32 %v2671, %v2673
        %v2675 = vrot.slane %v2668, %v2674
        %v2677 = vunpack.c.l.s4 1966171168
        %v2678 = vunpack.c.0.s8 %v2677
        %v2679 = vlaneseq
        %v2680 = vshrl.u32 %v2679, 7
        %v2681 = vsub.s32 %v2678, %v2680
        %v2682 = vrot.slane %v2675, %v2681
        %v2684 = vmul.f32 %v2649, %v2682
        %v2686 = vlaneseq
        %v2687 = vshrl.u32 %v2686, 7
        %v2688 = vsub.s32 0, %v2687
        %v2689 = vrot.slane %v2684, %v2688
        %v2690 = vlaneseq
        %v2691 = vshrl.u32 %v2690, 7
        %v2692 = vsub.s32 1, %v2691
        %v2693 = vrot.slane %v2684, %v2692
        %v2696 = vmul.f32 %v2689, %v1224
        %v2697 = vmul.f32 %v2693, %v1225
        %v2698 = vadd.f32 %v2410, %v2696
        %v2699 = vadd.f32 %v2411, %v2697
        %v2700 = vcombine.low %v1305, %v1306
        %v2702 = vsub.f32 %v233, %v2700
        %v2703 = vmul.f32 %v2702, %v2702
        %v2705 = vcombine.high %v2703, %v2703
        %v2707 = vsel %vm239, %v2703, 0.0
        %v2708 = vrot.slane %v2707, 4
        %v2709 = vadd.f32 %v2707, %v2708
        %v2710 = vrot.slane %v2709, 2
        %v2711 = vadd.f32 %v2709, %v2710
        %v2712 = vrot.slane %v2711, 1
        %v2713 = vadd.f32 %v2711, %v2712
        %v2714 = vsel %vm239, %v2705, 0.0
        %v2715 = vrot.slane %v2714, 4
        %v2716 = vadd.f32 %v2714, %v2715
        %v2717 = vrot.slane %v2716, 2
        %v2718 = vadd.f32 %v2716, %v2717
        %v2719 = vrot.slane %v2718, 1
        %v2720 = vadd.f32 %v2718, %v2719
        %v2721 = vmul.f32 %v375, %v380
        %v2722 = vrsqrt.pop %v2713
        %v2723 = vmul.f32 %v2713, %v2722
        %vm2724 = vcmp.eq.f32.partialorder %v2713, inf
        %v2725 = vsel %vm2724, %v2713, %v2723
        %vm2726 = vcmp.eq.f32.partialorder %v2713, 0.0
        %v2727 = vand.u32 %v2713, 2147483648
        %v2728 = vsel %vm2726, %v2727, %v2725
        %v2729 = vrsqrt.pop %v2720
        %v2730 = vmul.f32 %v2720, %v2729
        %vm2731 = vcmp.eq.f32.partialorder %v2720, inf
        %v2732 = vsel %vm2731, %v2720, %v2730
        %vm2733 = vcmp.eq.f32.partialorder %v2720, 0.0
        %v2734 = vand.u32 %v2720, 2147483648
        %v2735 = vsel %vm2733, %v2734, %v2732
        %v2736 = vmul.f32 %v2728, 1.025
        %v2737 = vmul.f32 %v2735, 1.025
        %v2740 = vcombine.low %v2736, %v2737
        %v2742 = vunpack.c.l.s4 1966171168
        %v2743 = vunpack.c.0.s8 %v2742
        %v2744 = vlaneseq
        %v2745 = vshrl.u32 %v2744, 7
        %v2746 = vsub.s32 %v2743, %v2745
        %v2747 = vrot.slane %v2740, %v2746
        %v2749 = vunpack.c.l.s4 1966171168
        %v2750 = vunpack.c.0.s8 %v2749
        %v2751 = vlaneseq
        %v2752 = vshrl.u32 %v2751, 7
        %v2753 = vsub.s32 %v2750, %v2752
        %v2754 = vrot.slane %v2747, %v2753
        %v2756 = vmul.f32 %v2721, %v2754
        %v2758 = vlaneseq
        %v2759 = vshrl.u32 %v2758, 7
        %v2760 = vsub.s32 0, %v2759
        %v2761 = vrot.slane %v2756, %v2760
        %v2762 = vlaneseq
        %v2763 = vshrl.u32 %v2762, 7
        %v2764 = vsub.s32 1, %v2763
        %v2765 = vrot.slane %v2756, %v2764
        %v2768 = vmul.f32 %v2761, %v1311
        %v2769 = vmul.f32 %v2765, %v1312
        %v2770 = vadd.f32 %v2482, %v2768
        %v2771 = vadd.f32 %v2483, %v2769
        %2772 = vrot.lane.b32.xlu0 %v233, 68
        %v2773 = vpop.permute.xlu0 %2772
        %2774 = vrot.lane.b32.xlu0 %v268, 68
        %v2775 = vpop.permute.xlu0 %2774
        %vm2776 = vcmp.lt.s32.totalorder %v430, 68
        %v2777 = vsel %vm2776, %v2773, %v2775
        %v2778 = vsel %vm2776, %v2775, %v2773
        %2779 = vrot.lane.b32.xlu0 %v234, 68
        %v2780 = vpop.permute.xlu0 %2779
        %2781 = vrot.lane.b32.xlu0 %v435, 68
        %v2782 = vpop.permute.xlu0 %2781
        %v2783 = vsel %vm2776, %v2780, %v2782
        %v2784 = vsel %vm2776, %v2782, %v2780
        %v2787 = vcombine.low %v2777, %v2778
        %v2789 = vsub.f32 %v233, %v2787
        %v2790 = vmul.f32 %v2789, %v2789
        %v2792 = vcombine.high %v2790, %v2790
        %v2794 = vsel %vm239, %v2790, 0.0
        %v2795 = vrot.slane %v2794, 4
        %v2796 = vadd.f32 %v2794, %v2795
        %v2797 = vrot.slane %v2796, 2
        %v2798 = vadd.f32 %v2796, %v2797
        %v2799 = vrot.slane %v2798, 1
        %v2800 = vadd.f32 %v2798, %v2799
        %v2801 = vsel %vm239, %v2792, 0.0
        %v2802 = vrot.slane %v2801, 4
        %v2803 = vadd.f32 %v2801, %v2802
        %v2804 = vrot.slane %v2803, 2
        %v2805 = vadd.f32 %v2803, %v2804
        %v2806 = vrot.slane %v2805, 1
        %v2807 = vadd.f32 %v2805, %v2806
        %v2808 = vmul.f32 %v375, %v385
        %v2809 = vrsqrt.pop %v2800
        %v2810 = vmul.f32 %v2800, %v2809
        %vm2811 = vcmp.eq.f32.partialorder %v2800, inf
        %v2812 = vsel %vm2811, %v2800, %v2810
        %vm2813 = vcmp.eq.f32.partialorder %v2800, 0.0
        %v2814 = vand.u32 %v2800, 2147483648
        %v2815 = vsel %vm2813, %v2814, %v2812
        %v2816 = vrsqrt.pop %v2807
        %v2817 = vmul.f32 %v2807, %v2816
        %vm2818 = vcmp.eq.f32.partialorder %v2807, inf
        %v2819 = vsel %vm2818, %v2807, %v2817
        %vm2820 = vcmp.eq.f32.partialorder %v2807, 0.0
        %v2821 = vand.u32 %v2807, 2147483648
        %v2822 = vsel %vm2820, %v2821, %v2819
        %v2823 = vmul.f32 %v2815, 1.6
        %v2824 = vmul.f32 %v2822, 1.6
        %v2827 = vcombine.low %v2823, %v2824
        %v2829 = vunpack.c.l.s4 1966171168
        %v2830 = vunpack.c.0.s8 %v2829
        %v2831 = vlaneseq
        %v2832 = vshrl.u32 %v2831, 7
        %v2833 = vsub.s32 %v2830, %v2832
        %v2834 = vrot.slane %v2827, %v2833
        %v2836 = vunpack.c.l.s4 1966171168
        %v2837 = vunpack.c.0.s8 %v2836
        %v2838 = vlaneseq
        %v2839 = vshrl.u32 %v2838, 7
        %v2840 = vsub.s32 %v2837, %v2839
        %v2841 = vrot.slane %v2834, %v2840
        %v2843 = vmul.f32 %v2808, %v2841
        %v2845 = vlaneseq
        %v2846 = vshrl.u32 %v2845, 7
        %v2847 = vsub.s32 0, %v2846
        %v2848 = vrot.slane %v2843, %v2847
        %v2849 = vlaneseq
        %v2850 = vshrl.u32 %v2849, 7
        %v2851 = vsub.s32 1, %v2850
        %v2852 = vrot.slane %v2843, %v2851
        %v2855 = vmul.f32 %v2848, %v2783
        %v2856 = vmul.f32 %v2852, %v2784
        %v2857 = vadd.f32 %v2554, %v2855
        %v2858 = vadd.f32 %v2555, %v2856
        %2859 = vrot.lane.b32.xlu0 %v233, 67
        %v2860 = vpop.permute.xlu0 %2859
        %2861 = vrot.lane.b32.xlu0 %v268, 67
        %v2862 = vpop.permute.xlu0 %2861
        %vm2863 = vcmp.lt.s32.totalorder %v430, 67
        %v2864 = vsel %vm2863, %v2860, %v2862
        %v2865 = vsel %vm2863, %v2862, %v2860
        %2866 = vrot.lane.b32.xlu0 %v234, 67
        %v2867 = vpop.permute.xlu0 %2866
        %2868 = vrot.lane.b32.xlu0 %v435, 67
        %v2869 = vpop.permute.xlu0 %2868
        %v2870 = vsel %vm2863, %v2867, %v2869
        %v2871 = vsel %vm2863, %v2869, %v2867
        %v2874 = vcombine.low %v2864, %v2865
        %v2876 = vsub.f32 %v233, %v2874
        %v2877 = vmul.f32 %v2876, %v2876
        %v2879 = vcombine.high %v2877, %v2877
        %v2881 = vsel %vm239, %v2877, 0.0
        %v2882 = vrot.slane %v2881, 4
        %v2883 = vadd.f32 %v2881, %v2882
        %v2884 = vrot.slane %v2883, 2
        %v2885 = vadd.f32 %v2883, %v2884
        %v2886 = vrot.slane %v2885, 1
        %v2887 = vadd.f32 %v2885, %v2886
        %v2888 = vsel %vm239, %v2879, 0.0
        %v2889 = vrot.slane %v2888, 4
        %v2890 = vadd.f32 %v2888, %v2889
        %v2891 = vrot.slane %v2890, 2
        %v2892 = vadd.f32 %v2890, %v2891
        %v2893 = vrot.slane %v2892, 1
        %v2894 = vadd.f32 %v2892, %v2893
        %v2895 = vmul.f32 %v375, %v390
        %v2896 = vrsqrt.pop %v2887
        %v2897 = vmul.f32 %v2887, %v2896
        %vm2898 = vcmp.eq.f32.partialorder %v2887, inf
        %v2899 = vsel %vm2898, %v2887, %v2897
        %vm2900 = vcmp.eq.f32.partialorder %v2887, 0.0
        %v2901 = vand.u32 %v2887, 2147483648
        %v2902 = vsel %vm2900, %v2901, %v2899
        %v2903 = vrsqrt.pop %v2894
        %v2904 = vmul.f32 %v2894, %v2903
        %vm2905 = vcmp.eq.f32.partialorder %v2894, inf
        %v2906 = vsel %vm2905, %v2894, %v2904
        %vm2907 = vcmp.eq.f32.partialorder %v2894, 0.0
        %v2908 = vand.u32 %v2894, 2147483648
        %v2909 = vsel %vm2907, %v2908, %v2906
        %v2910 = vmul.f32 %v2902, 1.25
        %v2911 = vmul.f32 %v2909, 1.25
        %v2914 = vcombine.low %v2910, %v2911
        %v2916 = vunpack.c.l.s4 1966171168
        %v2917 = vunpack.c.0.s8 %v2916
        %v2918 = vlaneseq
        %v2919 = vshrl.u32 %v2918, 7
        %v2920 = vsub.s32 %v2917, %v2919
        %v2921 = vrot.slane %v2914, %v2920
        %v2923 = vunpack.c.l.s4 1966171168
        %v2924 = vunpack.c.0.s8 %v2923
        %v2925 = vlaneseq
        %v2926 = vshrl.u32 %v2925, 7
        %v2927 = vsub.s32 %v2924, %v2926
        %v2928 = vrot.slane %v2921, %v2927
        %v2930 = vmul.f32 %v2895, %v2928
        %v2932 = vlaneseq
        %v2933 = vshrl.u32 %v2932, 7
        %v2934 = vsub.s32 0, %v2933
        %v2935 = vrot.slane %v2930, %v2934
        %v2936 = vlaneseq
        %v2937 = vshrl.u32 %v2936, 7
        %v2938 = vsub.s32 1, %v2937
        %v2939 = vrot.slane %v2930, %v2938
        %v2942 = vmul.f32 %v2935, %v2870
        %v2943 = vmul.f32 %v2939, %v2871
        %v2944 = vadd.f32 %v2626, %v2942
        %v2945 = vadd.f32 %v2627, %v2943
        %2946 = vrot.lane.b32.xlu0 %v233, 66
        %v2947 = vpop.permute.xlu0 %2946
        %2948 = vrot.lane.b32.xlu0 %v268, 66
        %v2949 = vpop.permute.xlu0 %2948
        %vm2950 = vcmp.lt.s32.totalorder %v430, 66
        %v2951 = vsel %vm2950, %v2947, %v2949
        %v2952 = vsel %vm2950, %v2949, %v2947
        %2953 = vrot.lane.b32.xlu0 %v234, 66
        %v2954 = vpop.permute.xlu0 %2953
        %2955 = vrot.lane.b32.xlu0 %v435, 66
        %v2956 = vpop.permute.xlu0 %2955
        %v2957 = vsel %vm2950, %v2954, %v2956
        %v2958 = vsel %vm2950, %v2956, %v2954
        %v2961 = vcombine.low %v2951, %v2952
        %v2963 = vsub.f32 %v233, %v2961
        %v2964 = vmul.f32 %v2963, %v2963
        %v2966 = vcombine.high %v2964, %v2964
        %v2968 = vsel %vm239, %v2964, 0.0
        %v2969 = vrot.slane %v2968, 4
        %v2970 = vadd.f32 %v2968, %v2969
        %v2971 = vrot.slane %v2970, 2
        %v2972 = vadd.f32 %v2970, %v2971
        %v2973 = vrot.slane %v2972, 1
        %v2974 = vadd.f32 %v2972, %v2973
        %v2975 = vsel %vm239, %v2966, 0.0
        %v2976 = vrot.slane %v2975, 4
        %v2977 = vadd.f32 %v2975, %v2976
        %v2978 = vrot.slane %v2977, 2
        %v2979 = vadd.f32 %v2977, %v2978
        %v2980 = vrot.slane %v2979, 1
        %v2981 = vadd.f32 %v2979, %v2980
        %v2982 = vmul.f32 %v375, %v395
        %v2983 = vrsqrt.pop %v2974
        %v2984 = vmul.f32 %v2974, %v2983
        %vm2985 = vcmp.eq.f32.partialorder %v2974, inf
        %v2986 = vsel %vm2985, %v2974, %v2984
        %vm2987 = vcmp.eq.f32.partialorder %v2974, 0.0
        %v2988 = vand.u32 %v2974, 2147483648
        %v2989 = vsel %vm2987, %v2988, %v2986
        %v2990 = vrsqrt.pop %v2981
        %v2991 = vmul.f32 %v2981, %v2990
        %vm2992 = vcmp.eq.f32.partialorder %v2981, inf
        %v2993 = vsel %vm2992, %v2981, %v2991
        %vm2994 = vcmp.eq.f32.partialorder %v2981, 0.0
        %v2995 = vand.u32 %v2981, 2147483648
        %v2996 = vsel %vm2994, %v2995, %v2993
        %v2999 = vcombine.low %v2989, %v2996
        %v3001 = vunpack.c.l.s4 1966171168
        %v3002 = vunpack.c.0.s8 %v3001
        %v3003 = vlaneseq
        %v3004 = vshrl.u32 %v3003, 7
        %v3005 = vsub.s32 %v3002, %v3004
        %v3006 = vrot.slane %v2999, %v3005
        %v3008 = vunpack.c.l.s4 1966171168
        %v3009 = vunpack.c.0.s8 %v3008
        %v3010 = vlaneseq
        %v3011 = vshrl.u32 %v3010, 7
        %v3012 = vsub.s32 %v3009, %v3011
        %v3013 = vrot.slane %v3006, %v3012
        %v3015 = vmul.f32 %v2982, %v3013
        %v3017 = vlaneseq
        %v3018 = vshrl.u32 %v3017, 7
        %v3019 = vsub.s32 0, %v3018
        %v3020 = vrot.slane %v3015, %v3019
        %v3021 = vlaneseq
        %v3022 = vshrl.u32 %v3021, 7
        %v3023 = vsub.s32 1, %v3022
        %v3024 = vrot.slane %v3015, %v3023
        %v3027 = vmul.f32 %v3020, %v2957
        %v3028 = vmul.f32 %v3024, %v2958
        %v3029 = vadd.f32 %v2698, %v3027
        %v3030 = vadd.f32 %v2699, %v3028
        %3031 = vrot.lane.b32.xlu0 %v233, 65
        %v3032 = vpop.permute.xlu0 %3031
        %3033 = vrot.lane.b32.xlu0 %v268, 65
        %v3034 = vpop.permute.xlu0 %3033
        %vm3035 = vcmp.lt.s32.totalorder %v430, 65
        %v3036 = vsel %vm3035, %v3032, %v3034
        %v3037 = vsel %vm3035, %v3034, %v3032
        %3038 = vrot.lane.b32.xlu0 %v234, 65
        %v3039 = vpop.permute.xlu0 %3038
        %3040 = vrot.lane.b32.xlu0 %v435, 65
        %v3041 = vpop.permute.xlu0 %3040
        %v3042 = vsel %vm3035, %v3039, %v3041
        %v3043 = vsel %vm3035, %v3041, %v3039
        %v3046 = vcombine.low %v3036, %v3037
        %v3048 = vsub.f32 %v233, %v3046
        %v3049 = vmul.f32 %v3048, %v3048
        %v3051 = vcombine.high %v3049, %v3049
        %v3053 = vsel %vm239, %v3049, 0.0
        %v3054 = vrot.slane %v3053, 4
        %v3055 = vadd.f32 %v3053, %v3054
        %v3056 = vrot.slane %v3055, 2
        %v3057 = vadd.f32 %v3055, %v3056
        %v3058 = vrot.slane %v3057, 1
        %v3059 = vadd.f32 %v3057, %v3058
        %v3060 = vsel %vm239, %v3051, 0.0
        %v3061 = vrot.slane %v3060, 4
        %v3062 = vadd.f32 %v3060, %v3061
        %v3063 = vrot.slane %v3062, 2
        %v3064 = vadd.f32 %v3062, %v3063
        %v3065 = vrot.slane %v3064, 1
        %v3066 = vadd.f32 %v3064, %v3065
        %v3067 = vmul.f32 %v375, %v400
        %v3068 = vrsqrt.pop %v3059
        %v3069 = vmul.f32 %v3059, %v3068
        %vm3070 = vcmp.eq.f32.partialorder %v3059, inf
        %v3071 = vsel %vm3070, %v3059, %v3069
        %vm3072 = vcmp.eq.f32.partialorder %v3059, 0.0
        %v3073 = vand.u32 %v3059, 2147483648
        %v3074 = vsel %vm3072, %v3073, %v3071
        %v3075 = vrsqrt.pop %v3066
        %v3076 = vmul.f32 %v3066, %v3075
        %vm3077 = vcmp.eq.f32.partialorder %v3066, inf
        %v3078 = vsel %vm3077, %v3066, %v3076
        %vm3079 = vcmp.eq.f32.partialorder %v3066, 0.0
        %v3080 = vand.u32 %v3066, 2147483648
        %v3081 = vsel %vm3079, %v3080, %v3078
        %v3082 = vmul.f32 %v3074, 0.85
        %v3083 = vmul.f32 %v3081, 0.85
        %v3086 = vcombine.low %v3082, %v3083
        %v3088 = vunpack.c.l.s4 1966171168
        %v3089 = vunpack.c.0.s8 %v3088
        %v3090 = vlaneseq
        %v3091 = vshrl.u32 %v3090, 7
        %v3092 = vsub.s32 %v3089, %v3091
        %v3093 = vrot.slane %v3086, %v3092
        %v3095 = vunpack.c.l.s4 1966171168
        %v3096 = vunpack.c.0.s8 %v3095
        %v3097 = vlaneseq
        %v3098 = vshrl.u32 %v3097, 7
        %v3099 = vsub.s32 %v3096, %v3098
        %v3100 = vrot.slane %v3093, %v3099
        %v3102 = vmul.f32 %v3067, %v3100
        %v3104 = vlaneseq
        %v3105 = vshrl.u32 %v3104, 7
        %v3106 = vsub.s32 0, %v3105
        %v3107 = vrot.slane %v3102, %v3106
        %v3108 = vlaneseq
        %v3109 = vshrl.u32 %v3108, 7
        %v3110 = vsub.s32 1, %v3109
        %v3111 = vrot.slane %v3102, %v3110
        %v3114 = vmul.f32 %v3107, %v3042
        %v3115 = vmul.f32 %v3111, %v3043
        %v3116 = vadd.f32 %v2770, %v3114
        %v3117 = vadd.f32 %v2771, %v3115
        %3118 = vrot.lane.b32.xlu0 %v233, 64
        %v3119 = vpop.permute.xlu0 %3118
        %3120 = vrot.lane.b32.xlu0 %v268, 64
        %v3121 = vpop.permute.xlu0 %3120
        %vm3122 = vcmp.lt.s32.totalorder %v430, 64
        %v3123 = vsel %vm3122, %v3119, %v3121
        %v3124 = vsel %vm3122, %v3121, %v3119
        %3125 = vrot.lane.b32.xlu0 %v234, 64
        %v3126 = vpop.permute.xlu0 %3125
        %3127 = vrot.lane.b32.xlu0 %v435, 64
        %v3128 = vpop.permute.xlu0 %3127
        %v3129 = vsel %vm3122, %v3126, %v3128
        %v3130 = vsel %vm3122, %v3128, %v3126
        %v3133 = vcombine.low %v3123, %v3124
        %v3135 = vsub.f32 %v233, %v3133
        %v3136 = vmul.f32 %v3135, %v3135
        %v3138 = vcombine.high %v3136, %v3136
        %v3140 = vsel %vm239, %v3136, 0.0
        %v3141 = vrot.slane %v3140, 4
        %v3142 = vadd.f32 %v3140, %v3141
        %v3143 = vrot.slane %v3142, 2
        %v3144 = vadd.f32 %v3142, %v3143
        %v3145 = vrot.slane %v3144, 1
        %v3146 = vadd.f32 %v3144, %v3145
        %v3147 = vsel %vm239, %v3138, 0.0
        %v3148 = vrot.slane %v3147, 4
        %v3149 = vadd.f32 %v3147, %v3148
        %v3150 = vrot.slane %v3149, 2
        %v3151 = vadd.f32 %v3149, %v3150
        %v3152 = vrot.slane %v3151, 1
        %v3153 = vadd.f32 %v3151, %v3152
        %v3154 = vmul.f32 %v375, %v404
        %v3155 = vrsqrt.pop %v3146
        %v3156 = vmul.f32 %v3146, %v3155
        %vm3157 = vcmp.eq.f32.partialorder %v3146, inf
        %v3158 = vsel %vm3157, %v3146, %v3156
        %vm3159 = vcmp.eq.f32.partialorder %v3146, 0.0
        %v3160 = vand.u32 %v3146, 2147483648
        %v3161 = vsel %vm3159, %v3160, %v3158
        %v3162 = vrsqrt.pop %v3153
        %v3163 = vmul.f32 %v3153, %v3162
        %vm3164 = vcmp.eq.f32.partialorder %v3153, inf
        %v3165 = vsel %vm3164, %v3153, %v3163
        %vm3166 = vcmp.eq.f32.partialorder %v3153, 0.0
        %v3167 = vand.u32 %v3153, 2147483648
        %v3168 = vsel %vm3166, %v3167, %v3165
        %v3169 = vmul.f32 %v3161, 0.8
        %v3170 = vmul.f32 %v3168, 0.8
        %v3173 = vcombine.low %v3169, %v3170
        %v3175 = vunpack.c.l.s4 1966171168
        %v3176 = vunpack.c.0.s8 %v3175
        %v3177 = vlaneseq
        %v3178 = vshrl.u32 %v3177, 7
        %v3179 = vsub.s32 %v3176, %v3178
        %v3180 = vrot.slane %v3173, %v3179
        %v3182 = vunpack.c.l.s4 1966171168
        %v3183 = vunpack.c.0.s8 %v3182
        %v3184 = vlaneseq
        %v3185 = vshrl.u32 %v3184, 7
        %v3186 = vsub.s32 %v3183, %v3185
        %v3187 = vrot.slane %v3180, %v3186
        %v3189 = vmul.f32 %v3154, %v3187
        %v3191 = vlaneseq
        %v3192 = vshrl.u32 %v3191, 7
        %v3193 = vsub.s32 0, %v3192
        %v3194 = vrot.slane %v3189, %v3193
        %v3195 = vlaneseq
        %v3196 = vshrl.u32 %v3195, 7
        %v3197 = vsub.s32 1, %v3196
        %v3198 = vrot.slane %v3189, %v3197
        %v3201 = vmul.f32 %v3194, %v3129
        %v3202 = vmul.f32 %v3198, %v3130
        %v3203 = vadd.f32 %v2857, %v3201
        %v3204 = vadd.f32 %v2858, %v3202
        %3205 = vrot.lane.b32.xlu0 %v233, 63
        %v3206 = vpop.permute.xlu0 %3205
        %3207 = vrot.lane.b32.xlu0 %v268, 63
        %v3208 = vpop.permute.xlu0 %3207
        %vm3209 = vcmp.lt.s32.totalorder %v430, 63
        %v3210 = vsel %vm3209, %v3206, %v3208
        %v3211 = vsel %vm3209, %v3208, %v3206
        %3212 = vrot.lane.b32.xlu0 %v234, 63
        %v3213 = vpop.permute.xlu0 %3212
        %3214 = vrot.lane.b32.xlu0 %v435, 63
        %v3215 = vpop.permute.xlu0 %3214
        %v3216 = vsel %vm3209, %v3213, %v3215
        %v3217 = vsel %vm3209, %v3215, %v3213
        %v3220 = vcombine.low %v3210, %v3211
        %v3222 = vsub.f32 %v233, %v3220
        %v3223 = vmul.f32 %v3222, %v3222
        %v3225 = vcombine.high %v3223, %v3223
        %v3227 = vsel %vm239, %v3223, 0.0
        %v3228 = vrot.slane %v3227, 4
        %v3229 = vadd.f32 %v3227, %v3228
        %v3230 = vrot.slane %v3229, 2
        %v3231 = vadd.f32 %v3229, %v3230
        %v3232 = vrot.slane %v3231, 1
        %v3233 = vadd.f32 %v3231, %v3232
        %v3234 = vsel %vm239, %v3225, 0.0
        %v3235 = vrot.slane %v3234, 4
        %v3236 = vadd.f32 %v3234, %v3235
        %v3237 = vrot.slane %v3236, 2
        %v3238 = vadd.f32 %v3236, %v3237
        %v3239 = vrot.slane %v3238, 1
        %v3240 = vadd.f32 %v3238, %v3239
        %v3241 = vmul.f32 %v375, %v409
        %v3242 = vrsqrt.pop %v3233
        %v3243 = vmul.f32 %v3233, %v3242
        %vm3244 = vcmp.eq.f32.partialorder %v3233, inf
        %v3245 = vsel %vm3244, %v3233, %v3243
        %vm3246 = vcmp.eq.f32.partialorder %v3233, 0.0
        %v3247 = vand.u32 %v3233, 2147483648
        %v3248 = vsel %vm3246, %v3247, %v3245
        %v3249 = vrsqrt.pop %v3240
        %v3250 = vmul.f32 %v3240, %v3249
        %vm3251 = vcmp.eq.f32.partialorder %v3240, inf
        %v3252 = vsel %vm3251, %v3240, %v3250
        %vm3253 = vcmp.eq.f32.partialorder %v3240, 0.0
        %v3254 = vand.u32 %v3240, 2147483648
        %v3255 = vsel %vm3253, %v3254, %v3252
        %v3256 = vmul.f32 %v3248, 0.85
        %v3257 = vmul.f32 %v3255, 0.85
        %v3260 = vcombine.low %v3256, %v3257
        %v3262 = vunpack.c.l.s4 1966171168
        %v3263 = vunpack.c.0.s8 %v3262
        %v3264 = vlaneseq
        %v3265 = vshrl.u32 %v3264, 7
        %v3266 = vsub.s32 %v3263, %v3265
        %v3267 = vrot.slane %v3260, %v3266
        %v3269 = vunpack.c.l.s4 1966171168
        %v3270 = vunpack.c.0.s8 %v3269
        %v3271 = vlaneseq
        %v3272 = vshrl.u32 %v3271, 7
        %v3273 = vsub.s32 %v3270, %v3272
        %v3274 = vrot.slane %v3267, %v3273
        %v3276 = vmul.f32 %v3241, %v3274
        %v3278 = vlaneseq
        %v3279 = vshrl.u32 %v3278, 7
        %v3280 = vsub.s32 0, %v3279
        %v3281 = vrot.slane %v3276, %v3280
        %v3282 = vlaneseq
        %v3283 = vshrl.u32 %v3282, 7
        %v3284 = vsub.s32 1, %v3283
        %v3285 = vrot.slane %v3276, %v3284
        %v3288 = vmul.f32 %v3281, %v3216
        %v3289 = vmul.f32 %v3285, %v3217
        %v3290 = vadd.f32 %v2944, %v3288
        %v3291 = vadd.f32 %v2945, %v3289
        %3292 = vrot.lane.b32.xlu0 %v233, 62
        %v3293 = vpop.permute.xlu0 %3292
        %3294 = vrot.lane.b32.xlu0 %v268, 62
        %v3295 = vpop.permute.xlu0 %3294
        %vm3296 = vcmp.lt.s32.totalorder %v430, 62
        %v3297 = vsel %vm3296, %v3293, %v3295
        %v3298 = vsel %vm3296, %v3295, %v3293
        %3299 = vrot.lane.b32.xlu0 %v234, 62
        %v3300 = vpop.permute.xlu0 %3299
        %3301 = vrot.lane.b32.xlu0 %v435, 62
        %v3302 = vpop.permute.xlu0 %3301
        %v3303 = vsel %vm3296, %v3300, %v3302
        %v3304 = vsel %vm3296, %v3302, %v3300
        %v3307 = vcombine.low %v3297, %v3298
        %v3309 = vsub.f32 %v233, %v3307
        %v3310 = vmul.f32 %v3309, %v3309
        %v3312 = vcombine.high %v3310, %v3310
        %v3314 = vsel %vm239, %v3310, 0.0
        %v3315 = vrot.slane %v3314, 4
        %v3316 = vadd.f32 %v3314, %v3315
        %v3317 = vrot.slane %v3316, 2
        %v3318 = vadd.f32 %v3316, %v3317
        %v3319 = vrot.slane %v3318, 1
        %v3320 = vadd.f32 %v3318, %v3319
        %v3321 = vsel %vm239, %v3312, 0.0
        %v3322 = vrot.slane %v3321, 4
        %v3323 = vadd.f32 %v3321, %v3322
        %v3324 = vrot.slane %v3323, 2
        %v3325 = vadd.f32 %v3323, %v3324
        %v3326 = vrot.slane %v3325, 1
        %v3327 = vadd.f32 %v3325, %v3326
        %v3328 = vmul.f32 %v375, %v414
        %v3329 = vrsqrt.pop %v3320
        %v3330 = vmul.f32 %v3320, %v3329
        %vm3331 = vcmp.eq.f32.partialorder %v3320, inf
        %v3332 = vsel %vm3331, %v3320, %v3330
        %vm3333 = vcmp.eq.f32.partialorder %v3320, 0.0
        %v3334 = vand.u32 %v3320, 2147483648
        %v3335 = vsel %vm3333, %v3334, %v3332
        %v3336 = vrsqrt.pop %v3327
        %v3337 = vmul.f32 %v3327, %v3336
        %vm3338 = vcmp.eq.f32.partialorder %v3327, inf
        %v3339 = vsel %vm3338, %v3327, %v3337
        %vm3340 = vcmp.eq.f32.partialorder %v3327, 0.0
        %v3341 = vand.u32 %v3327, 2147483648
        %v3342 = vsel %vm3340, %v3341, %v3339
        %v3345 = vcombine.low %v3335, %v3342
        %v3347 = vunpack.c.l.s4 1966171168
        %v3348 = vunpack.c.0.s8 %v3347
        %v3349 = vlaneseq
        %v3350 = vshrl.u32 %v3349, 7
        %v3351 = vsub.s32 %v3348, %v3350
        %v3352 = vrot.slane %v3345, %v3351
        %v3354 = vunpack.c.l.s4 1966171168
        %v3355 = vunpack.c.0.s8 %v3354
        %v3356 = vlaneseq
        %v3357 = vshrl.u32 %v3356, 7
        %v3358 = vsub.s32 %v3355, %v3357
        %v3359 = vrot.slane %v3352, %v3358
        %v3361 = vmul.f32 %v3328, %v3359
        %v3363 = vlaneseq
        %v3364 = vshrl.u32 %v3363, 7
        %v3365 = vsub.s32 0, %v3364
        %v3366 = vrot.slane %v3361, %v3365
        %v3367 = vlaneseq
        %v3368 = vshrl.u32 %v3367, 7
        %v3369 = vsub.s32 1, %v3368
        %v3370 = vrot.slane %v3361, %v3369
        %v3373 = vmul.f32 %v3366, %v3303
        %v3374 = vmul.f32 %v3370, %v3304
        %v3375 = vadd.f32 %v3029, %v3373
        %v3376 = vadd.f32 %v3030, %v3374
        %3377 = vrot.lane.b32.xlu0 %v233, 61
        %v3378 = vpop.permute.xlu0 %3377
        %3379 = vrot.lane.b32.xlu0 %v268, 61
        %v3380 = vpop.permute.xlu0 %3379
        %vm3381 = vcmp.lt.s32.totalorder %v430, 61
        %v3382 = vsel %vm3381, %v3378, %v3380
        %v3383 = vsel %vm3381, %v3380, %v3378
        %3384 = vrot.lane.b32.xlu0 %v234, 61
        %v3385 = vpop.permute.xlu0 %3384
        %3386 = vrot.lane.b32.xlu0 %v435, 61
        %v3387 = vpop.permute.xlu0 %3386
        %v3388 = vsel %vm3381, %v3385, %v3387
        %v3389 = vsel %vm3381, %v3387, %v3385
        %v3392 = vcombine.low %v3382, %v3383
        %v3394 = vsub.f32 %v233, %v3392
        %v3395 = vmul.f32 %v3394, %v3394
        %v3397 = vcombine.high %v3395, %v3395
        %v3399 = vsel %vm239, %v3395, 0.0
        %v3400 = vrot.slane %v3399, 4
        %v3401 = vadd.f32 %v3399, %v3400
        %v3402 = vrot.slane %v3401, 2
        %v3403 = vadd.f32 %v3401, %v3402
        %v3404 = vrot.slane %v3403, 1
        %v3405 = vadd.f32 %v3403, %v3404
        %v3406 = vsel %vm239, %v3397, 0.0
        %v3407 = vrot.slane %v3406, 4
        %v3408 = vadd.f32 %v3406, %v3407
        %v3409 = vrot.slane %v3408, 2
        %v3410 = vadd.f32 %v3408, %v3409
        %v3411 = vrot.slane %v3410, 1
        %v3412 = vadd.f32 %v3410, %v3411
        %v3413 = vmul.f32 %v375, %v419
        %v3414 = vrsqrt.pop %v3405
        %v3415 = vmul.f32 %v3405, %v3414
        %vm3416 = vcmp.eq.f32.partialorder %v3405, inf
        %v3417 = vsel %vm3416, %v3405, %v3415
        %vm3418 = vcmp.eq.f32.partialorder %v3405, 0.0
        %v3419 = vand.u32 %v3405, 2147483648
        %v3420 = vsel %vm3418, %v3419, %v3417
        %v3421 = vrsqrt.pop %v3412
        %v3422 = vmul.f32 %v3412, %v3421
        %vm3423 = vcmp.eq.f32.partialorder %v3412, inf
        %v3424 = vsel %vm3423, %v3412, %v3422
        %vm3425 = vcmp.eq.f32.partialorder %v3412, 0.0
        %v3426 = vand.u32 %v3412, 2147483648
        %v3427 = vsel %vm3425, %v3426, %v3424
        %v3428 = vmul.f32 %v3420, 1.25
        %v3429 = vmul.f32 %v3427, 1.25
        %v3432 = vcombine.low %v3428, %v3429
        %v3434 = vunpack.c.l.s4 1966171168
        %v3435 = vunpack.c.0.s8 %v3434
        %v3436 = vlaneseq
        %v3437 = vshrl.u32 %v3436, 7
        %v3438 = vsub.s32 %v3435, %v3437
        %v3439 = vrot.slane %v3432, %v3438
        %v3441 = vunpack.c.l.s4 1966171168
        %v3442 = vunpack.c.0.s8 %v3441
        %v3443 = vlaneseq
        %v3444 = vshrl.u32 %v3443, 7
        %v3445 = vsub.s32 %v3442, %v3444
        %v3446 = vrot.slane %v3439, %v3445
        %v3448 = vmul.f32 %v3413, %v3446
        %v3450 = vlaneseq
        %v3451 = vshrl.u32 %v3450, 7
        %v3452 = vsub.s32 0, %v3451
        %v3453 = vrot.slane %v3448, %v3452
        %v3454 = vlaneseq
        %v3455 = vshrl.u32 %v3454, 7
        %v3456 = vsub.s32 1, %v3455
        %v3457 = vrot.slane %v3448, %v3456
        %v3460 = vmul.f32 %v3453, %v3388
        %v3461 = vmul.f32 %v3457, %v3389
        %v3462 = vadd.f32 %v3116, %v3460
        %v3463 = vadd.f32 %v3117, %v3461
        %3464 = vrot.lane.b32.xlu0 %v233, 60
        %v3465 = vpop.permute.xlu0 %3464
        %3466 = vrot.lane.b32.xlu0 %v268, 60
        %v3467 = vpop.permute.xlu0 %3466
        %vm3468 = vcmp.lt.s32.totalorder %v430, 60
        %v3469 = vsel %vm3468, %v3465, %v3467
        %v3470 = vsel %vm3468, %v3467, %v3465
        %3471 = vrot.lane.b32.xlu0 %v234, 60
        %v3472 = vpop.permute.xlu0 %3471
        %3473 = vrot.lane.b32.xlu0 %v435, 60
        %v3474 = vpop.permute.xlu0 %3473
        %v3475 = vsel %vm3468, %v3472, %v3474
        %v3476 = vsel %vm3468, %v3474, %v3472
        %v3479 = vcombine.low %v3469, %v3470
        %v3481 = vsub.f32 %v233, %v3479
        %v3482 = vmul.f32 %v3481, %v3481
        %v3484 = vcombine.high %v3482, %v3482
        %v3486 = vsel %vm239, %v3482, 0.0
        %v3487 = vrot.slane %v3486, 4
        %v3488 = vadd.f32 %v3486, %v3487
        %v3489 = vrot.slane %v3488, 2
        %v3490 = vadd.f32 %v3488, %v3489
        %v3491 = vrot.slane %v3490, 1
        %v3492 = vadd.f32 %v3490, %v3491
        %v3493 = vsel %vm239, %v3484, 0.0
        %v3494 = vrot.slane %v3493, 4
        %v3495 = vadd.f32 %v3493, %v3494
        %v3496 = vrot.slane %v3495, 2
        %v3497 = vadd.f32 %v3495, %v3496
        %v3498 = vrot.slane %v3497, 1
        %v3499 = vadd.f32 %v3497, %v3498
        %v3500 = vmul.f32 %v375, %v424
        %v3501 = vrsqrt.pop %v3492
        %v3502 = vmul.f32 %v3492, %v3501
        %vm3503 = vcmp.eq.f32.partialorder %v3492, inf
        %v3504 = vsel %vm3503, %v3492, %v3502
        %vm3505 = vcmp.eq.f32.partialorder %v3492, 0.0
        %v3506 = vand.u32 %v3492, 2147483648
        %v3507 = vsel %vm3505, %v3506, %v3504
        %v3508 = vrsqrt.pop %v3499
        %v3509 = vmul.f32 %v3499, %v3508
        %vm3510 = vcmp.eq.f32.partialorder %v3499, inf
        %v3511 = vsel %vm3510, %v3499, %v3509
        %vm3512 = vcmp.eq.f32.partialorder %v3499, 0.0
        %v3513 = vand.u32 %v3499, 2147483648
        %v3514 = vsel %vm3512, %v3513, %v3511
        %v3515 = vmul.f32 %v3507, 1.6
        %v3516 = vmul.f32 %v3514, 1.6
        %v3519 = vcombine.low %v3515, %v3516
        %v3521 = vunpack.c.l.s4 1966171168
        %v3522 = vunpack.c.0.s8 %v3521
        %v3523 = vlaneseq
        %v3524 = vshrl.u32 %v3523, 7
        %v3525 = vsub.s32 %v3522, %v3524
        %v3526 = vrot.slane %v3519, %v3525
        %v3528 = vunpack.c.l.s4 1966171168
        %v3529 = vunpack.c.0.s8 %v3528
        %v3530 = vlaneseq
        %v3531 = vshrl.u32 %v3530, 7
        %v3532 = vsub.s32 %v3529, %v3531
        %v3533 = vrot.slane %v3526, %v3532
        %v3535 = vmul.f32 %v3500, %v3533
        %v3537 = vlaneseq
        %v3538 = vshrl.u32 %v3537, 7
        %v3539 = vsub.s32 0, %v3538
        %v3540 = vrot.slane %v3535, %v3539
        %v3541 = vlaneseq
        %v3542 = vshrl.u32 %v3541, 7
        %v3543 = vsub.s32 1, %v3542
        %v3544 = vrot.slane %v3535, %v3543
        %v3547 = vmul.f32 %v3540, %v3475
        %v3548 = vmul.f32 %v3544, %v3476
        %v3549 = vadd.f32 %v3203, %v3547
        %v3550 = vadd.f32 %v3204, %v3548
        %v3551 = vadd.f32 %v3549, %v3290
        %v3552 = vadd.f32 %v3550, %v3291
        %v3553 = vadd.f32 %v3551, %v3375
        %v3554 = vadd.f32 %v3552, %v3376
        %v3555 = vadd.f32 %v3553, %v3462
        %v3556 = vadd.f32 %v3554, %v3463
        %v3559 = vcombine.low %v3555, %v3556
        %v3561 = vmul.f32 %v234, %v3559
        %v3563 = vcombine.high %v3561, %v3561
        %v3565 = vsel %vm239, %v3561, 0.0
        %v3566 = vsel %vm239, %v3563, 0.0
        %v3567 = vadd.f32 %v3565, %v3566
        %3568 = vadd.xlane.f32.xlu0 %v3567
        %v3569 = vpop.xlane.xlu0 %3568
        %v3570 = vrcp.pop %v323
        %v3571 = vmul.f32 %v3569, %v3570
        %vm3572 = vcmask 3072
        %v3573 = vsel %vm3572, %v3571, 0.0
        %3574 = vadd.xlane.f32.xlu0 %v3573
        %v3575 = vpop.xlane.xlu0 %3574
        %v3576 = vrot.slane %v3575, 4
        %v3577 = vadd.f32 %v3575, %v3576
        %v3578 = vrot.slane %v3577, 2
        %v3579 = vadd.f32 %v3577, %v3578
        %v3580 = vrot.slane %v3579, 1
        %v3581 = vadd.f32 %v3579, %v3580
        %s3582 = vtos %v3581
        %s3583 = ssub.f32 4.0, %s3582
        %v3584 = vstv %s3583
        %vm3585 = vcmask 0
        %3586 = vst.msk [vmem:[%s232] sm:$0x1] %vm3585, %v3584
        %p3587 = scmp.lt.s32.totalorder %s18, 1
        %s3588 = scalar_select %p3587, %s18, 1
        %s3589 = scalar_lea.vmem %s3, %s3588
        // Predicated region
        $region45: #{tpu_custom_call.1} parent=31 // pred_check
          %p3590 = pneg %p109
        $region46: #{tpu_custom_call.1} parent=31 // pred_check_branch
          %3592 = sbr.rel (%p3590) target = $region48
        $region47: #{tpu_custom_call.1} parent=31 // pred_region
          _
        $region48: #{tpu_custom_call.1} parent=31 // pred_fallthru
          _
      $region32: #{tpu_custom_call.1} parent=5 // pred_fallthru
        _
      %p3593 = scmp.le.s32.totalorder 2, %s13
      // Predicated region
      $region49: #{tpu_custom_call.1} parent=5 // pred_check
        %p3594 = pneg %p3593
      $region50: #{tpu_custom_call.1} parent=5 // pred_check_branch
        %3596 = sbr.rel (%p3594) target = $region52
      $region51: #{tpu_custom_call.1} parent=5 // pred_region
        %s3597 = ssub.s32 %s13, 2
        // Predicated region
        $region53: #{tpu_custom_call.1} parent=51 // pred_check
          %p3598 = pneg %p115
        $region54: #{tpu_custom_call.1} parent=51 // pred_check_branch
          %3600 = sbr.rel (%p3598) target = $region56
        $region55: #{tpu_custom_call.1} parent=51 // pred_region
          %p3601 = scmp.lt.s32.totalorder %s19, 1
          %s3602 = scalar_select %p3601, %s19, 1
          %s3603 = scalar_lea.vmem %s3, %s3602
        $region56: #{tpu_custom_call.1} parent=51 // pred_fallthru
          _
      $region52: #{tpu_custom_call.1} parent=5 // pred_fallthru
        _
    $region6: #{tpu_custom_call.1} parent=1 // loop_footer
      %s17 = sadd.s32 1, %s13
    $region7: #{tpu_custom_call.1} parent=1 // loop_footer_branch
      %12 = sbr.rel target = $region3
    $region8: #{tpu_custom_call.1} parent=1 // loop_exit
      _
    %3604 = vsyncpa [#allocation3], 1
    %s3605 = scalar_lea.sflag [#allocation3], 1
    %3606 = vsyncpa %s3605, 1
    %3607 = vsyncpa [#allocation5], 1
    %s3608 = scalar_lea.sflag [#allocation5], 1
    %3609 = vsyncpa %s3608, 1

</llo_original>
